<compile_context>
chip_gen: v6e
topology: v6e:2x2x1
jax: 0.10.0
libtpu: 0.0.40
codegen_flags: <defaults>
</compile_context>

<pallas_src>
import math
import jax
import jax.numpy as jnp
from jax.experimental import pallas as pl
from jax.experimental.pallas import tpu as pltpu

# ----------------------------- configuration (small, consistent with the module) ------
B = 2                 # batch
C1 = 8                # input channels
C2 = 16               # output channels
C3 = 16               # hidden channels of cv1 (chunked into two halves of CHID)
C4 = 8                # branch channels
H = W = 16            # spatial size
HW = H * W            # 256 -> lane axis
CHID = C3 // 2        # 8
CQ = C4 // 2          # 4  (hidden channels inside RepCSP)
CIN_MAX = C4          # widest 3x3-conv input (8)
PADL = 128            # lane border of shift scratch (>= W+1); 128 keeps store aligned
SHIFT_W = PADL + HW + PADL   # 512
SLAB_K = 128          # param-slab width (max weight K is 72, +1 bias column)
BN_EPS = 1e-3


# ------------------------------------------- static layout of the packed param slab ---
def _build_layout():
    layout = {}
    off = 0

    def add(name, cout, k):
        nonlocal off
        layout[name] = (off, cout, k)
        off += ((cout + 7) // 8) * 8          # keep every block 8-sublane aligned

    add('cv1', C3, C1)
    add('cv4', C2, C3 + 2 * C4)
    for pfx, cin in (('b2_', CHID), ('b3_', C4)):
        add(pfx + 'r_cv1', CQ, cin)           # RepCSP.cv1 (1x1)
        add(pfx + 'r_cv2', CQ, cin)           # RepCSP.cv2 (1x1)
        add(pfx + 'rep3', CQ, 9 * CQ)         # RepConv 3x3 (1x1 branch folded in)
        add(pfx + 'bcv2', CQ, 9 * CQ)         # Bottleneck.cv2 (3x3)
        add(pfx + 'r_cv3', C4, 2 * CQ)        # RepCSP.cv3 (1x1 on cat[m, b])
        add(pfx + 'post', C4, 9 * C4)         # trailing Conv(c4, c4, 3, 1)
    return layout, off


LAYOUT, SLAB_ROWS = _build_layout()           # 128 rows -> slab is [128, 128] f32


# ----------------------------------------------------------------------- fused kernel -
def elan_kernel(x_ref, slab_ref, out_ref, shift_ref, col_ref):
    # Zero only the borders of the shift scratch (aligned vreg-column stores); the
    # interior lanes [PADL, PADL+HW) of rows [0:cin] are always rewritten before read.
    shift_ref[:, 0:PADL] = jnp.zeros((CIN_MAX, PADL), jnp.float32)
    shift_ref[:, PADL + HW:SHIFT_W] = jnp.zeros((CIN_MAX, PADL), jnp.float32)

    # lane -> x coordinate; masks for the horizontal taps (vertical handled by borders)
    xcoord = jax.lax.broadcasted_iota(jnp.int32, (1, HW), 1) % W
    ok_left = xcoord >= 1                      # tap rx = -1 valid iff output x >= 1
    ok_right = xcoord < (W - 1)                # tap rx = +1 valid iff output x <= W-2

    def getp(name):
        off, cout, k = LAYOUT[name]
        wt = slab_ref[off:off + cout, 0:k]     # [cout, k]  (already transposed)
        b = slab_ref[off:off + cout, k:k + 1]  # [cout, 1]  broadcasts over lanes
        return wt, b

    def silu(v):
        return v * (1.0 / (1.0 + jnp.exp(-v)))

    def stack_dot(pieces, name):
        # Stack pieces along the sublane (K) axis in col_ref, then ONE MXU matmul.
        wt, b = getp(name)
        off = 0
        for p in pieces:
            r = p.shape[0]
            col_ref[off:off + r, :] = p
            off += r
        return jnp.dot(wt, col_ref[0:off, :], preferred_element_type=jnp.float32) + b

    def conv1x1(x, name):
        wt, b = getp(name)
        return jnp.dot(wt, x, preferred_element_type=jnp.float32) + b

    def conv3x3(x, cin, name):
        # 3x3 "same" conv as a single im2col matmul (stride 1, pad 1).
        shift_ref[0:cin, PADL:PADL + HW] = x   # aligned store of the image rows
        taps = []
        for t in range(9):
            ry, rx = t // 3 - 1, t % 3 - 1
            d = ry * W + rx
            v = shift_ref[0:cin, PADL + d:PADL + d + HW]   # static shifted window
            if rx == -1:
                v = jnp.where(ok_left, v, 0.0)
            elif rx == 1:
                v = jnp.where(ok_right, v, 0.0)
            taps.append(v)
        return stack_dot(taps, name)           # [cout, HW]

    # --- cv1: 1x1 Conv + folded BN + SiLU, then chunk(2, channel) = sublane slices ---
    y_all = silu(conv1x1(x_ref[0], 'cv1'))     # [C3, HW]
    y0 = y_all[0:CHID, :]
    y1 = y_all[CHID:C3, :]

    # --- one branch = RepCSP(cin, C4, n=1) followed by Conv(C4, C4, 3, 1) ------------
    def branch(z, pfx):
        a = silu(conv1x1(z, pfx + 'r_cv1'))            # RepCSP.cv1   [CQ, HW]
        bb = silu(conv1x1(z, pfx + 'r_cv2'))           # RepCSP.cv2   [CQ, HW]
        r1 = silu(conv3x3(a, CQ, pfx + 'rep3'))        # RepConv (1x1 folded into 3x3)
        r2 = silu(conv3x3(r1, CQ, pfx + 'bcv2'))       # Bottleneck.cv2 (3x3)
        m = a + r2                                     # shortcut (c1 == c2)
        c = silu(stack_dot([m, bb], pfx + 'r_cv3'))    # RepCSP.cv3 on cat([m, b])
        return silu(conv3x3(c, C4, pfx + 'post'))      # trailing Conv(c4, c4, 3, 1)

    y2 = branch(y1, 'b2_')                     # self.cv2(y1)
    y3 = branch(y2, 'b3_')                     # self.cv3(y2)

    # --- cv4 on cat([y0, y1, y2, y3], ch): one K=32 matmul over stacked pieces -------
    o = silu(stack_dot([y0, y1, y2, y3], 'cv4'))       # [C2, HW]
    out_ref[0] = o.astype(out_ref.dtype)


# ----------------------------------------------------------------------------- wrapper
def repncspelan4(x_nchw, slab):
    nb = x_nchw.shape[0]
    x = x_nchw.reshape(nb, C1, HW)             # NCHW -> [B, C, H*W] (free reshape)
    out = pl.pallas_call(
        elan_kernel,
        out_shape=jax.ShapeDtypeStruct((nb, C2, HW), jnp.float32),
        grid=(nb,),
        in_specs=[
            pl.BlockSpec((1, C1, HW), lambda b: (b, 0, 0)),
            pl.BlockSpec((SLAB_ROWS, SLAB_K), lambda b: (0, 0)),   # grid-invariant
        ],
        out_specs=pl.BlockSpec((1, C2, HW), lambda b: (b, 0, 0)),
        scratch_shapes=[
            pltpu.VMEM((CIN_MAX, SHIFT_W), jnp.float32),           # shift scratch
            pltpu.VMEM((9 * CIN_MAX, HW), jnp.float32),            # im2col / cat stage
        ],
        compiler_params=pltpu.CompilerParams(dimension_semantics=("parallel",)),
    )(x, slab)
    return out.reshape(nb, C2, H, W)           # [B, C, H*W] -> NCHW (free reshape)


# -------------------------------------------------- host-side parameter slab packing --
def pack_params(params):
    slab = jnp.zeros((SLAB_ROWS, SLAB_K), jnp.float32)

    def put(s, name, wt, b):
        off, cout, k = LAYOUT[name]
        assert wt.shape == (cout, k), (name, wt.shape, (cout, k))
        s = s.at[off:off + cout, 0:k].set(wt)
        s = s.at[off:off + cout, k].set(b.reshape(-1))
        return s

    def t3(w):          # [3,3,ci,co] -> [co, 9*ci], row order = tap*ci + ci_idx
        ci, co = w.shape[2], w.shape[3]
        return w.reshape(9 * ci, co).T

    slab = put(slab, 'cv1', params['cv1_w'].T, params['cv1_b'])
    slab = put(slab, 'cv4', params['cv4_w'].T, params['cv4_b'])
    for pfx, key in (('b2_', 'b2'), ('b3_', 'b3')):
        P = params[key]
        slab = put(slab, pfx + 'r_cv1', P['r_cv1_w'].T, P['r_cv1_b'])
        slab = put(slab, pfx + 'r_cv2', P['r_cv2_w'].T, P['r_cv2_b'])
        # RepConv deploy-time fusion: fold the 1x1 branch into the 3x3 center tap.
        w3 = P['rep3_w'].at[1, 1].add(P['rep1_w'])
        b3 = P['rep3_b'] + P['rep1_b']
        slab = put(slab, pfx + 'rep3', t3(w3), b3)
        slab = put(slab, pfx + 'bcv2', t3(P['bcv2_w']), P['bcv2_b'])
        slab = put(slab, pfx + 'r_cv3', P['r_cv3_w'].T, P['r_cv3_b'])
        slab = put(slab, pfx + 'post', t3(P['post_w']), P['post_b'])
    return slab


# --------------------------------------------------------------- pure-JAX reference ---
def reference(x_nchw, params):
    x = jnp.transpose(x_nchw, (0, 2, 3, 1))
    hp = jax.lax.Precision.HIGHEST

    def silu(v):
        return v * (1.0 / (1.0 + jnp.exp(-v)))

    def c1x1(z, w, b):
        return jnp.einsum('bhwc,cd->bhwd', z, w, precision=hp) + b.reshape(1, 1, 1, -1)

    def c3x3(z, w, b):                          # w: [3,3,ci,co]
        y = jax.lax.conv_general_dilated(
            z, w, window_strides=(1, 1), padding='SAME',
            dimension_numbers=('NHWC', 'HWIO', 'NHWC'), precision=hp)
        return y + b.reshape(1, 1, 1, -1)

    t = silu(c1x1(x, params['cv1_w'], params['cv1_b']))
    y0, y1 = t[..., :CHID], t[..., CHID:]

    def branch(z, P):
        a = silu(c1x1(z, P['r_cv1_w'], P['r_cv1_b']))
        bb = silu(c1x1(z, P['r_cv2_w'], P['r_cv2_b']))
        r1 = silu(c3x3(a, P['rep3_w'], P['rep3_b']) + c1x1(a, P['rep1_w'], P['rep1_b']))
        r2 = silu(c3x3(r1, P['bcv2_w'], P['bcv2_b']))
        m = a + r2
        c = silu(c1x1(jnp.concatenate([m, bb], axis=-1), P['r_cv3_w'], P['r_cv3_b']))
        return silu(c3x3(c, P['post_w'], P['post_b']))

    y2 = branch(y1, params['b2'])
    y3 = branch(y2, params['b3'])
    cat = jnp.concatenate([y0, y1, y2, y3], axis=-1)
    o = silu(c1x1(cat, params['cv4_w'], params['cv4_b']))
    return jnp.transpose(o, (0, 3, 1, 2))


# --------------------------------------------------------------------------- params ---
def _fold_bn(key, cin, cout, k):
    """Random conv weight + BatchNorm (eval mode), folded into (w, b)."""
    kw, kg, kb, km, kv = jax.random.split(key, 5)
    if k == 1:
        w = jax.random.normal(kw, (cin, cout), jnp.float32) / math.sqrt(cin)
    else:
        w = jax.random.normal(kw, (k, k, cin, cout), jnp.float32) / math.sqrt(cin * k * k)
    gamma = 1.0 + 0.1 * jax.random.normal(kg, (cout,), jnp.float32)
    beta = 0.1 * jax.random.normal(kb, (cout,), jnp.float32)
    mean = 0.1 * jax.random.normal(km, (cout,), jnp.float32)
    var = jnp.abs(1.0 + 0.1 * jax.random.normal(kv, (cout,), jnp.float32))
    scale = gamma * jax.lax.rsqrt(var + BN_EPS)
    return w * scale, (beta - mean * scale).reshape(1, cout)


def _branch_params(key, cin, cout):
    c_ = cout // 2
    keys = jax.random.split(key, 7)
    p = {}
    p['r_cv1_w'], p['r_cv1_b'] = _fold_bn(keys[0], cin, c_, 1)      # RepCSP.cv1
    p['r_cv2_w'], p['r_cv2_b'] = _fold_bn(keys[1], cin, c_, 1)      # RepCSP.cv2
    p['rep3_w'], p['rep3_b'] = _fold_bn(keys[2], c_, c_, 3)         # RepConv 3x3
    p['rep1_w'], p['rep1_b'] = _fold_bn(keys[3], c_, c_, 1)         # RepConv 1x1
    p['bcv2_w'], p['bcv2_b'] = _fold_bn(keys[4], c_, c_, 3)         # Bottleneck.cv2
    p['r_cv3_w'], p['r_cv3_b'] = _fold_bn(keys[5], 2 * c_, cout, 1)  # RepCSP.cv3
    p['post_w'], p['post_b'] = _fold_bn(keys[6], cout, cout, 3)     # trailing Conv 3x3
    return p


def init_params(key):
    k1, k2, k3, k4 = jax.random.split(key, 4)
    p = {}
    p['cv1_w'], p['cv1_b'] = _fold_bn(k1, C1, C3, 1)
    p['cv4_w'], p['cv4_b'] = _fold_bn(k2, C3 + 2 * C4, C2, 1)
    p['b2'] = _branch_params(k3, C3 // 2, C4)
    p['b3'] = _branch_params(k4, C4, C4)
    return p


# ------------------------------------------------------------------------------ main --
if __name__ == "__main__":
    key = jax.random.PRNGKey(0)
    k_params, k_x = jax.random.split(key)
    params = init_params(k_params)
    x = jax.random.normal(k_x, (B, C1, H, W), dtype=jnp.float32)   # NCHW like PyTorch

    slab = pack_params(params)
    out = jax.block_until_ready(repncspelan4(x, slab))

    ref = reference(x, params)
    assert out.shape == (B, C2, H, W), out.shape
    if not jnp.allclose(out, ref, rtol=2e-3, atol=2e-3):
        raise AssertionError(
            f"mismatch vs reference, max abs err = {jnp.max(jnp.abs(out - ref))}")
    print("KERNEL_OK")
</pallas_src>

<mosaic_0001>
module attributes {stable_mosaic.version = 11 : i64} {
  func.func @elan_kernel(%arg0: i32, %arg1: memref<1x8x256xf32, #tpu.memory_space<vmem>>, %arg2: memref<128x128xf32, #tpu.memory_space<vmem>>, %arg3: memref<1x16x256xf32, #tpu.memory_space<vmem>>, %arg4: memref<8x512xf32, #tpu.memory_space<vmem>>, %arg5: memref<72x256xf32, #tpu.memory_space<vmem>>) attributes {dimension_semantics = [#tpu.dimension_semantics<parallel>], iteration_bounds = array<i64: 2>, scalar_prefetch = 0 : i64, scratch_operands = 2 : i64, tpu.core_type = #tpu.core_type<tc>, window_params = [{transform_indices = @transform_0, window_bounds = array<i64: 1, 8, 256>}, {pipeline_mode = #tpu.pipeline_mode<synchronous>, transform_indices = @transform_1, window_bounds = array<i64: 128, 128>}, {transform_indices = @transform_2, window_bounds = array<i64: 1, 16, 256>}]} {
    %cst = arith.constant 0.000000e+00 : f32
    %0 = vector.broadcast %cst : f32 to vector<8x128xf32>
    %c0 = arith.constant 0 : index
    %c0_0 = arith.constant 0 : index
    %1 = vector.load %arg4[%c0, %c0_0] : memref<8x512xf32, #tpu.memory_space<vmem>>, vector<8x128xf32>
    tpu.vector_store %arg4[%c0, %c0_0], %0 {strides = array<i32>} : memref<8x512xf32, #tpu.memory_space<vmem>>, vector<8x128xf32>,
    %cst_1 = arith.constant 0.000000e+00 : f32
    %2 = vector.broadcast %cst_1 : f32 to vector<8x128xf32>
    %c0_2 = arith.constant 0 : index
    %c384 = arith.constant 384 : index
    %3 = vector.load %arg4[%c0_2, %c384] : memref<8x512xf32, #tpu.memory_space<vmem>>, vector<8x128xf32>
    tpu.vector_store %arg4[%c0_2, %c384], %2 {strides = array<i32>} : memref<8x512xf32, #tpu.memory_space<vmem>>, vector<8x128xf32>,
    %4 = tpu.iota {dimensions = array<i32: 1>} : vector<1x256xi32>
    %c16_i32 = arith.constant 16 : i32
    %c0_i32 = arith.constant 0 : i32
    %5 = arith.cmpi eq, %c16_i32, %c0_i32 : i32
    %c1_i32 = arith.constant 1 : i32
    %6 = arith.select %5, %c1_i32, %c16_i32 : i32
    %7 = vector.broadcast %6 : i32 to vector<1x256xi32>
    %8 = arith.remsi %4, %7 : vector<1x256xi32>
    %c0_i32_3 = arith.constant 0 : i32
    %9 = vector.broadcast %c0_i32_3 : i32 to vector<1x256xi32>
    %10 = arith.cmpi ne, %8, %9 : vector<1x256xi32>
    %c0_i32_4 = arith.constant 0 : i32
    %11 = vector.broadcast %c0_i32_4 : i32 to vector<1x256xi32>
    %12 = arith.cmpi slt, %8, %11 : vector<1x256xi32>
    %c0_i32_5 = arith.constant 0 : i32
    %13 = arith.cmpi slt, %6, %c0_i32_5 : i32
    %14 = vector.broadcast %13 : i1 to vector<1x256xi1>
    %15 = vector.broadcast %14 : vector<1x256xi1> to vector<1x256xi1>
    %16 = arith.xori %12, %15 : vector<1x256xi1>
    %17 = arith.andi %16, %10 : vector<1x256xi1>
    %18 = vector.broadcast %6 : i32 to vector<1x256xi32>
    %19 = arith.addi %8, %18 : vector<1x256xi32>
    %20 = arith.select %17, %19, %8 : vector<1x256xi1>, vector<1x256xi32>
    %c1_i32_6 = arith.constant 1 : i32
    %21 = vector.broadcast %c1_i32_6 : i32 to vector<1x256xi32>
    %22 = arith.cmpi sge, %20, %21 : vector<1x256xi32>
    %c15_i32 = arith.constant 15 : i32
    %23 = vector.broadcast %c15_i32 : i32 to vector<1x256xi32>
    %24 = arith.cmpi slt, %20, %23 : vector<1x256xi32>
    %c0_7 = arith.constant 0 : index
    %c0_8 = arith.constant 0 : index
    %c0_9 = arith.constant 0 : index
    %25 = vector.load %arg1[%c0_7, %c0_8, %c0_9] : memref<1x8x256xf32, #tpu.memory_space<vmem>>, vector<1x8x256xf32>
    %26 = vector.shape_cast %25 : vector<1x8x256xf32> to vector<8x256xf32>
    %c0_10 = arith.constant 0 : index
    %c0_11 = arith.constant 0 : index
    %27 = vector.load %arg2[%c0_10, %c0_11] : memref<128x128xf32, #tpu.memory_space<vmem>>, vector<16x8xf32>
    %c0_12 = arith.constant 0 : index
    %c8 = arith.constant 8 : index
    %28 = vector.load %arg2[%c0_12, %c8] : memref<128x128xf32, #tpu.memory_space<vmem>>, vector<16x1xf32>
    %cst_13 = arith.constant dense<0.000000e+00> : vector<16x256xf32>
    %29 = tpu.matmul %27, %26, %cst_13 {dimension_numbers = #tpu.dot_dimension_numbers<[1], [0], [0], [1], [0, 0, 1, 1], [], []>} : vector<16x8xf32>, vector<8x256xf32>, vector<16x256xf32> -> vector<16x256xf32>
    %30 = vector.broadcast %28 : vector<16x1xf32> to vector<16x256xf32>
    %31 = arith.addf %29, %30 : vector<16x256xf32>
    %cst_14 = arith.constant 0.000000e+00 : f32
    %32 = vector.broadcast %cst_14 : f32 to vector<16x256xf32>
    %33 = arith.subf %32, %31 : vector<16x256xf32>
    %34 = math.exp %33 : vector<16x256xf32>
    %cst_15 = arith.constant 1.000000e+00 : f32
    %35 = vector.broadcast %cst_15 : f32 to vector<16x256xf32>
    %36 = arith.addf %35, %34 : vector<16x256xf32>
    %cst_16 = arith.constant 1.000000e+00 : f32
    %37 = vector.broadcast %cst_16 : f32 to vector<16x256xf32>
    %38 = arith.divf %37, %36 : vector<16x256xf32>
    %39 = arith.mulf %31, %38 : vector<16x256xf32>
    %40 = vector.extract_strided_slice %39 {offsets = [0, 0], sizes = [8, 256], strides = [1, 1]} : vector<16x256xf32> to vector<8x256xf32>
    %41 = vector.extract_strided_slice %39 {offsets = [8, 0], sizes = [8, 256], strides = [1, 1]} : vector<16x256xf32> to vector<8x256xf32>
    %c32 = arith.constant 32 : index
    %c0_17 = arith.constant 0 : index
    %42 = vector.load %arg2[%c32, %c0_17] : memref<128x128xf32, #tpu.memory_space<vmem>>, vector<4x8xf32>
    %c32_18 = arith.constant 32 : index
    %c8_19 = arith.constant 8 : index
    %43 = vector.load %arg2[%c32_18, %c8_19] : memref<128x128xf32, #tpu.memory_space<vmem>>, vector<4x1xf32>
    %cst_20 = arith.constant dense<0.000000e+00> : vector<4x256xf32>
    %44 = tpu.matmul %42, %41, %cst_20 {dimension_numbers = #tpu.dot_dimension_numbers<[1], [0], [0], [1], [0, 0, 1, 1], [], []>} : vector<4x8xf32>, vector<8x256xf32>, vector<4x256xf32> -> vector<4x256xf32>
    %45 = vector.broadcast %43 : vector<4x1xf32> to vector<4x256xf32>
    %46 = arith.addf %44, %45 : vector<4x256xf32>
    %cst_21 = arith.constant 0.000000e+00 : f32
    %47 = vector.broadcast %cst_21 : f32 to vector<4x256xf32>
    %48 = arith.subf %47, %46 : vector<4x256xf32>
    %49 = math.exp %48 : vector<4x256xf32>
    %cst_22 = arith.constant 1.000000e+00 : f32
    %50 = vector.broadcast %cst_22 : f32 to vector<4x256xf32>
    %51 = arith.addf %50, %49 : vector<4x256xf32>
    %cst_23 = arith.constant 1.000000e+00 : f32
    %52 = vector.broadcast %cst_23 : f32 to vector<4x256xf32>
    %53 = arith.divf %52, %51 : vector<4x256xf32>
    %54 = arith.mulf %46, %53 : vector<4x256xf32>
    %c40 = arith.constant 40 : index
    %c0_24 = arith.constant 0 : index
    %55 = vector.load %arg2[%c40, %c0_24] : memref<128x128xf32, #tpu.memory_space<vmem>>, vector<4x8xf32>
    %c40_25 = arith.constant 40 : index
    %c8_26 = arith.constant 8 : index
    %56 = vector.load %arg2[%c40_25, %c8_26] : memref<128x128xf32, #tpu.memory_space<vmem>>, vector<4x1xf32>
    %cst_27 = arith.constant dense<0.000000e+00> : vector<4x256xf32>
    %57 = tpu.matmul %55, %41, %cst_27 {dimension_numbers = #tpu.dot_dimension_numbers<[1], [0], [0], [1], [0, 0, 1, 1], [], []>} : vector<4x8xf32>, vector<8x256xf32>, vector<4x256xf32> -> vector<4x256xf32>
    %58 = vector.broadcast %56 : vector<4x1xf32> to vector<4x256xf32>
    %59 = arith.addf %57, %58 : vector<4x256xf32>
    %cst_28 = arith.constant 0.000000e+00 : f32
    %60 = vector.broadcast %cst_28 : f32 to vector<4x256xf32>
    %61 = arith.subf %60, %59 : vector<4x256xf32>
    %62 = math.exp %61 : vector<4x256xf32>
    %cst_29 = arith.constant 1.000000e+00 : f32
    %63 = vector.broadcast %cst_29 : f32 to vector<4x256xf32>
    %64 = arith.addf %63, %62 : vector<4x256xf32>
    %cst_30 = arith.constant 1.000000e+00 : f32
    %65 = vector.broadcast %cst_30 : f32 to vector<4x256xf32>
    %66 = arith.divf %65, %64 : vector<4x256xf32>
    %67 = arith.mulf %59, %66 : vector<4x256xf32>
    %c0_31 = arith.constant 0 : index
    %c128 = arith.constant 128 : index
    %68 = vector.load %arg4[%c0_31, %c128] : memref<8x512xf32, #tpu.memory_space<vmem>>, vector<4x256xf32>
    tpu.vector_store %arg4[%c0_31, %c128], %54 {strides = array<i32>} : memref<8x512xf32, #tpu.memory_space<vmem>>, vector<4x256xf32>,
    %c0_32 = arith.constant 0 : index
    %c111 = arith.constant 111 : index
    %69 = vector.load %arg4[%c0_32, %c111] : memref<8x512xf32, #tpu.memory_space<vmem>>, vector<4x256xf32>
    %cst_33 = arith.constant 0.000000e+00 : f32
    %70 = vector.shape_cast %22 : vector<1x256xi1> to vector<1x256xi1>
    %71 = vector.broadcast %70 : vector<1x256xi1> to vector<4x256xi1>
    %72 = vector.broadcast %cst_33 : f32 to vector<4x256xf32>
    %73 = arith.select %71, %69, %72 : vector<4x256xi1>, vector<4x256xf32>
    %c0_34 = arith.constant 0 : index
    %c112 = arith.constant 112 : index
    %74 = vector.load %arg4[%c0_34, %c112] : memref<8x512xf32, #tpu.memory_space<vmem>>, vector<4x256xf32>
    %c0_35 = arith.constant 0 : index
    %c113 = arith.constant 113 : index
    %75 = vector.load %arg4[%c0_35, %c113] : memref<8x512xf32, #tpu.memory_space<vmem>>, vector<4x256xf32>
    %cst_36 = arith.constant 0.000000e+00 : f32
    %76 = vector.shape_cast %24 : vector<1x256xi1> to vector<1x256xi1>
    %77 = vector.broadcast %76 : vector<1x256xi1> to vector<4x256xi1>
    %78 = vector.broadcast %cst_36 : f32 to vector<4x256xf32>
    %79 = arith.select %77, %75, %78 : vector<4x256xi1>, vector<4x256xf32>
    %c0_37 = arith.constant 0 : index
    %c127 = arith.constant 127 : index
    %80 = vector.load %arg4[%c0_37, %c127] : memref<8x512xf32, #tpu.memory_space<vmem>>, vector<4x256xf32>
    %cst_38 = arith.constant 0.000000e+00 : f32
    %81 = vector.shape_cast %22 : vector<1x256xi1> to vector<1x256xi1>
    %82 = vector.broadcast %81 : vector<1x256xi1> to vector<4x256xi1>
    %83 = vector.broadcast %cst_38 : f32 to vector<4x256xf32>
    %84 = arith.select %82, %80, %83 : vector<4x256xi1>, vector<4x256xf32>
    %c0_39 = arith.constant 0 : index
    %c128_40 = arith.constant 128 : index
    %85 = vector.load %arg4[%c0_39, %c128_40] : memref<8x512xf32, #tpu.memory_space<vmem>>, vector<4x256xf32>
    %c0_41 = arith.constant 0 : index
    %c129 = arith.constant 129 : index
    %86 = vector.load %arg4[%c0_41, %c129] : memref<8x512xf32, #tpu.memory_space<vmem>>, vector<4x256xf32>
    %cst_42 = arith.constant 0.000000e+00 : f32
    %87 = vector.shape_cast %24 : vector<1x256xi1> to vector<1x256xi1>
    %88 = vector.broadcast %87 : vector<1x256xi1> to vector<4x256xi1>
    %89 = vector.broadcast %cst_42 : f32 to vector<4x256xf32>
    %90 = arith.select %88, %86, %89 : vector<4x256xi1>, vector<4x256xf32>
    %c0_43 = arith.constant 0 : index
    %c143 = arith.constant 143 : index
    %91 = vector.load %arg4[%c0_43, %c143] : memref<8x512xf32, #tpu.memory_space<vmem>>, vector<4x256xf32>
    %cst_44 = arith.constant 0.000000e+00 : f32
    %92 = vector.shape_cast %22 : vector<1x256xi1> to vector<1x256xi1>
    %93 = vector.broadcast %92 : vector<1x256xi1> to vector<4x256xi1>
    %94 = vector.broadcast %cst_44 : f32 to vector<4x256xf32>
    %95 = arith.select %93, %91, %94 : vector<4x256xi1>, vector<4x256xf32>
    %c0_45 = arith.constant 0 : index
    %c144 = arith.constant 144 : index
    %96 = vector.load %arg4[%c0_45, %c144] : memref<8x512xf32, #tpu.memory_space<vmem>>, vector<4x256xf32>
    %c0_46 = arith.constant 0 : index
    %c145 = arith.constant 145 : index
    %97 = vector.load %arg4[%c0_46, %c145] : memref<8x512xf32, #tpu.memory_space<vmem>>, vector<4x256xf32>
    %cst_47 = arith.constant 0.000000e+00 : f32
    %98 = vector.shape_cast %24 : vector<1x256xi1> to vector<1x256xi1>
    %99 = vector.broadcast %98 : vector<1x256xi1> to vector<4x256xi1>
    %100 = vector.broadcast %cst_47 : f32 to vector<4x256xf32>
    %101 = arith.select %99, %97, %100 : vector<4x256xi1>, vector<4x256xf32>
    %c48 = arith.constant 48 : index
    %c0_48 = arith.constant 0 : index
    %102 = vector.load %arg2[%c48, %c0_48] : memref<128x128xf32, #tpu.memory_space<vmem>>, vector<4x36xf32>
    %c48_49 = arith.constant 48 : index
    %c36 = arith.constant 36 : index
    %103 = vector.load %arg2[%c48_49, %c36] : memref<128x128xf32, #tpu.memory_space<vmem>>, vector<4x1xf32>
    %c0_50 = arith.constant 0 : index
    %c0_51 = arith.constant 0 : index
    %104 = vector.load %arg5[%c0_50, %c0_51] : memref<72x256xf32, #tpu.memory_space<vmem>>, vector<4x256xf32>
    tpu.vector_store %arg5[%c0_50, %c0_51], %73 {strides = array<i32>} : memref<72x256xf32, #tpu.memory_space<vmem>>, vector<4x256xf32>,
    %c4 = arith.constant 4 : index
    %c0_52 = arith.constant 0 : index
    %105 = vector.load %arg5[%c4, %c0_52] : memref<72x256xf32, #tpu.memory_space<vmem>>, vector<4x256xf32>
    tpu.vector_store %arg5[%c4, %c0_52], %74 {strides = array<i32>} : memref<72x256xf32, #tpu.memory_space<vmem>>, vector<4x256xf32>,
    %c8_53 = arith.constant 8 : index
    %c0_54 = arith.constant 0 : index
    %106 = vector.load %arg5[%c8_53, %c0_54] : memref<72x256xf32, #tpu.memory_space<vmem>>, vector<4x256xf32>
    tpu.vector_store %arg5[%c8_53, %c0_54], %79 {strides = array<i32>} : memref<72x256xf32, #tpu.memory_space<vmem>>, vector<4x256xf32>,
    %c12 = arith.constant 12 : index
    %c0_55 = arith.constant 0 : index
    %107 = vector.load %arg5[%c12, %c0_55] : memref<72x256xf32, #tpu.memory_space<vmem>>, vector<4x256xf32>
    tpu.vector_store %arg5[%c12, %c0_55], %84 {strides = array<i32>} : memref<72x256xf32, #tpu.memory_space<vmem>>, vector<4x256xf32>,
    %c16 = arith.constant 16 : index
    %c0_56 = arith.constant 0 : index
    %108 = vector.load %arg5[%c16, %c0_56] : memref<72x256xf32, #tpu.memory_space<vmem>>, vector<4x256xf32>
    tpu.vector_store %arg5[%c16, %c0_56], %85 {strides = array<i32>} : memref<72x256xf32, #tpu.memory_space<vmem>>, vector<4x256xf32>,
    %c20 = arith.constant 20 : index
    %c0_57 = arith.constant 0 : index
    %109 = vector.load %arg5[%c20, %c0_57] : memref<72x256xf32, #tpu.memory_space<vmem>>, vector<4x256xf32>
    tpu.vector_store %arg5[%c20, %c0_57], %90 {strides = array<i32>} : memref<72x256xf32, #tpu.memory_space<vmem>>, vector<4x256xf32>,
    %c24 = arith.constant 24 : index
    %c0_58 = arith.constant 0 : index
    %110 = vector.load %arg5[%c24, %c0_58] : memref<72x256xf32, #tpu.memory_space<vmem>>, vector<4x256xf32>
    tpu.vector_store %arg5[%c24, %c0_58], %95 {strides = array<i32>} : memref<72x256xf32, #tpu.memory_space<vmem>>, vector<4x256xf32>,
    %c28 = arith.constant 28 : index
    %c0_59 = arith.constant 0 : index
    %111 = vector.load %arg5[%c28, %c0_59] : memref<72x256xf32, #tpu.memory_space<vmem>>, vector<4x256xf32>
    tpu.vector_store %arg5[%c28, %c0_59], %96 {strides = array<i32>} : memref<72x256xf32, #tpu.memory_space<vmem>>, vector<4x256xf32>,
    %c32_60 = arith.constant 32 : index
    %c0_61 = arith.constant 0 : index
    %112 = vector.load %arg5[%c32_60, %c0_61] : memref<72x256xf32, #tpu.memory_space<vmem>>, vector<4x256xf32>
    tpu.vector_store %arg5[%c32_60, %c0_61], %101 {strides = array<i32>} : memref<72x256xf32, #tpu.memory_space<vmem>>, vector<4x256xf32>,
    %c0_62 = arith.constant 0 : index
    %c0_63 = arith.constant 0 : index
    %113 = vector.load %arg5[%c0_62, %c0_63] : memref<72x256xf32, #tpu.memory_space<vmem>>, vector<36x256xf32>
    %cst_64 = arith.constant dense<0.000000e+00> : vector<4x256xf32>
    %114 = tpu.matmul %102, %113, %cst_64 {dimension_numbers = #tpu.dot_dimension_numbers<[1], [0], [0], [1], [0, 0, 1, 1], [], []>} : vector<4x36xf32>, vector<36x256xf32>, vector<4x256xf32> -> vector<4x256xf32>
    %115 = vector.broadcast %103 : vector<4x1xf32> to vector<4x256xf32>
    %116 = arith.addf %114, %115 : vector<4x256xf32>
    %cst_65 = arith.constant 0.000000e+00 : f32
    %117 = vector.broadcast %cst_65 : f32 to vector<4x256xf32>
    %118 = arith.subf %117, %116 : vector<4x256xf32>
    %119 = math.exp %118 : vector<4x256xf32>
    %cst_66 = arith.constant 1.000000e+00 : f32
    %120 = vector.broadcast %cst_66 : f32 to vector<4x256xf32>
    %121 = arith.addf %120, %119 : vector<4x256xf32>
    %cst_67 = arith.constant 1.000000e+00 : f32
    %122 = vector.broadcast %cst_67 : f32 to vector<4x256xf32>
    %123 = arith.divf %122, %121 : vector<4x256xf32>
    %124 = arith.mulf %116, %123 : vector<4x256xf32>
    %c0_68 = arith.constant 0 : index
    %c128_69 = arith.constant 128 : index
    %125 = vector.load %arg4[%c0_68, %c128_69] : memref<8x512xf32, #tpu.memory_space<vmem>>, vector<4x256xf32>
    tpu.vector_store %arg4[%c0_68, %c128_69], %124 {strides = array<i32>} : memref<8x512xf32, #tpu.memory_space<vmem>>, vector<4x256xf32>,
    %c0_70 = arith.constant 0 : index
    %c111_71 = arith.constant 111 : index
    %126 = vector.load %arg4[%c0_70, %c111_71] : memref<8x512xf32, #tpu.memory_space<vmem>>, vector<4x256xf32>
    %cst_72 = arith.constant 0.000000e+00 : f32
    %127 = vector.shape_cast %22 : vector<1x256xi1> to vector<1x256xi1>
    %128 = vector.broadcast %127 : vector<1x256xi1> to vector<4x256xi1>
    %129 = vector.broadcast %cst_72 : f32 to vector<4x256xf32>
    %130 = arith.select %128, %126, %129 : vector<4x256xi1>, vector<4x256xf32>
    %c0_73 = arith.constant 0 : index
    %c112_74 = arith.constant 112 : index
    %131 = vector.load %arg4[%c0_73, %c112_74] : memref<8x512xf32, #tpu.memory_space<vmem>>, vector<4x256xf32>
    %c0_75 = arith.constant 0 : index
    %c113_76 = arith.constant 113 : index
    %132 = vector.load %arg4[%c0_75, %c113_76] : memref<8x512xf32, #tpu.memory_space<vmem>>, vector<4x256xf32>
    %cst_77 = arith.constant 0.000000e+00 : f32
    %133 = vector.shape_cast %24 : vector<1x256xi1> to vector<1x256xi1>
    %134 = vector.broadcast %133 : vector<1x256xi1> to vector<4x256xi1>
    %135 = vector.broadcast %cst_77 : f32 to vector<4x256xf32>
    %136 = arith.select %134, %132, %135 : vector<4x256xi1>, vector<4x256xf32>
    %c0_78 = arith.constant 0 : index
    %c127_79 = arith.constant 127 : index
    %137 = vector.load %arg4[%c0_78, %c127_79] : memref<8x512xf32, #tpu.memory_space<vmem>>, vector<4x256xf32>
    %cst_80 = arith.constant 0.000000e+00 : f32
    %138 = vector.shape_cast %22 : vector<1x256xi1> to vector<1x256xi1>
    %139 = vector.broadcast %138 : vector<1x256xi1> to vector<4x256xi1>
    %140 = vector.broadcast %cst_80 : f32 to vector<4x256xf32>
    %141 = arith.select %139, %137, %140 : vector<4x256xi1>, vector<4x256xf32>
    %c0_81 = arith.constant 0 : index
    %c128_82 = arith.constant 128 : index
    %142 = vector.load %arg4[%c0_81, %c128_82] : memref<8x512xf32, #tpu.memory_space<vmem>>, vector<4x256xf32>
    %c0_83 = arith.constant 0 : index
    %c129_84 = arith.constant 129 : index
    %143 = vector.load %arg4[%c0_83, %c129_84] : memref<8x512xf32, #tpu.memory_space<vmem>>, vector<4x256xf32>
    %cst_85 = arith.constant 0.000000e+00 : f32
    %144 = vector.shape_cast %24 : vector<1x256xi1> to vector<1x256xi1>
    %145 = vector.broadcast %144 : vector<1x256xi1> to vector<4x256xi1>
    %146 = vector.broadcast %cst_85 : f32 to vector<4x256xf32>
    %147 = arith.select %145, %143, %146 : vector<4x256xi1>, vector<4x256xf32>
    %c0_86 = arith.constant 0 : index
    %c143_87 = arith.constant 143 : index
    %148 = vector.load %arg4[%c0_86, %c143_87] : memref<8x512xf32, #tpu.memory_space<vmem>>, vector<4x256xf32>
    %cst_88 = arith.constant 0.000000e+00 : f32
    %149 = vector.shape_cast %22 : vector<1x256xi1> to vector<1x256xi1>
    %150 = vector.broadcast %149 : vector<1x256xi1> to vector<4x256xi1>
    %151 = vector.broadcast %cst_88 : f32 to vector<4x256xf32>
    %152 = arith.select %150, %148, %151 : vector<4x256xi1>, vector<4x256xf32>
    %c0_89 = arith.constant 0 : index
    %c144_90 = arith.constant 144 : index
    %153 = vector.load %arg4[%c0_89, %c144_90] : memref<8x512xf32, #tpu.memory_space<vmem>>, vector<4x256xf32>
    %c0_91 = arith.constant 0 : index
    %c145_92 = arith.constant 145 : index
    %154 = vector.load %arg4[%c0_91, %c145_92] : memref<8x512xf32, #tpu.memory_space<vmem>>, vector<4x256xf32>
    %cst_93 = arith.constant 0.000000e+00 : f32
    %155 = vector.shape_cast %24 : vector<1x256xi1> to vector<1x256xi1>
    %156 = vector.broadcast %155 : vector<1x256xi1> to vector<4x256xi1>
    %157 = vector.broadcast %cst_93 : f32 to vector<4x256xf32>
    %158 = arith.select %156, %154, %157 : vector<4x256xi1>, vector<4x256xf32>
    %c56 = arith.constant 56 : index
    %c0_94 = arith.constant 0 : index
    %159 = vector.load %arg2[%c56, %c0_94] : memref<128x128xf32, #tpu.memory_space<vmem>>, vector<4x36xf32>
    %c56_95 = arith.constant 56 : index
    %c36_96 = arith.constant 36 : index
    %160 = vector.load %arg2[%c56_95, %c36_96] : memref<128x128xf32, #tpu.memory_space<vmem>>, vector<4x1xf32>
    %c0_97 = arith.constant 0 : index
    %c0_98 = arith.constant 0 : index
    %161 = vector.load %arg5[%c0_97, %c0_98] : memref<72x256xf32, #tpu.memory_space<vmem>>, vector<4x256xf32>
    tpu.vector_store %arg5[%c0_97, %c0_98], %130 {strides = array<i32>} : memref<72x256xf32, #tpu.memory_space<vmem>>, vector<4x256xf32>,
    %c4_99 = arith.constant 4 : index
    %c0_100 = arith.constant 0 : index
    %162 = vector.load %arg5[%c4_99, %c0_100] : memref<72x256xf32, #tpu.memory_space<vmem>>, vector<4x256xf32>
    tpu.vector_store %arg5[%c4_99, %c0_100], %131 {strides = array<i32>} : memref<72x256xf32, #tpu.memory_space<vmem>>, vector<4x256xf32>,
    %c8_101 = arith.constant 8 : index
    %c0_102 = arith.constant 0 : index
    %163 = vector.load %arg5[%c8_101, %c0_102] : memref<72x256xf32, #tpu.memory_space<vmem>>, vector<4x256xf32>
    tpu.vector_store %arg5[%c8_101, %c0_102], %136 {strides = array<i32>} : memref<72x256xf32, #tpu.memory_space<vmem>>, vector<4x256xf32>,
    %c12_103 = arith.constant 12 : index
    %c0_104 = arith.constant 0 : index
    %164 = vector.load %arg5[%c12_103, %c0_104] : memref<72x256xf32, #tpu.memory_space<vmem>>, vector<4x256xf32>
    tpu.vector_store %arg5[%c12_103, %c0_104], %141 {strides = array<i32>} : memref<72x256xf32, #tpu.memory_space<vmem>>, vector<4x256xf32>,
    %c16_105 = arith.constant 16 : index
    %c0_106 = arith.constant 0 : index
    %165 = vector.load %arg5[%c16_105, %c0_106] : memref<72x256xf32, #tpu.memory_space<vmem>>, vector<4x256xf32>
    tpu.vector_store %arg5[%c16_105, %c0_106], %142 {strides = array<i32>} : memref<72x256xf32, #tpu.memory_space<vmem>>, vector<4x256xf32>,
    %c20_107 = arith.constant 20 : index
    %c0_108 = arith.constant 0 : index
    %166 = vector.load %arg5[%c20_107, %c0_108] : memref<72x256xf32, #tpu.memory_space<vmem>>, vector<4x256xf32>
    tpu.vector_store %arg5[%c20_107, %c0_108], %147 {strides = array<i32>} : memref<72x256xf32, #tpu.memory_space<vmem>>, vector<4x256xf32>,
    %c24_109 = arith.constant 24 : index
    %c0_110 = arith.constant 0 : index
    %167 = vector.load %arg5[%c24_109, %c0_110] : memref<72x256xf32, #tpu.memory_space<vmem>>, vector<4x256xf32>
    tpu.vector_store %arg5[%c24_109, %c0_110], %152 {strides = array<i32>} : memref<72x256xf32, #tpu.memory_space<vmem>>, vector<4x256xf32>,
    %c28_111 = arith.constant 28 : index
    %c0_112 = arith.constant 0 : index
    %168 = vector.load %arg5[%c28_111, %c0_112] : memref<72x256xf32, #tpu.memory_space<vmem>>, vector<4x256xf32>
    tpu.vector_store %arg5[%c28_111, %c0_112], %153 {strides = array<i32>} : memref<72x256xf32, #tpu.memory_space<vmem>>, vector<4x256xf32>,
    %c32_113 = arith.constant 32 : index
    %c0_114 = arith.constant 0 : index
    %169 = vector.load %arg5[%c32_113, %c0_114] : memref<72x256xf32, #tpu.memory_space<vmem>>, vector<4x256xf32>
    tpu.vector_store %arg5[%c32_113, %c0_114], %158 {strides = array<i32>} : memref<72x256xf32, #tpu.memory_space<vmem>>, vector<4x256xf32>,
    %c0_115 = arith.constant 0 : index
    %c0_116 = arith.constant 0 : index
    %170 = vector.load %arg5[%c0_115, %c0_116] : memref<72x256xf32, #tpu.memory_space<vmem>>, vector<36x256xf32>
    %cst_117 = arith.constant dense<0.000000e+00> : vector<4x256xf32>
    %171 = tpu.matmul %159, %170, %cst_117 {dimension_numbers = #tpu.dot_dimension_numbers<[1], [0], [0], [1], [0, 0, 1, 1], [], []>} : vector<4x36xf32>, vector<36x256xf32>, vector<4x256xf32> -> vector<4x256xf32>
    %172 = vector.broadcast %160 : vector<4x1xf32> to vector<4x256xf32>
    %173 = arith.addf %171, %172 : vector<4x256xf32>
    %cst_118 = arith.constant 0.000000e+00 : f32
    %174 = vector.broadcast %cst_118 : f32 to vector<4x256xf32>
    %175 = arith.subf %174, %173 : vector<4x256xf32>
    %176 = math.exp %175 : vector<4x256xf32>
    %cst_119 = arith.constant 1.000000e+00 : f32
    %177 = vector.broadcast %cst_119 : f32 to vector<4x256xf32>
    %178 = arith.addf %177, %176 : vector<4x256xf32>
    %cst_120 = arith.constant 1.000000e+00 : f32
    %179 = vector.broadcast %cst_120 : f32 to vector<4x256xf32>
    %180 = arith.divf %179, %178 : vector<4x256xf32>
    %181 = arith.mulf %173, %180 : vector<4x256xf32>
    %182 = arith.addf %54, %181 : vector<4x256xf32>
    %c64 = arith.constant 64 : index
    %c0_121 = arith.constant 0 : index
    %183 = vector.load %arg2[%c64, %c0_121] : memref<128x128xf32, #tpu.memory_space<vmem>>, vector<8x8xf32>
    %c64_122 = arith.constant 64 : index
    %c8_123 = arith.constant 8 : index
    %184 = vector.load %arg2[%c64_122, %c8_123] : memref<128x128xf32, #tpu.memory_space<vmem>>, vector<8x1xf32>
    %c0_124 = arith.constant 0 : index
    %c0_125 = arith.constant 0 : index
    %185 = vector.load %arg5[%c0_124, %c0_125] : memref<72x256xf32, #tpu.memory_space<vmem>>, vector<4x256xf32>
    tpu.vector_store %arg5[%c0_124, %c0_125], %182 {strides = array<i32>} : memref<72x256xf32, #tpu.memory_space<vmem>>, vector<4x256xf32>,
    %c4_126 = arith.constant 4 : index
    %c0_127 = arith.constant 0 : index
    %186 = vector.load %arg5[%c4_126, %c0_127] : memref<72x256xf32, #tpu.memory_space<vmem>>, vector<4x256xf32>
    tpu.vector_store %arg5[%c4_126, %c0_127], %67 {strides = array<i32>} : memref<72x256xf32, #tpu.memory_space<vmem>>, vector<4x256xf32>,
    %c0_128 = arith.constant 0 : index
    %c0_129 = arith.constant 0 : index
    %187 = vector.load %arg5[%c0_128, %c0_129] : memref<72x256xf32, #tpu.memory_space<vmem>>, vector<8x256xf32>
    %cst_130 = arith.constant dense<0.000000e+00> : vector<8x256xf32>
    %188 = tpu.matmul %183, %187, %cst_130 {dimension_numbers = #tpu.dot_dimension_numbers<[1], [0], [0], [1], [0, 0, 1, 1], [], []>} : vector<8x8xf32>, vector<8x256xf32>, vector<8x256xf32> -> vector<8x256xf32>
    %189 = vector.broadcast %184 : vector<8x1xf32> to vector<8x256xf32>
    %190 = arith.addf %188, %189 : vector<8x256xf32>
    %cst_131 = arith.constant 0.000000e+00 : f32
    %191 = vector.broadcast %cst_131 : f32 to vector<8x256xf32>
    %192 = arith.subf %191, %190 : vector<8x256xf32>
    %193 = math.exp %192 : vector<8x256xf32>
    %cst_132 = arith.constant 1.000000e+00 : f32
    %194 = vector.broadcast %cst_132 : f32 to vector<8x256xf32>
    %195 = arith.addf %194, %193 : vector<8x256xf32>
    %cst_133 = arith.constant 1.000000e+00 : f32
    %196 = vector.broadcast %cst_133 : f32 to vector<8x256xf32>
    %197 = arith.divf %196, %195 : vector<8x256xf32>
    %198 = arith.mulf %190, %197 : vector<8x256xf32>
    %c0_134 = arith.constant 0 : index
    %c128_135 = arith.constant 128 : index
    %199 = vector.load %arg4[%c0_134, %c128_135] : memref<8x512xf32, #tpu.memory_space<vmem>>, vector<8x256xf32>
    tpu.vector_store %arg4[%c0_134, %c128_135], %198 {strides = array<i32>} : memref<8x512xf32, #tpu.memory_space<vmem>>, vector<8x256xf32>,
    %c0_136 = arith.constant 0 : index
    %c111_137 = arith.constant 111 : index
    %200 = vector.load %arg4[%c0_136, %c111_137] : memref<8x512xf32, #tpu.memory_space<vmem>>, vector<8x256xf32>
    %cst_138 = arith.constant 0.000000e+00 : f32
    %201 = vector.shape_cast %22 : vector<1x256xi1> to vector<1x256xi1>
    %202 = vector.broadcast %201 : vector<1x256xi1> to vector<8x256xi1>
    %203 = vector.broadcast %cst_138 : f32 to vector<8x256xf32>
    %204 = arith.select %202, %200, %203 : vector<8x256xi1>, vector<8x256xf32>
    %c0_139 = arith.constant 0 : index
    %c112_140 = arith.constant 112 : index
    %205 = vector.load %arg4[%c0_139, %c112_140] : memref<8x512xf32, #tpu.memory_space<vmem>>, vector<8x256xf32>
    %c0_141 = arith.constant 0 : index
    %c113_142 = arith.constant 113 : index
    %206 = vector.load %arg4[%c0_141, %c113_142] : memref<8x512xf32, #tpu.memory_space<vmem>>, vector<8x256xf32>
    %cst_143 = arith.constant 0.000000e+00 : f32
    %207 = vector.shape_cast %24 : vector<1x256xi1> to vector<1x256xi1>
    %208 = vector.broadcast %207 : vector<1x256xi1> to vector<8x256xi1>
    %209 = vector.broadcast %cst_143 : f32 to vector<8x256xf32>
    %210 = arith.select %208, %206, %209 : vector<8x256xi1>, vector<8x256xf32>
    %c0_144 = arith.constant 0 : index
    %c127_145 = arith.constant 127 : index
    %211 = vector.load %arg4[%c0_144, %c127_145] : memref<8x512xf32, #tpu.memory_space<vmem>>, vector<8x256xf32>
    %cst_146 = arith.constant 0.000000e+00 : f32
    %212 = vector.shape_cast %22 : vector<1x256xi1> to vector<1x256xi1>
    %213 = vector.broadcast %212 : vector<1x256xi1> to vector<8x256xi1>
    %214 = vector.broadcast %cst_146 : f32 to vector<8x256xf32>
    %215 = arith.select %213, %211, %214 : vector<8x256xi1>, vector<8x256xf32>
    %c0_147 = arith.constant 0 : index
    %c128_148 = arith.constant 128 : index
    %216 = vector.load %arg4[%c0_147, %c128_148] : memref<8x512xf32, #tpu.memory_space<vmem>>, vector<8x256xf32>
    %c0_149 = arith.constant 0 : index
    %c129_150 = arith.constant 129 : index
    %217 = vector.load %arg4[%c0_149, %c129_150] : memref<8x512xf32, #tpu.memory_space<vmem>>, vector<8x256xf32>
    %cst_151 = arith.constant 0.000000e+00 : f32
    %218 = vector.shape_cast %24 : vector<1x256xi1> to vector<1x256xi1>
    %219 = vector.broadcast %218 : vector<1x256xi1> to vector<8x256xi1>
    %220 = vector.broadcast %cst_151 : f32 to vector<8x256xf32>
    %221 = arith.select %219, %217, %220 : vector<8x256xi1>, vector<8x256xf32>
    %c0_152 = arith.constant 0 : index
    %c143_153 = arith.constant 143 : index
    %222 = vector.load %arg4[%c0_152, %c143_153] : memref<8x512xf32, #tpu.memory_space<vmem>>, vector<8x256xf32>
    %cst_154 = arith.constant 0.000000e+00 : f32
    %223 = vector.shape_cast %22 : vector<1x256xi1> to vector<1x256xi1>
    %224 = vector.broadcast %223 : vector<1x256xi1> to vector<8x256xi1>
    %225 = vector.broadcast %cst_154 : f32 to vector<8x256xf32>
    %226 = arith.select %224, %222, %225 : vector<8x256xi1>, vector<8x256xf32>
    %c0_155 = arith.constant 0 : index
    %c144_156 = arith.constant 144 : index
    %227 = vector.load %arg4[%c0_155, %c144_156] : memref<8x512xf32, #tpu.memory_space<vmem>>, vector<8x256xf32>
    %c0_157 = arith.constant 0 : index
    %c145_158 = arith.constant 145 : index
    %228 = vector.load %arg4[%c0_157, %c145_158] : memref<8x512xf32, #tpu.memory_space<vmem>>, vector<8x256xf32>
    %cst_159 = arith.constant 0.000000e+00 : f32
    %229 = vector.shape_cast %24 : vector<1x256xi1> to vector<1x256xi1>
    %230 = vector.broadcast %229 : vector<1x256xi1> to vector<8x256xi1>
    %231 = vector.broadcast %cst_159 : f32 to vector<8x256xf32>
    %232 = arith.select %230, %228, %231 : vector<8x256xi1>, vector<8x256xf32>
    %c72 = arith.constant 72 : index
    %c0_160 = arith.constant 0 : index
    %233 = vector.load %arg2[%c72, %c0_160] : memref<128x128xf32, #tpu.memory_space<vmem>>, vector<8x72xf32>
    %c72_161 = arith.constant 72 : index
    %c72_162 = arith.constant 72 : index
    %234 = vector.load %arg2[%c72_161, %c72_162] : memref<128x128xf32, #tpu.memory_space<vmem>>, vector<8x1xf32>
    %c0_163 = arith.constant 0 : index
    %c0_164 = arith.constant 0 : index
    %235 = vector.load %arg5[%c0_163, %c0_164] : memref<72x256xf32, #tpu.memory_space<vmem>>, vector<8x256xf32>
    tpu.vector_store %arg5[%c0_163, %c0_164], %204 {strides = array<i32>} : memref<72x256xf32, #tpu.memory_space<vmem>>, vector<8x256xf32>,
    %c8_165 = arith.constant 8 : index
    %c0_166 = arith.constant 0 : index
    %236 = vector.load %arg5[%c8_165, %c0_166] : memref<72x256xf32, #tpu.memory_space<vmem>>, vector<8x256xf32>
    tpu.vector_store %arg5[%c8_165, %c0_166], %205 {strides = array<i32>} : memref<72x256xf32, #tpu.memory_space<vmem>>, vector<8x256xf32>,
    %c16_167 = arith.constant 16 : index
    %c0_168 = arith.constant 0 : index
    %237 = vector.load %arg5[%c16_167, %c0_168] : memref<72x256xf32, #tpu.memory_space<vmem>>, vector<8x256xf32>
    tpu.vector_store %arg5[%c16_167, %c0_168], %210 {strides = array<i32>} : memref<72x256xf32, #tpu.memory_space<vmem>>, vector<8x256xf32>,
    %c24_169 = arith.constant 24 : index
    %c0_170 = arith.constant 0 : index
    %238 = vector.load %arg5[%c24_169, %c0_170] : memref<72x256xf32, #tpu.memory_space<vmem>>, vector<8x256xf32>
    tpu.vector_store %arg5[%c24_169, %c0_170], %215 {strides = array<i32>} : memref<72x256xf32, #tpu.memory_space<vmem>>, vector<8x256xf32>,
    %c32_171 = arith.constant 32 : index
    %c0_172 = arith.constant 0 : index
    %239 = vector.load %arg5[%c32_171, %c0_172] : memref<72x256xf32, #tpu.memory_space<vmem>>, vector<8x256xf32>
    tpu.vector_store %arg5[%c32_171, %c0_172], %216 {strides = array<i32>} : memref<72x256xf32, #tpu.memory_space<vmem>>, vector<8x256xf32>,
    %c40_173 = arith.constant 40 : index
    %c0_174 = arith.constant 0 : index
    %240 = vector.load %arg5[%c40_173, %c0_174] : memref<72x256xf32, #tpu.memory_space<vmem>>, vector<8x256xf32>
    tpu.vector_store %arg5[%c40_173, %c0_174], %221 {strides = array<i32>} : memref<72x256xf32, #tpu.memory_space<vmem>>, vector<8x256xf32>,
    %c48_175 = arith.constant 48 : index
    %c0_176 = arith.constant 0 : index
    %241 = vector.load %arg5[%c48_175, %c0_176] : memref<72x256xf32, #tpu.memory_space<vmem>>, vector<8x256xf32>
    tpu.vector_store %arg5[%c48_175, %c0_176], %226 {strides = array<i32>} : memref<72x256xf32, #tpu.memory_space<vmem>>, vector<8x256xf32>,
    %c56_177 = arith.constant 56 : index
    %c0_178 = arith.constant 0 : index
    %242 = vector.load %arg5[%c56_177, %c0_178] : memref<72x256xf32, #tpu.memory_space<vmem>>, vector<8x256xf32>
    tpu.vector_store %arg5[%c56_177, %c0_178], %227 {strides = array<i32>} : memref<72x256xf32, #tpu.memory_space<vmem>>, vector<8x256xf32>,
    %c64_179 = arith.constant 64 : index
    %c0_180 = arith.constant 0 : index
    %243 = vector.load %arg5[%c64_179, %c0_180] : memref<72x256xf32, #tpu.memory_space<vmem>>, vector<8x256xf32>
    tpu.vector_store %arg5[%c64_179, %c0_180], %232 {strides = array<i32>} : memref<72x256xf32, #tpu.memory_space<vmem>>, vector<8x256xf32>,
    %c0_181 = arith.constant 0 : index
    %c0_182 = arith.constant 0 : index
    %244 = vector.load %arg5[%c0_181, %c0_182] : memref<72x256xf32, #tpu.memory_space<vmem>>, vector<72x256xf32>
    %cst_183 = arith.constant dense<0.000000e+00> : vector<8x256xf32>
    %245 = tpu.matmul %233, %244, %cst_183 {dimension_numbers = #tpu.dot_dimension_numbers<[1], [0], [0], [1], [0, 0, 1, 1], [], []>} : vector<8x72xf32>, vector<72x256xf32>, vector<8x256xf32> -> vector<8x256xf32>
    %246 = vector.broadcast %234 : vector<8x1xf32> to vector<8x256xf32>
    %247 = arith.addf %245, %246 : vector<8x256xf32>
    %cst_184 = arith.constant 0.000000e+00 : f32
    %248 = vector.broadcast %cst_184 : f32 to vector<8x256xf32>
    %249 = arith.subf %248, %247 : vector<8x256xf32>
    %250 = math.exp %249 : vector<8x256xf32>
    %cst_185 = arith.constant 1.000000e+00 : f32
    %251 = vector.broadcast %cst_185 : f32 to vector<8x256xf32>
    %252 = arith.addf %251, %250 : vector<8x256xf32>
    %cst_186 = arith.constant 1.000000e+00 : f32
    %253 = vector.broadcast %cst_186 : f32 to vector<8x256xf32>
    %254 = arith.divf %253, %252 : vector<8x256xf32>
    %255 = arith.mulf %247, %254 : vector<8x256xf32>
    %c80 = arith.constant 80 : index
    %c0_187 = arith.constant 0 : index
    %256 = vector.load %arg2[%c80, %c0_187] : memref<128x128xf32, #tpu.memory_space<vmem>>, vector<4x8xf32>
    %c80_188 = arith.constant 80 : index
    %c8_189 = arith.constant 8 : index
    %257 = vector.load %arg2[%c80_188, %c8_189] : memref<128x128xf32, #tpu.memory_space<vmem>>, vector<4x1xf32>
    %cst_190 = arith.constant dense<0.000000e+00> : vector<4x256xf32>
    %258 = tpu.matmul %256, %255, %cst_190 {dimension_numbers = #tpu.dot_dimension_numbers<[1], [0], [0], [1], [0, 0, 1, 1], [], []>} : vector<4x8xf32>, vector<8x256xf32>, vector<4x256xf32> -> vector<4x256xf32>
    %259 = vector.broadcast %257 : vector<4x1xf32> to vector<4x256xf32>
    %260 = arith.addf %258, %259 : vector<4x256xf32>
    %cst_191 = arith.constant 0.000000e+00 : f32
    %261 = vector.broadcast %cst_191 : f32 to vector<4x256xf32>
    %262 = arith.subf %261, %260 : vector<4x256xf32>
    %263 = math.exp %262 : vector<4x256xf32>
    %cst_192 = arith.constant 1.000000e+00 : f32
    %264 = vector.broadcast %cst_192 : f32 to vector<4x256xf32>
    %265 = arith.addf %264, %263 : vector<4x256xf32>
    %cst_193 = arith.constant 1.000000e+00 : f32
    %266 = vector.broadcast %cst_193 : f32 to vector<4x256xf32>
    %267 = arith.divf %266, %265 : vector<4x256xf32>
    %268 = arith.mulf %260, %267 : vector<4x256xf32>
    %c88 = arith.constant 88 : index
    %c0_194 = arith.constant 0 : index
    %269 = vector.load %arg2[%c88, %c0_194] : memref<128x128xf32, #tpu.memory_space<vmem>>, vector<4x8xf32>
    %c88_195 = arith.constant 88 : index
    %c8_196 = arith.constant 8 : index
    %270 = vector.load %arg2[%c88_195, %c8_196] : memref<128x128xf32, #tpu.memory_space<vmem>>, vector<4x1xf32>
    %cst_197 = arith.constant dense<0.000000e+00> : vector<4x256xf32>
    %271 = tpu.matmul %269, %255, %cst_197 {dimension_numbers = #tpu.dot_dimension_numbers<[1], [0], [0], [1], [0, 0, 1, 1], [], []>} : vector<4x8xf32>, vector<8x256xf32>, vector<4x256xf32> -> vector<4x256xf32>
    %272 = vector.broadcast %270 : vector<4x1xf32> to vector<4x256xf32>
    %273 = arith.addf %271, %272 : vector<4x256xf32>
    %cst_198 = arith.constant 0.000000e+00 : f32
    %274 = vector.broadcast %cst_198 : f32 to vector<4x256xf32>
    %275 = arith.subf %274, %273 : vector<4x256xf32>
    %276 = math.exp %275 : vector<4x256xf32>
    %cst_199 = arith.constant 1.000000e+00 : f32
    %277 = vector.broadcast %cst_199 : f32 to vector<4x256xf32>
    %278 = arith.addf %277, %276 : vector<4x256xf32>
    %cst_200 = arith.constant 1.000000e+00 : f32
    %279 = vector.broadcast %cst_200 : f32 to vector<4x256xf32>
    %280 = arith.divf %279, %278 : vector<4x256xf32>
    %281 = arith.mulf %273, %280 : vector<4x256xf32>
    %c0_201 = arith.constant 0 : index
    %c128_202 = arith.constant 128 : index
    %282 = vector.load %arg4[%c0_201, %c128_202] : memref<8x512xf32, #tpu.memory_space<vmem>>, vector<4x256xf32>
    tpu.vector_store %arg4[%c0_201, %c128_202], %268 {strides = array<i32>} : memref<8x512xf32, #tpu.memory_space<vmem>>, vector<4x256xf32>,
    %c0_203 = arith.constant 0 : index
    %c111_204 = arith.constant 111 : index
    %283 = vector.load %arg4[%c0_203, %c111_204] : memref<8x512xf32, #tpu.memory_space<vmem>>, vector<4x256xf32>
    %cst_205 = arith.constant 0.000000e+00 : f32
    %284 = vector.shape_cast %22 : vector<1x256xi1> to vector<1x256xi1>
    %285 = vector.broadcast %284 : vector<1x256xi1> to vector<4x256xi1>
    %286 = vector.broadcast %cst_205 : f32 to vector<4x256xf32>
    %287 = arith.select %285, %283, %286 : vector<4x256xi1>, vector<4x256xf32>
    %c0_206 = arith.constant 0 : index
    %c112_207 = arith.constant 112 : index
    %288 = vector.load %arg4[%c0_206, %c112_207] : memref<8x512xf32, #tpu.memory_space<vmem>>, vector<4x256xf32>
    %c0_208 = arith.constant 0 : index
    %c113_209 = arith.constant 113 : index
    %289 = vector.load %arg4[%c0_208, %c113_209] : memref<8x512xf32, #tpu.memory_space<vmem>>, vector<4x256xf32>
    %cst_210 = arith.constant 0.000000e+00 : f32
    %290 = vector.shape_cast %24 : vector<1x256xi1> to vector<1x256xi1>
    %291 = vector.broadcast %290 : vector<1x256xi1> to vector<4x256xi1>
    %292 = vector.broadcast %cst_210 : f32 to vector<4x256xf32>
    %293 = arith.select %291, %289, %292 : vector<4x256xi1>, vector<4x256xf32>
    %c0_211 = arith.constant 0 : index
    %c127_212 = arith.constant 127 : index
    %294 = vector.load %arg4[%c0_211, %c127_212] : memref<8x512xf32, #tpu.memory_space<vmem>>, vector<4x256xf32>
    %cst_213 = arith.constant 0.000000e+00 : f32
    %295 = vector.shape_cast %22 : vector<1x256xi1> to vector<1x256xi1>
    %296 = vector.broadcast %295 : vector<1x256xi1> to vector<4x256xi1>
    %297 = vector.broadcast %cst_213 : f32 to vector<4x256xf32>
    %298 = arith.select %296, %294, %297 : vector<4x256xi1>, vector<4x256xf32>
    %c0_214 = arith.constant 0 : index
    %c128_215 = arith.constant 128 : index
    %299 = vector.load %arg4[%c0_214, %c128_215] : memref<8x512xf32, #tpu.memory_space<vmem>>, vector<4x256xf32>
    %c0_216 = arith.constant 0 : index
    %c129_217 = arith.constant 129 : index
    %300 = vector.load %arg4[%c0_216, %c129_217] : memref<8x512xf32, #tpu.memory_space<vmem>>, vector<4x256xf32>
    %cst_218 = arith.constant 0.000000e+00 : f32
    %301 = vector.shape_cast %24 : vector<1x256xi1> to vector<1x256xi1>
    %302 = vector.broadcast %301 : vector<1x256xi1> to vector<4x256xi1>
    %303 = vector.broadcast %cst_218 : f32 to vector<4x256xf32>
    %304 = arith.select %302, %300, %303 : vector<4x256xi1>, vector<4x256xf32>
    %c0_219 = arith.constant 0 : index
    %c143_220 = arith.constant 143 : index
    %305 = vector.load %arg4[%c0_219, %c143_220] : memref<8x512xf32, #tpu.memory_space<vmem>>, vector<4x256xf32>
    %cst_221 = arith.constant 0.000000e+00 : f32
    %306 = vector.shape_cast %22 : vector<1x256xi1> to vector<1x256xi1>
    %307 = vector.broadcast %306 : vector<1x256xi1> to vector<4x256xi1>
    %308 = vector.broadcast %cst_221 : f32 to vector<4x256xf32>
    %309 = arith.select %307, %305, %308 : vector<4x256xi1>, vector<4x256xf32>
    %c0_222 = arith.constant 0 : index
    %c144_223 = arith.constant 144 : index
    %310 = vector.load %arg4[%c0_222, %c144_223] : memref<8x512xf32, #tpu.memory_space<vmem>>, vector<4x256xf32>
    %c0_224 = arith.constant 0 : index
    %c145_225 = arith.constant 145 : index
    %311 = vector.load %arg4[%c0_224, %c145_225] : memref<8x512xf32, #tpu.memory_space<vmem>>, vector<4x256xf32>
    %cst_226 = arith.constant 0.000000e+00 : f32
    %312 = vector.shape_cast %24 : vector<1x256xi1> to vector<1x256xi1>
    %313 = vector.broadcast %312 : vector<1x256xi1> to vector<4x256xi1>
    %314 = vector.broadcast %cst_226 : f32 to vector<4x256xf32>
    %315 = arith.select %313, %311, %314 : vector<4x256xi1>, vector<4x256xf32>
    %c96 = arith.constant 96 : index
    %c0_227 = arith.constant 0 : index
    %316 = vector.load %arg2[%c96, %c0_227] : memref<128x128xf32, #tpu.memory_space<vmem>>, vector<4x36xf32>
    %c96_228 = arith.constant 96 : index
    %c36_229 = arith.constant 36 : index
    %317 = vector.load %arg2[%c96_228, %c36_229] : memref<128x128xf32, #tpu.memory_space<vmem>>, vector<4x1xf32>
    %c0_230 = arith.constant 0 : index
    %c0_231 = arith.constant 0 : index
    %318 = vector.load %arg5[%c0_230, %c0_231] : memref<72x256xf32, #tpu.memory_space<vmem>>, vector<4x256xf32>
    tpu.vector_store %arg5[%c0_230, %c0_231], %287 {strides = array<i32>} : memref<72x256xf32, #tpu.memory_space<vmem>>, vector<4x256xf32>,
    %c4_232 = arith.constant 4 : index
    %c0_233 = arith.constant 0 : index
    %319 = vector.load %arg5[%c4_232, %c0_233] : memref<72x256xf32, #tpu.memory_space<vmem>>, vector<4x256xf32>
    tpu.vector_store %arg5[%c4_232, %c0_233], %288 {strides = array<i32>} : memref<72x256xf32, #tpu.memory_space<vmem>>, vector<4x256xf32>,
    %c8_234 = arith.constant 8 : index
    %c0_235 = arith.constant 0 : index
    %320 = vector.load %arg5[%c8_234, %c0_235] : memref<72x256xf32, #tpu.memory_space<vmem>>, vector<4x256xf32>
    tpu.vector_store %arg5[%c8_234, %c0_235], %293 {strides = array<i32>} : memref<72x256xf32, #tpu.memory_space<vmem>>, vector<4x256xf32>,
    %c12_236 = arith.constant 12 : index
    %c0_237 = arith.constant 0 : index
    %321 = vector.load %arg5[%c12_236, %c0_237] : memref<72x256xf32, #tpu.memory_space<vmem>>, vector<4x256xf32>
    tpu.vector_store %arg5[%c12_236, %c0_237], %298 {strides = array<i32>} : memref<72x256xf32, #tpu.memory_space<vmem>>, vector<4x256xf32>,
    %c16_238 = arith.constant 16 : index
    %c0_239 = arith.constant 0 : index
    %322 = vector.load %arg5[%c16_238, %c0_239] : memref<72x256xf32, #tpu.memory_space<vmem>>, vector<4x256xf32>
    tpu.vector_store %arg5[%c16_238, %c0_239], %299 {strides = array<i32>} : memref<72x256xf32, #tpu.memory_space<vmem>>, vector<4x256xf32>,
    %c20_240 = arith.constant 20 : index
    %c0_241 = arith.constant 0 : index
    %323 = vector.load %arg5[%c20_240, %c0_241] : memref<72x256xf32, #tpu.memory_space<vmem>>, vector<4x256xf32>
    tpu.vector_store %arg5[%c20_240, %c0_241], %304 {strides = array<i32>} : memref<72x256xf32, #tpu.memory_space<vmem>>, vector<4x256xf32>,
    %c24_242 = arith.constant 24 : index
    %c0_243 = arith.constant 0 : index
    %324 = vector.load %arg5[%c24_242, %c0_243] : memref<72x256xf32, #tpu.memory_space<vmem>>, vector<4x256xf32>
    tpu.vector_store %arg5[%c24_242, %c0_243], %309 {strides = array<i32>} : memref<72x256xf32, #tpu.memory_space<vmem>>, vector<4x256xf32>,
    %c28_244 = arith.constant 28 : index
    %c0_245 = arith.constant 0 : index
    %325 = vector.load %arg5[%c28_244, %c0_245] : memref<72x256xf32, #tpu.memory_space<vmem>>, vector<4x256xf32>
    tpu.vector_store %arg5[%c28_244, %c0_245], %310 {strides = array<i32>} : memref<72x256xf32, #tpu.memory_space<vmem>>, vector<4x256xf32>,
    %c32_246 = arith.constant 32 : index
    %c0_247 = arith.constant 0 : index
    %326 = vector.load %arg5[%c32_246, %c0_247] : memref<72x256xf32, #tpu.memory_space<vmem>>, vector<4x256xf32>
    tpu.vector_store %arg5[%c32_246, %c0_247], %315 {strides = array<i32>} : memref<72x256xf32, #tpu.memory_space<vmem>>, vector<4x256xf32>,
    %c0_248 = arith.constant 0 : index
    %c0_249 = arith.constant 0 : index
    %327 = vector.load %arg5[%c0_248, %c0_249] : memref<72x256xf32, #tpu.memory_space<vmem>>, vector<36x256xf32>
    %cst_250 = arith.constant dense<0.000000e+00> : vector<4x256xf32>
    %328 = tpu.matmul %316, %327, %cst_250 {dimension_numbers = #tpu.dot_dimension_numbers<[1], [0], [0], [1], [0, 0, 1, 1], [], []>} : vector<4x36xf32>, vector<36x256xf32>, vector<4x256xf32> -> vector<4x256xf32>
    %329 = vector.broadcast %317 : vector<4x1xf32> to vector<4x256xf32>
    %330 = arith.addf %328, %329 : vector<4x256xf32>
    %cst_251 = arith.constant 0.000000e+00 : f32
    %331 = vector.broadcast %cst_251 : f32 to vector<4x256xf32>
    %332 = arith.subf %331, %330 : vector<4x256xf32>
    %333 = math.exp %332 : vector<4x256xf32>
    %cst_252 = arith.constant 1.000000e+00 : f32
    %334 = vector.broadcast %cst_252 : f32 to vector<4x256xf32>
    %335 = arith.addf %334, %333 : vector<4x256xf32>
    %cst_253 = arith.constant 1.000000e+00 : f32
    %336 = vector.broadcast %cst_253 : f32 to vector<4x256xf32>
    %337 = arith.divf %336, %335 : vector<4x256xf32>
    %338 = arith.mulf %330, %337 : vector<4x256xf32>
    %c0_254 = arith.constant 0 : index
    %c128_255 = arith.constant 128 : index
    %339 = vector.load %arg4[%c0_254, %c128_255] : memref<8x512xf32, #tpu.memory_space<vmem>>, vector<4x256xf32>
    tpu.vector_store %arg4[%c0_254, %c128_255], %338 {strides = array<i32>} : memref<8x512xf32, #tpu.memory_space<vmem>>, vector<4x256xf32>,
    %c0_256 = arith.constant 0 : index
    %c111_257 = arith.constant 111 : index
    %340 = vector.load %arg4[%c0_256, %c111_257] : memref<8x512xf32, #tpu.memory_space<vmem>>, vector<4x256xf32>
    %cst_258 = arith.constant 0.000000e+00 : f32
    %341 = vector.shape_cast %22 : vector<1x256xi1> to vector<1x256xi1>
    %342 = vector.broadcast %341 : vector<1x256xi1> to vector<4x256xi1>
    %343 = vector.broadcast %cst_258 : f32 to vector<4x256xf32>
    %344 = arith.select %342, %340, %343 : vector<4x256xi1>, vector<4x256xf32>
    %c0_259 = arith.constant 0 : index
    %c112_260 = arith.constant 112 : index
    %345 = vector.load %arg4[%c0_259, %c112_260] : memref<8x512xf32, #tpu.memory_space<vmem>>, vector<4x256xf32>
    %c0_261 = arith.constant 0 : index
    %c113_262 = arith.constant 113 : index
    %346 = vector.load %arg4[%c0_261, %c113_262] : memref<8x512xf32, #tpu.memory_space<vmem>>, vector<4x256xf32>
    %cst_263 = arith.constant 0.000000e+00 : f32
    %347 = vector.shape_cast %24 : vector<1x256xi1> to vector<1x256xi1>
    %348 = vector.broadcast %347 : vector<1x256xi1> to vector<4x256xi1>
    %349 = vector.broadcast %cst_263 : f32 to vector<4x256xf32>
    %350 = arith.select %348, %346, %349 : vector<4x256xi1>, vector<4x256xf32>
    %c0_264 = arith.constant 0 : index
    %c127_265 = arith.constant 127 : index
    %351 = vector.load %arg4[%c0_264, %c127_265] : memref<8x512xf32, #tpu.memory_space<vmem>>, vector<4x256xf32>
    %cst_266 = arith.constant 0.000000e+00 : f32
    %352 = vector.shape_cast %22 : vector<1x256xi1> to vector<1x256xi1>
    %353 = vector.broadcast %352 : vector<1x256xi1> to vector<4x256xi1>
    %354 = vector.broadcast %cst_266 : f32 to vector<4x256xf32>
    %355 = arith.select %353, %351, %354 : vector<4x256xi1>, vector<4x256xf32>
    %c0_267 = arith.constant 0 : index
    %c128_268 = arith.constant 128 : index
    %356 = vector.load %arg4[%c0_267, %c128_268] : memref<8x512xf32, #tpu.memory_space<vmem>>, vector<4x256xf32>
    %c0_269 = arith.constant 0 : index
    %c129_270 = arith.constant 129 : index
    %357 = vector.load %arg4[%c0_269, %c129_270] : memref<8x512xf32, #tpu.memory_space<vmem>>, vector<4x256xf32>
    %cst_271 = arith.constant 0.000000e+00 : f32
    %358 = vector.shape_cast %24 : vector<1x256xi1> to vector<1x256xi1>
    %359 = vector.broadcast %358 : vector<1x256xi1> to vector<4x256xi1>
    %360 = vector.broadcast %cst_271 : f32 to vector<4x256xf32>
    %361 = arith.select %359, %357, %360 : vector<4x256xi1>, vector<4x256xf32>
    %c0_272 = arith.constant 0 : index
    %c143_273 = arith.constant 143 : index
    %362 = vector.load %arg4[%c0_272, %c143_273] : memref<8x512xf32, #tpu.memory_space<vmem>>, vector<4x256xf32>
    %cst_274 = arith.constant 0.000000e+00 : f32
    %363 = vector.shape_cast %22 : vector<1x256xi1> to vector<1x256xi1>
    %364 = vector.broadcast %363 : vector<1x256xi1> to vector<4x256xi1>
    %365 = vector.broadcast %cst_274 : f32 to vector<4x256xf32>
    %366 = arith.select %364, %362, %365 : vector<4x256xi1>, vector<4x256xf32>
    %c0_275 = arith.constant 0 : index
    %c144_276 = arith.constant 144 : index
    %367 = vector.load %arg4[%c0_275, %c144_276] : memref<8x512xf32, #tpu.memory_space<vmem>>, vector<4x256xf32>
    %c0_277 = arith.constant 0 : index
    %c145_278 = arith.constant 145 : index
    %368 = vector.load %arg4[%c0_277, %c145_278] : memref<8x512xf32, #tpu.memory_space<vmem>>, vector<4x256xf32>
    %cst_279 = arith.constant 0.000000e+00 : f32
    %369 = vector.shape_cast %24 : vector<1x256xi1> to vector<1x256xi1>
    %370 = vector.broadcast %369 : vector<1x256xi1> to vector<4x256xi1>
    %371 = vector.broadcast %cst_279 : f32 to vector<4x256xf32>
    %372 = arith.select %370, %368, %371 : vector<4x256xi1>, vector<4x256xf32>
    %c104 = arith.constant 104 : index
    %c0_280 = arith.constant 0 : index
    %373 = vector.load %arg2[%c104, %c0_280] : memref<128x128xf32, #tpu.memory_space<vmem>>, vector<4x36xf32>
    %c104_281 = arith.constant 104 : index
    %c36_282 = arith.constant 36 : index
    %374 = vector.load %arg2[%c104_281, %c36_282] : memref<128x128xf32, #tpu.memory_space<vmem>>, vector<4x1xf32>
    %c0_283 = arith.constant 0 : index
    %c0_284 = arith.constant 0 : index
    %375 = vector.load %arg5[%c0_283, %c0_284] : memref<72x256xf32, #tpu.memory_space<vmem>>, vector<4x256xf32>
    tpu.vector_store %arg5[%c0_283, %c0_284], %344 {strides = array<i32>} : memref<72x256xf32, #tpu.memory_space<vmem>>, vector<4x256xf32>,
    %c4_285 = arith.constant 4 : index
    %c0_286 = arith.constant 0 : index
    %376 = vector.load %arg5[%c4_285, %c0_286] : memref<72x256xf32, #tpu.memory_space<vmem>>, vector<4x256xf32>
    tpu.vector_store %arg5[%c4_285, %c0_286], %345 {strides = array<i32>} : memref<72x256xf32, #tpu.memory_space<vmem>>, vector<4x256xf32>,
    %c8_287 = arith.constant 8 : index
    %c0_288 = arith.constant 0 : index
    %377 = vector.load %arg5[%c8_287, %c0_288] : memref<72x256xf32, #tpu.memory_space<vmem>>, vector<4x256xf32>
    tpu.vector_store %arg5[%c8_287, %c0_288], %350 {strides = array<i32>} : memref<72x256xf32, #tpu.memory_space<vmem>>, vector<4x256xf32>,
    %c12_289 = arith.constant 12 : index
    %c0_290 = arith.constant 0 : index
    %378 = vector.load %arg5[%c12_289, %c0_290] : memref<72x256xf32, #tpu.memory_space<vmem>>, vector<4x256xf32>
    tpu.vector_store %arg5[%c12_289, %c0_290], %355 {strides = array<i32>} : memref<72x256xf32, #tpu.memory_space<vmem>>, vector<4x256xf32>,
    %c16_291 = arith.constant 16 : index
    %c0_292 = arith.constant 0 : index
    %379 = vector.load %arg5[%c16_291, %c0_292] : memref<72x256xf32, #tpu.memory_space<vmem>>, vector<4x256xf32>
    tpu.vector_store %arg5[%c16_291, %c0_292], %356 {strides = array<i32>} : memref<72x256xf32, #tpu.memory_space<vmem>>, vector<4x256xf32>,
    %c20_293 = arith.constant 20 : index
    %c0_294 = arith.constant 0 : index
    %380 = vector.load %arg5[%c20_293, %c0_294] : memref<72x256xf32, #tpu.memory_space<vmem>>, vector<4x256xf32>
    tpu.vector_store %arg5[%c20_293, %c0_294], %361 {strides = array<i32>} : memref<72x256xf32, #tpu.memory_space<vmem>>, vector<4x256xf32>,
    %c24_295 = arith.constant 24 : index
    %c0_296 = arith.constant 0 : index
    %381 = vector.load %arg5[%c24_295, %c0_296] : memref<72x256xf32, #tpu.memory_space<vmem>>, vector<4x256xf32>
    tpu.vector_store %arg5[%c24_295, %c0_296], %366 {strides = array<i32>} : memref<72x256xf32, #tpu.memory_space<vmem>>, vector<4x256xf32>,
    %c28_297 = arith.constant 28 : index
    %c0_298 = arith.constant 0 : index
    %382 = vector.load %arg5[%c28_297, %c0_298] : memref<72x256xf32, #tpu.memory_space<vmem>>, vector<4x256xf32>
    tpu.vector_store %arg5[%c28_297, %c0_298], %367 {strides = array<i32>} : memref<72x256xf32, #tpu.memory_space<vmem>>, vector<4x256xf32>,
    %c32_299 = arith.constant 32 : index
    %c0_300 = arith.constant 0 : index
    %383 = vector.load %arg5[%c32_299, %c0_300] : memref<72x256xf32, #tpu.memory_space<vmem>>, vector<4x256xf32>
    tpu.vector_store %arg5[%c32_299, %c0_300], %372 {strides = array<i32>} : memref<72x256xf32, #tpu.memory_space<vmem>>, vector<4x256xf32>,
    %c0_301 = arith.constant 0 : index
    %c0_302 = arith.constant 0 : index
    %384 = vector.load %arg5[%c0_301, %c0_302] : memref<72x256xf32, #tpu.memory_space<vmem>>, vector<36x256xf32>
    %cst_303 = arith.constant dense<0.000000e+00> : vector<4x256xf32>
    %385 = tpu.matmul %373, %384, %cst_303 {dimension_numbers = #tpu.dot_dimension_numbers<[1], [0], [0], [1], [0, 0, 1, 1], [], []>} : vector<4x36xf32>, vector<36x256xf32>, vector<4x256xf32> -> vector<4x256xf32>
    %386 = vector.broadcast %374 : vector<4x1xf32> to vector<4x256xf32>
    %387 = arith.addf %385, %386 : vector<4x256xf32>
    %cst_304 = arith.constant 0.000000e+00 : f32
    %388 = vector.broadcast %cst_304 : f32 to vector<4x256xf32>
    %389 = arith.subf %388, %387 : vector<4x256xf32>
    %390 = math.exp %389 : vector<4x256xf32>
    %cst_305 = arith.constant 1.000000e+00 : f32
    %391 = vector.broadcast %cst_305 : f32 to vector<4x256xf32>
    %392 = arith.addf %391, %390 : vector<4x256xf32>
    %cst_306 = arith.constant 1.000000e+00 : f32
    %393 = vector.broadcast %cst_306 : f32 to vector<4x256xf32>
    %394 = arith.divf %393, %392 : vector<4x256xf32>
    %395 = arith.mulf %387, %394 : vector<4x256xf32>
    %396 = arith.addf %268, %395 : vector<4x256xf32>
    %c112_307 = arith.constant 112 : index
    %c0_308 = arith.constant 0 : index
    %397 = vector.load %arg2[%c112_307, %c0_308] : memref<128x128xf32, #tpu.memory_space<vmem>>, vector<8x8xf32>
    %c112_309 = arith.constant 112 : index
    %c8_310 = arith.constant 8 : index
    %398 = vector.load %arg2[%c112_309, %c8_310] : memref<128x128xf32, #tpu.memory_space<vmem>>, vector<8x1xf32>
    %c0_311 = arith.constant 0 : index
    %c0_312 = arith.constant 0 : index
    %399 = vector.load %arg5[%c0_311, %c0_312] : memref<72x256xf32, #tpu.memory_space<vmem>>, vector<4x256xf32>
    tpu.vector_store %arg5[%c0_311, %c0_312], %396 {strides = array<i32>} : memref<72x256xf32, #tpu.memory_space<vmem>>, vector<4x256xf32>,
    %c4_313 = arith.constant 4 : index
    %c0_314 = arith.constant 0 : index
    %400 = vector.load %arg5[%c4_313, %c0_314] : memref<72x256xf32, #tpu.memory_space<vmem>>, vector<4x256xf32>
    tpu.vector_store %arg5[%c4_313, %c0_314], %281 {strides = array<i32>} : memref<72x256xf32, #tpu.memory_space<vmem>>, vector<4x256xf32>,
    %c0_315 = arith.constant 0 : index
    %c0_316 = arith.constant 0 : index
    %401 = vector.load %arg5[%c0_315, %c0_316] : memref<72x256xf32, #tpu.memory_space<vmem>>, vector<8x256xf32>
    %cst_317 = arith.constant dense<0.000000e+00> : vector<8x256xf32>
    %402 = tpu.matmul %397, %401, %cst_317 {dimension_numbers = #tpu.dot_dimension_numbers<[1], [0], [0], [1], [0, 0, 1, 1], [], []>} : vector<8x8xf32>, vector<8x256xf32>, vector<8x256xf32> -> vector<8x256xf32>
    %403 = vector.broadcast %398 : vector<8x1xf32> to vector<8x256xf32>
    %404 = arith.addf %402, %403 : vector<8x256xf32>
    %cst_318 = arith.constant 0.000000e+00 : f32
    %405 = vector.broadcast %cst_318 : f32 to vector<8x256xf32>
    %406 = arith.subf %405, %404 : vector<8x256xf32>
    %407 = math.exp %406 : vector<8x256xf32>
    %cst_319 = arith.constant 1.000000e+00 : f32
    %408 = vector.broadcast %cst_319 : f32 to vector<8x256xf32>
    %409 = arith.addf %408, %407 : vector<8x256xf32>
    %cst_320 = arith.constant 1.000000e+00 : f32
    %410 = vector.broadcast %cst_320 : f32 to vector<8x256xf32>
    %411 = arith.divf %410, %409 : vector<8x256xf32>
    %412 = arith.mulf %404, %411 : vector<8x256xf32>
    %c0_321 = arith.constant 0 : index
    %c128_322 = arith.constant 128 : index
    %413 = vector.load %arg4[%c0_321, %c128_322] : memref<8x512xf32, #tpu.memory_space<vmem>>, vector<8x256xf32>
    tpu.vector_store %arg4[%c0_321, %c128_322], %412 {strides = array<i32>} : memref<8x512xf32, #tpu.memory_space<vmem>>, vector<8x256xf32>,
    %c0_323 = arith.constant 0 : index
    %c111_324 = arith.constant 111 : index
    %414 = vector.load %arg4[%c0_323, %c111_324] : memref<8x512xf32, #tpu.memory_space<vmem>>, vector<8x256xf32>
    %cst_325 = arith.constant 0.000000e+00 : f32
    %415 = vector.shape_cast %22 : vector<1x256xi1> to vector<1x256xi1>
    %416 = vector.broadcast %415 : vector<1x256xi1> to vector<8x256xi1>
    %417 = vector.broadcast %cst_325 : f32 to vector<8x256xf32>
    %418 = arith.select %416, %414, %417 : vector<8x256xi1>, vector<8x256xf32>
    %c0_326 = arith.constant 0 : index
    %c112_327 = arith.constant 112 : index
    %419 = vector.load %arg4[%c0_326, %c112_327] : memref<8x512xf32, #tpu.memory_space<vmem>>, vector<8x256xf32>
    %c0_328 = arith.constant 0 : index
    %c113_329 = arith.constant 113 : index
    %420 = vector.load %arg4[%c0_328, %c113_329] : memref<8x512xf32, #tpu.memory_space<vmem>>, vector<8x256xf32>
    %cst_330 = arith.constant 0.000000e+00 : f32
    %421 = vector.shape_cast %24 : vector<1x256xi1> to vector<1x256xi1>
    %422 = vector.broadcast %421 : vector<1x256xi1> to vector<8x256xi1>
    %423 = vector.broadcast %cst_330 : f32 to vector<8x256xf32>
    %424 = arith.select %422, %420, %423 : vector<8x256xi1>, vector<8x256xf32>
    %c0_331 = arith.constant 0 : index
    %c127_332 = arith.constant 127 : index
    %425 = vector.load %arg4[%c0_331, %c127_332] : memref<8x512xf32, #tpu.memory_space<vmem>>, vector<8x256xf32>
    %cst_333 = arith.constant 0.000000e+00 : f32
    %426 = vector.shape_cast %22 : vector<1x256xi1> to vector<1x256xi1>
    %427 = vector.broadcast %426 : vector<1x256xi1> to vector<8x256xi1>
    %428 = vector.broadcast %cst_333 : f32 to vector<8x256xf32>
    %429 = arith.select %427, %425, %428 : vector<8x256xi1>, vector<8x256xf32>
    %c0_334 = arith.constant 0 : index
    %c128_335 = arith.constant 128 : index
    %430 = vector.load %arg4[%c0_334, %c128_335] : memref<8x512xf32, #tpu.memory_space<vmem>>, vector<8x256xf32>
    %c0_336 = arith.constant 0 : index
    %c129_337 = arith.constant 129 : index
    %431 = vector.load %arg4[%c0_336, %c129_337] : memref<8x512xf32, #tpu.memory_space<vmem>>, vector<8x256xf32>
    %cst_338 = arith.constant 0.000000e+00 : f32
    %432 = vector.shape_cast %24 : vector<1x256xi1> to vector<1x256xi1>
    %433 = vector.broadcast %432 : vector<1x256xi1> to vector<8x256xi1>
    %434 = vector.broadcast %cst_338 : f32 to vector<8x256xf32>
    %435 = arith.select %433, %431, %434 : vector<8x256xi1>, vector<8x256xf32>
    %c0_339 = arith.constant 0 : index
    %c143_340 = arith.constant 143 : index
    %436 = vector.load %arg4[%c0_339, %c143_340] : memref<8x512xf32, #tpu.memory_space<vmem>>, vector<8x256xf32>
    %cst_341 = arith.constant 0.000000e+00 : f32
    %437 = vector.shape_cast %22 : vector<1x256xi1> to vector<1x256xi1>
    %438 = vector.broadcast %437 : vector<1x256xi1> to vector<8x256xi1>
    %439 = vector.broadcast %cst_341 : f32 to vector<8x256xf32>
    %440 = arith.select %438, %436, %439 : vector<8x256xi1>, vector<8x256xf32>
    %c0_342 = arith.constant 0 : index
    %c144_343 = arith.constant 144 : index
    %441 = vector.load %arg4[%c0_342, %c144_343] : memref<8x512xf32, #tpu.memory_space<vmem>>, vector<8x256xf32>
    %c0_344 = arith.constant 0 : index
    %c145_345 = arith.constant 145 : index
    %442 = vector.load %arg4[%c0_344, %c145_345] : memref<8x512xf32, #tpu.memory_space<vmem>>, vector<8x256xf32>
    %cst_346 = arith.constant 0.000000e+00 : f32
    %443 = vector.shape_cast %24 : vector<1x256xi1> to vector<1x256xi1>
    %444 = vector.broadcast %443 : vector<1x256xi1> to vector<8x256xi1>
    %445 = vector.broadcast %cst_346 : f32 to vector<8x256xf32>
    %446 = arith.select %444, %442, %445 : vector<8x256xi1>, vector<8x256xf32>
    %c120 = arith.constant 120 : index
    %c0_347 = arith.constant 0 : index
    %447 = vector.load %arg2[%c120, %c0_347] : memref<128x128xf32, #tpu.memory_space<vmem>>, vector<8x72xf32>
    %c120_348 = arith.constant 120 : index
    %c72_349 = arith.constant 72 : index
    %448 = vector.load %arg2[%c120_348, %c72_349] : memref<128x128xf32, #tpu.memory_space<vmem>>, vector<8x1xf32>
    %c0_350 = arith.constant 0 : index
    %c0_351 = arith.constant 0 : index
    %449 = vector.load %arg5[%c0_350, %c0_351] : memref<72x256xf32, #tpu.memory_space<vmem>>, vector<8x256xf32>
    tpu.vector_store %arg5[%c0_350, %c0_351], %418 {strides = array<i32>} : memref<72x256xf32, #tpu.memory_space<vmem>>, vector<8x256xf32>,
    %c8_352 = arith.constant 8 : index
    %c0_353 = arith.constant 0 : index
    %450 = vector.load %arg5[%c8_352, %c0_353] : memref<72x256xf32, #tpu.memory_space<vmem>>, vector<8x256xf32>
    tpu.vector_store %arg5[%c8_352, %c0_353], %419 {strides = array<i32>} : memref<72x256xf32, #tpu.memory_space<vmem>>, vector<8x256xf32>,
    %c16_354 = arith.constant 16 : index
    %c0_355 = arith.constant 0 : index
    %451 = vector.load %arg5[%c16_354, %c0_355] : memref<72x256xf32, #tpu.memory_space<vmem>>, vector<8x256xf32>
    tpu.vector_store %arg5[%c16_354, %c0_355], %424 {strides = array<i32>} : memref<72x256xf32, #tpu.memory_space<vmem>>, vector<8x256xf32>,
    %c24_356 = arith.constant 24 : index
    %c0_357 = arith.constant 0 : index
    %452 = vector.load %arg5[%c24_356, %c0_357] : memref<72x256xf32, #tpu.memory_space<vmem>>, vector<8x256xf32>
    tpu.vector_store %arg5[%c24_356, %c0_357], %429 {strides = array<i32>} : memref<72x256xf32, #tpu.memory_space<vmem>>, vector<8x256xf32>,
    %c32_358 = arith.constant 32 : index
    %c0_359 = arith.constant 0 : index
    %453 = vector.load %arg5[%c32_358, %c0_359] : memref<72x256xf32, #tpu.memory_space<vmem>>, vector<8x256xf32>
    tpu.vector_store %arg5[%c32_358, %c0_359], %430 {strides = array<i32>} : memref<72x256xf32, #tpu.memory_space<vmem>>, vector<8x256xf32>,
    %c40_360 = arith.constant 40 : index
    %c0_361 = arith.constant 0 : index
    %454 = vector.load %arg5[%c40_360, %c0_361] : memref<72x256xf32, #tpu.memory_space<vmem>>, vector<8x256xf32>
    tpu.vector_store %arg5[%c40_360, %c0_361], %435 {strides = array<i32>} : memref<72x256xf32, #tpu.memory_space<vmem>>, vector<8x256xf32>,
    %c48_362 = arith.constant 48 : index
    %c0_363 = arith.constant 0 : index
    %455 = vector.load %arg5[%c48_362, %c0_363] : memref<72x256xf32, #tpu.memory_space<vmem>>, vector<8x256xf32>
    tpu.vector_store %arg5[%c48_362, %c0_363], %440 {strides = array<i32>} : memref<72x256xf32, #tpu.memory_space<vmem>>, vector<8x256xf32>,
    %c56_364 = arith.constant 56 : index
    %c0_365 = arith.constant 0 : index
    %456 = vector.load %arg5[%c56_364, %c0_365] : memref<72x256xf32, #tpu.memory_space<vmem>>, vector<8x256xf32>
    tpu.vector_store %arg5[%c56_364, %c0_365], %441 {strides = array<i32>} : memref<72x256xf32, #tpu.memory_space<vmem>>, vector<8x256xf32>,
    %c64_366 = arith.constant 64 : index
    %c0_367 = arith.constant 0 : index
    %457 = vector.load %arg5[%c64_366, %c0_367] : memref<72x256xf32, #tpu.memory_space<vmem>>, vector<8x256xf32>
    tpu.vector_store %arg5[%c64_366, %c0_367], %446 {strides = array<i32>} : memref<72x256xf32, #tpu.memory_space<vmem>>, vector<8x256xf32>,
    %c0_368 = arith.constant 0 : index
    %c0_369 = arith.constant 0 : index
    %458 = vector.load %arg5[%c0_368, %c0_369] : memref<72x256xf32, #tpu.memory_space<vmem>>, vector<72x256xf32>
    %cst_370 = arith.constant dense<0.000000e+00> : vector<8x256xf32>
    %459 = tpu.matmul %447, %458, %cst_370 {dimension_numbers = #tpu.dot_dimension_numbers<[1], [0], [0], [1], [0, 0, 1, 1], [], []>} : vector<8x72xf32>, vector<72x256xf32>, vector<8x256xf32> -> vector<8x256xf32>
    %460 = vector.broadcast %448 : vector<8x1xf32> to vector<8x256xf32>
    %461 = arith.addf %459, %460 : vector<8x256xf32>
    %cst_371 = arith.constant 0.000000e+00 : f32
    %462 = vector.broadcast %cst_371 : f32 to vector<8x256xf32>
    %463 = arith.subf %462, %461 : vector<8x256xf32>
    %464 = math.exp %463 : vector<8x256xf32>
    %cst_372 = arith.constant 1.000000e+00 : f32
    %465 = vector.broadcast %cst_372 : f32 to vector<8x256xf32>
    %466 = arith.addf %465, %464 : vector<8x256xf32>
    %cst_373 = arith.constant 1.000000e+00 : f32
    %467 = vector.broadcast %cst_373 : f32 to vector<8x256xf32>
    %468 = arith.divf %467, %466 : vector<8x256xf32>
    %469 = arith.mulf %461, %468 : vector<8x256xf32>
    %c16_374 = arith.constant 16 : index
    %c0_375 = arith.constant 0 : index
    %470 = vector.load %arg2[%c16_374, %c0_375] : memref<128x128xf32, #tpu.memory_space<vmem>>, vector<16x32xf32>
    %c16_376 = arith.constant 16 : index
    %c32_377 = arith.constant 32 : index
    %471 = vector.load %arg2[%c16_376, %c32_377] : memref<128x128xf32, #tpu.memory_space<vmem>>, vector<16x1xf32>
    %c0_378 = arith.constant 0 : index
    %c0_379 = arith.constant 0 : index
    %472 = vector.load %arg5[%c0_378, %c0_379] : memref<72x256xf32, #tpu.memory_space<vmem>>, vector<8x256xf32>
    tpu.vector_store %arg5[%c0_378, %c0_379], %40 {strides = array<i32>} : memref<72x256xf32, #tpu.memory_space<vmem>>, vector<8x256xf32>,
    %c8_380 = arith.constant 8 : index
    %c0_381 = arith.constant 0 : index
    %473 = vector.load %arg5[%c8_380, %c0_381] : memref<72x256xf32, #tpu.memory_space<vmem>>, vector<8x256xf32>
    tpu.vector_store %arg5[%c8_380, %c0_381], %41 {strides = array<i32>} : memref<72x256xf32, #tpu.memory_space<vmem>>, vector<8x256xf32>,
    %c16_382 = arith.constant 16 : index
    %c0_383 = arith.constant 0 : index
    %474 = vector.load %arg5[%c16_382, %c0_383] : memref<72x256xf32, #tpu.memory_space<vmem>>, vector<8x256xf32>
    tpu.vector_store %arg5[%c16_382, %c0_383], %255 {strides = array<i32>} : memref<72x256xf32, #tpu.memory_space<vmem>>, vector<8x256xf32>,
    %c24_384 = arith.constant 24 : index
    %c0_385 = arith.constant 0 : index
    %475 = vector.load %arg5[%c24_384, %c0_385] : memref<72x256xf32, #tpu.memory_space<vmem>>, vector<8x256xf32>
    tpu.vector_store %arg5[%c24_384, %c0_385], %469 {strides = array<i32>} : memref<72x256xf32, #tpu.memory_space<vmem>>, vector<8x256xf32>,
    %c0_386 = arith.constant 0 : index
    %c0_387 = arith.constant 0 : index
    %476 = vector.load %arg5[%c0_386, %c0_387] : memref<72x256xf32, #tpu.memory_space<vmem>>, vector<32x256xf32>
    %cst_388 = arith.constant dense<0.000000e+00> : vector<16x256xf32>
    %477 = tpu.matmul %470, %476, %cst_388 {dimension_numbers = #tpu.dot_dimension_numbers<[1], [0], [0], [1], [0, 0, 1, 1], [], []>} : vector<16x32xf32>, vector<32x256xf32>, vector<16x256xf32> -> vector<16x256xf32>
    %478 = vector.broadcast %471 : vector<16x1xf32> to vector<16x256xf32>
    %479 = arith.addf %477, %478 : vector<16x256xf32>
    %cst_389 = arith.constant 0.000000e+00 : f32
    %480 = vector.broadcast %cst_389 : f32 to vector<16x256xf32>
    %481 = arith.subf %480, %479 : vector<16x256xf32>
    %482 = math.exp %481 : vector<16x256xf32>
    %cst_390 = arith.constant 1.000000e+00 : f32
    %483 = vector.broadcast %cst_390 : f32 to vector<16x256xf32>
    %484 = arith.addf %483, %482 : vector<16x256xf32>
    %cst_391 = arith.constant 1.000000e+00 : f32
    %485 = vector.broadcast %cst_391 : f32 to vector<16x256xf32>
    %486 = arith.divf %485, %484 : vector<16x256xf32>
    %487 = arith.mulf %479, %486 : vector<16x256xf32>
    %c0_392 = arith.constant 0 : index
    %c0_393 = arith.constant 0 : index
    %c0_394 = arith.constant 0 : index
    %488 = vector.load %arg3[%c0_392, %c0_393, %c0_394] : memref<1x16x256xf32, #tpu.memory_space<vmem>>, vector<1x16x256xf32>
    %489 = vector.shape_cast %488 : vector<1x16x256xf32> to vector<16x256xf32>
    %490 = vector.shape_cast %487 : vector<16x256xf32> to vector<1x16x256xf32>
    tpu.vector_store %arg3[%c0_392, %c0_393, %c0_394], %490 {strides = array<i32>} : memref<1x16x256xf32, #tpu.memory_space<vmem>>, vector<1x16x256xf32>,
    return
  }
  func.func @transform_0(%arg0: i32) -> (i32, i32, i32) {
    %c0_i32 = arith.constant 0 : i32
    %c0_i32_0 = arith.constant 0 : i32
    %c0_i32_1 = arith.constant 0 : i32
    return %arg0, %c0_i32, %c0_i32_0 : i32, i32, i32
  }
  func.func @transform_1(%arg0: i32) -> (i32, i32) {
    %c0_i32 = arith.constant 0 : i32
    %c0_i32_0 = arith.constant 0 : i32
    %c0_i32_1 = arith.constant 0 : i32
    return %c0_i32, %c0_i32_0 : i32, i32
  }
  func.func @transform_2(%arg0: i32) -> (i32, i32, i32) {
    %c0_i32 = arith.constant 0 : i32
    %c0_i32_0 = arith.constant 0 : i32
    %c0_i32_1 = arith.constant 0 : i32
    return %arg0, %c0_i32, %c0_i32_0 : i32, i32, i32
  }
}

</mosaic_0001>

<llo_original>
// kernel: tpu_custom_call.1
$region0: #{tpu_custom_call.1}
  #allocation0 [shape = 'u32[]', space=smem, size = 0x4, offset = 0x4, fixed_abs, tag = 'smem constant byte address 0x4 - core index']
  #allocation1 [shape = 'u32[144,128]{1,0:T(1,128)}', space=vmem, size = 0x12000, scoped, tag = 'internal scratch']
  #allocation2 [shape = 'f32[8,512]{1,0:T(8,128)}', space=vmem, size = 0x4000, scoped, tag = 'scratch operand']
  #allocation3 [shape = 'f32[72,256]{1,0:T(8,128)}', space=vmem, size = 0x12000, scoped, tag = 'scratch operand']
  %s0 = inlined_call_operand.hbm [shape: f32[2,8,256], index: 0, kind: input, shape index: {}]
  %s1 = inlined_call_operand.hbm [shape: f32[128,128], index: 1, kind: input, shape index: {}]
  %s2 = inlined_call_operand.hbm [shape: f32[2,16,256], index: 2, kind: output, shape index: {}]
  %s3 = sld [smem:[#allocation0]]
  $region49: #{tpu_custom_call.1} parent=0
    _
  %s5 = ssub.s32 1, %s3
  %s6 = scalar_select 0, %s5, %s3
  $region1: #{tpu_custom_call.1} parent=0
    #allocation4 [shape = 'u8[16384]{0}', space=vmem, size = 0x4000, scoped, tag = 'input window, operand 0']
    #allocation5 [shape = 's32[2]{0}', space=sflag, size = 0x8, scoped, tag = 'scoped memory for tpu_custom_call.1']
    #allocation6 [shape = 's32[2]{0}', space=sflag, size = 0x8, scoped, tag = 'scoped memory for tpu_custom_call.1']
    #allocation7 [shape = 'u8[65536]{0}', space=vmem, size = 0x10000, scoped, tag = 'input window, operand 1, single buffered']
    #allocation8 [shape = 's32[1]{0}', space=sflag, size = 0x4, scoped, tag = 'scoped memory for tpu_custom_call.1']
    #allocation9 [shape = 'u8[32768]{0}', space=vmem, size = 0x8000, scoped, tag = 'output window, operand 0']
    %7 = vsyncpa [#allocation5], 0
    %s8 = scalar_lea.sflag [#allocation5], 1
    %9 = vsyncpa %s8, 0
    %10 = vsyncpa [#allocation8], 0
    %11 = vsyncpa [#allocation6], 0
    %s12 = scalar_lea.sflag [#allocation6], 1
    %13 = vsyncpa %s12, 0
    loop: start=0, step=1, limit=4
    $region2: #{tpu_custom_call.1} parent=1 // loop_pre_header
      _
    $region3: #{tpu_custom_call.1} parent=1 // loop_header
      %s15 = sphi 0, %s19
      %p16 = scmp.ge.s32.totalorder %s15, 4
      %s25 = sphi 0, %s27
      %s28 = sphi 0, %s25
      %s29 = sphi 0, %s28
      %s45 = sphi 0, %s29
      %s49 = sphi 0, %s49
      %s51 = sphi 0, %s49
      %s52 = sphi 0, %s51
      %s66 = sphi 0, %s52
      %s72 = sphi 0, %s74
      %s75 = sphi 0, %s72
      %s76 = sphi 0, %s75
      %s92 = sphi 0, %s76
    $region4: #{tpu_custom_call.1} parent=1 // loop_header_branch
      %18 = sbr.rel (%p16) target = $region8
    $region5: #{tpu_custom_call.1} parent=1 // loop_body
      %s20 = ssub.s32 %s15, 1
      %s21 = ssub.s32 %s15, 2
      %s22 = sadd.s32 %s15, 1
      %s23 = ssub.s32 %s15, %s22
      %p24 = scmp.eq.s32.totalorder %s23, 0
      %s26 = sadd.s32 %s25, 1
      %s27 = scalar_select %p24, %s25, %s26
      %p30 = pneg %p24
      %p31 = scmp.eq.s32.totalorder %s15, 1
      %p32 = por %p30, %p31
      %p33 = scmp.ne.s32.totalorder %s25, %s28
      %p34 = scmp.eq.s32.totalorder %s15, 0
      %p35 = por %p33, %p34
      %p36 = scmp.ne.s32.totalorder %s25, %s28
      %p37 = scmp.eq.s32.totalorder %s20, 1
      %p38 = por %p36, %p37
      %p39 = scmp.ne.s32.totalorder %s28, %s29
      %p40 = scmp.eq.s32.totalorder %s20, 0
      %p41 = por %p39, %p40
      %p42 = scmp.ne.s32.totalorder %s28, %s29
      %p43 = scmp.eq.s32.totalorder %s21, 1
      %p44 = por %p42, %p43
      %p46 = scmp.ne.s32.totalorder %s29, %s45
      %p47 = scmp.eq.s32.totalorder %s21, 0
      %p48 = por %p46, %p47
      %s50 = sadd.s32 %s49, 1
      %p53 = scmp.eq.s32.totalorder %s15, 1
      %p54 = scmp.ne.s32.totalorder %s49, %s51
      %p55 = scmp.eq.s32.totalorder %s15, 0
      %p56 = por %p54, %p55
      %p57 = scmp.ne.s32.totalorder %s49, %s51
      %p58 = scmp.eq.s32.totalorder %s20, 1
      %p59 = por %p57, %p58
      %p60 = scmp.ne.s32.totalorder %s51, %s52
      %p61 = scmp.eq.s32.totalorder %s20, 0
      %p62 = por %p60, %p61
      %p63 = scmp.ne.s32.totalorder %s51, %s52
      %p64 = scmp.eq.s32.totalorder %s21, 1
      %p65 = por %p63, %p64
      %p67 = scmp.ne.s32.totalorder %s52, %s66
      %p68 = scmp.eq.s32.totalorder %s21, 0
      %p69 = por %p67, %p68
      %s70 = ssub.s32 %s15, %s22
      %p71 = scmp.eq.s32.totalorder %s70, 0
      %s73 = sadd.s32 %s72, 1
      %s74 = scalar_select %p71, %s72, %s73
      %p77 = pneg %p71
      %p78 = scmp.eq.s32.totalorder %s15, 1
      %p79 = por %p77, %p78
      %p80 = scmp.ne.s32.totalorder %s72, %s75
      %p81 = scmp.eq.s32.totalorder %s15, 0
      %p82 = por %p80, %p81
      %p83 = scmp.ne.s32.totalorder %s72, %s75
      %p84 = scmp.eq.s32.totalorder %s20, 1
      %p85 = por %p83, %p84
      %p86 = scmp.ne.s32.totalorder %s75, %s76
      %p87 = scmp.eq.s32.totalorder %s20, 0
      %p88 = por %p86, %p87
      %p89 = scmp.ne.s32.totalorder %s75, %s76
      %p90 = scmp.eq.s32.totalorder %s21, 1
      %p91 = por %p89, %p90
      %p93 = scmp.ne.s32.totalorder %s76, %s92
      %p94 = scmp.eq.s32.totalorder %s21, 0
      %p95 = por %p93, %p94
      %p96 = scmp.le.s32.totalorder 1, %s15
      %p97 = scmp.lt.s32.totalorder %s15, 3
      %p98 = pnand %p96, %p97
      %p99 = pneg %p98
      // Predicated region
      $region9: #{tpu_custom_call.1} parent=5 // pred_check
        _
      $region10: #{tpu_custom_call.1} parent=5 // pred_check_branch
        %101 = sbr.rel (%p98) target = $region12
      $region11: #{tpu_custom_call.1} parent=5 // pred_region
        %s102 = ssub.s32 %s15, 1
        // Predicated region
        $region13: #{tpu_custom_call.1} parent=11 // pred_check
          %p103 = pneg %p62
        $region14: #{tpu_custom_call.1} parent=11 // pred_check_branch
          %105 = sbr.rel (%p103) target = $region16
        $region15: #{tpu_custom_call.1} parent=11 // pred_region
          %s107 = ssub.s32 2048, 2048
          %108 = vsyncadd [#allocation8], %s107
          %s109 = sshll.u32 [#allocation7], 4
          %s110 = int_to_ptr.vmem [resolvable:$true] %s109
          %115 = dma.hbm_to_vmem [thread:$0]  %s1, 2048, %s110, [#allocation8], 128, 128, 8
        $region16: #{tpu_custom_call.1} parent=11 // pred_fallthru
          _
      $region12: #{tpu_custom_call.1} parent=5 // pred_fallthru
        _
      %p116 = scmp.lt.s32.totalorder %s15, 2
      // Predicated region
      $region17: #{tpu_custom_call.1} parent=5 // pred_check
        %p117 = pneg %p116
      $region18: #{tpu_custom_call.1} parent=5 // pred_check_branch
        %119 = sbr.rel (%p117) target = $region20
      $region19: #{tpu_custom_call.1} parent=5 // pred_region
        // Predicated region
        $region21: #{tpu_custom_call.1} parent=19 // pred_check
          %p120 = pneg %p35
        $region22: #{tpu_custom_call.1} parent=19 // pred_check_branch
          %122 = sbr.rel (%p120) target = $region24
        $region23: #{tpu_custom_call.1} parent=19 // pred_region
          %s123 = sand.u32 %s25, 1
          %s124 = scalar_lea.sflag [#allocation5], %s123
          %s125 = sand.u32 %s25, 1
          %s126 = smul.addr %s125, 16
          %s127 = scalar_lea.vmem [#allocation4], %s126
          %s129 = ssub.s32 256, 256
          %130 = vsyncadd %s124, %s129
          %s131 = smul.addr %s15, 2
          %s132 = smul.addr %s131, 128
          %s133 = scalar_lea.hbm %s0, %s132
          %s135 = sshll.u32 %s127, 4
          %s136 = int_to_ptr.vmem [resolvable:$true] %s135
          %138 = dma.hbm_to_vmem [thread:$0]  %s133, 256, %s136, %s124
        $region24: #{tpu_custom_call.1} parent=19 // pred_fallthru
          _
      $region20: #{tpu_custom_call.1} parent=5 // pred_fallthru
        _
      %p139 = scmp.le.s32.totalorder 1, %s15
      %p140 = scmp.lt.s32.totalorder %s15, 3
      %p141 = pnand %p139, %p140
      %p142 = pneg %p141
      // Predicated region
      $region25: #{tpu_custom_call.1} parent=5 // pred_check
        _
      $region26: #{tpu_custom_call.1} parent=5 // pred_check_branch
        %144 = sbr.rel (%p141) target = $region28
      $region27: #{tpu_custom_call.1} parent=5 // pred_region
        %s145 = ssub.s32 %s15, 1
        %s146 = sand.u32 %s28, 1
        %s147 = scalar_lea.sflag [#allocation5], %s146
        %s148 = sand.u32 %s28, 1
        %s149 = smul.addr %s148, 16
        %s150 = scalar_lea.vmem [#allocation4], %s149
        // Predicated region
        $region29: #{tpu_custom_call.1} parent=27 // pred_check
          %p151 = pneg %p41
        $region30: #{tpu_custom_call.1} parent=27 // pred_check_branch
          %153 = sbr.rel (%p151) target = $region32
        $region31: #{tpu_custom_call.1} parent=27 // pred_region
          %154 = dma.done %s147, 256
        $region32: #{tpu_custom_call.1} parent=27 // pred_fallthru
          _
        // Predicated region
        $region33: #{tpu_custom_call.1} parent=27 // pred_check
          %p155 = pneg %p62
        $region34: #{tpu_custom_call.1} parent=27 // pred_check_branch
          %157 = sbr.rel (%p155) target = $region36
        $region35: #{tpu_custom_call.1} parent=27 // pred_region
          %158 = dma.done [#allocation8], 2048
        $region36: #{tpu_custom_call.1} parent=27 // pred_fallthru
          _
        %s159 = sand.u32 %s28, 1
        %s160 = scalar_lea.sflag [#allocation5], %s159
        %s161 = sand.u32 %s28, 1
        %s162 = smul.addr %s161, 16
        %s163 = scalar_lea.vmem [#allocation4], %s162
        %p164 = pneg %p41
        %p165 = pneg %p38
        %p166 = pneg %p62
        %p167 = pneg %p59
        %p168 = pneg %p88
        %p169 = pneg %p85
        %s170 = sand.u32 %s75, 1
        %s171 = scalar_lea.sflag [#allocation6], %s170
        %s172 = sand.u32 %s75, 1
        %s173 = smul.addr %s172, 32
        %s174 = scalar_lea.vmem [#allocation9], %s173
        %175 = vst [vmem:[#allocation2] sm:$0xff] 0.0
        %176 = vst [vmem:[#allocation2 + $0x18] sm:$0xff] 0.0
        %v177 = vlaneseq
        %v178 = vand.u32 %v177, 127
        %v179 = vadd.s32 %v178, 128
        %vm180 = vcmp.lt.s32.totalorder %v178, 0
        %v181 = vsub.s32 0, %v178
        %v182 = vsel %vm180, %v181, %v178
        %v183 = vshrl.u32 %v182, 4
        %v184 = vand.u32 %v182, 15
        %v185 = vsub.s32 0, %v184
        %v186 = vsel %vm180, %v185, %v184
        %vm187 = vcmp.lt.s32.totalorder %v179, 0
        %v188 = vsub.s32 0, %v179
        %v189 = vsel %vm187, %v188, %v179
        %v190 = vshrl.u32 %v189, 4
        %v191 = vand.u32 %v189, 15
        %v192 = vsub.s32 0, %v191
        %v193 = vsel %vm187, %v192, %v191
        %vm194 = vcmp.ne.s32.totalorder %v186, 0
        %vm195 = vcmp.ne.s32.totalorder %v193, 0
        %vm196 = vcmp.lt.s32.totalorder %v186, 0
        %vm197 = vcmp.lt.s32.totalorder %v193, 0
        %vm198 = vmand %vm196, %vm194
        %vm199 = vmand %vm197, %vm195
        %v200 = vadd.s32 %v186, 16
        %v201 = vadd.s32 %v193, 16
        %v202 = vsel %vm198, %v200, %v186
        %v203 = vsel %vm199, %v201, %v193
        %vm204 = vcmp.ge.s32.totalorder %v202, 1
        %vm205 = vcmp.ge.s32.totalorder %v203, 1
        %vm206 = vcmp.lt.s32.totalorder %v202, 15
        %vm207 = vcmp.lt.s32.totalorder %v203, 15
        %v208 = vld [vmem:[%s150] sm:$0xff]
        %v209 = vld [vmem:[%s150 + $0x8] sm:$0xff]
        %v210 = vld [vmem:[#allocation7] sm:$0xff]
        %v211 = vld [vmem:[#allocation7 + $0x8] sm:$0xff]
        %213 = vset.pattern.permute.xlu0 8
        %214 = vperm.xlu0 %213, %v210
        %v215 = vpop.permute.xlu0 %214
        %218 = vset.pattern.permute.xlu0 8
        %219 = vperm.xlu0 %218, %v211
        %v220 = vpop.permute.xlu0 %219
        %vm222 = vcmask 64512
        %v223 = vsel %vm222, %v210, 0
        %v225 = vsel %vm222, %v211, 0
        %227 = vmatprep.subr.mxu0 0.0
        %228 = vmatpush1.msra.mxu0 0.0
        %229 = vmatprep.subr.mxu0 0.0
        %230 = vmatpush1.msra.mxu0 0.0
        %231 = vmatprep.subr.mxu0 0.0
        %232 = vmatpush1.msra.mxu0 0.0
        %233 = vmatprep.subr.mxu0 0.0
        %234 = vmatpush1.msra.mxu0 0.0
        %235 = vmatprep.subr.mxu0 0.0
        %236 = vmatpush1.msra.mxu0 0.0
        %237 = vmatprep.subr.mxu0 0.0
        %238 = vmatpush1.msra.mxu0 0.0
        %239 = vmatprep.subr.mxu0 0.0
        %240 = vmatpush1.msra.mxu0 0.0
        %241 = vmatprep.subr.mxu0 0.0
        %242 = vmatpush1.msra.mxu0 0.0
        %243 = vmatprep.subr.mxu0 0.0
        %244 = vmatpush1.msra.mxu0 0.0
        %245 = vmatprep.subr.mxu0 0.0
        %246 = vmatpush1.msra.mxu0 0.0
        %247 = vmatprep.subr.mxu0 0.0
        %248 = vmatpush1.msra.mxu0 0.0
        %249 = vmatprep.subr.mxu0 0.0
        %250 = vmatpush1.msra.mxu0 0.0
        %251 = vmatprep.subr.mxu0 0.0
        %252 = vmatpush1.msra.mxu0 0.0
        %253 = vmatprep.subr.mxu0 0.0
        %254 = vmatpush1.msra.mxu0 0.0
        %255 = vmatprep.subr.mxu0 0.0
        %256 = vmatpush1.msra.mxu0 0.0
        %257 = vmatprep.subr.mxu0 %v209
        %258 = vmatpush1.msra.mxu0 %v208
        %259 = vmatprep.subr.mxu0 0.0
        %260 = vmatpush2.msra.mxu0 0.0
        %261 = vmatprep.subr.mxu0 0.0
        %262 = vmatpush2.msra.mxu0 0.0
        %263 = vmatprep.subr.mxu0 0.0
        %264 = vmatpush2.msra.mxu0 0.0
        %265 = vmatprep.subr.mxu0 0.0
        %266 = vmatpush2.msra.mxu0 0.0
        %267 = vmatprep.subr.mxu0 0.0
        %268 = vmatpush2.msra.mxu0 0.0
        %269 = vmatprep.subr.mxu0 0.0
        %270 = vmatpush2.msra.mxu0 0.0
        %271 = vmatprep.subr.mxu0 0.0
        %272 = vmatpush2.msra.mxu0 0.0
        %273 = vmatprep.subr.mxu0 0.0
        %274 = vmatpush2.msra.mxu0 0.0
        %275 = vmatprep.subr.mxu0 0.0
        %276 = vmatpush2.msra.mxu0 0.0
        %277 = vmatprep.subr.mxu0 0.0
        %278 = vmatpush2.msra.mxu0 0.0
        %279 = vmatprep.subr.mxu0 0.0
        %280 = vmatpush2.msra.mxu0 0.0
        %281 = vmatprep.subr.mxu0 0.0
        %282 = vmatpush2.msra.mxu0 0.0
        %283 = vmatprep.subr.mxu0 0.0
        %284 = vmatpush2.msra.mxu0 0.0
        %285 = vmatprep.subr.mxu0 0.0
        %286 = vmatpush2.msra.mxu0 0.0
        %287 = vmatprep.subr.mxu0 0.0
        %288 = vmatpush2.msra.mxu0 0.0
        %289 = vmatprep.subr.mxu0 0.0
        %290 = vmatpush2.msra.mxu0 0.0
        %291 = vmatprep.mubr.f32.mxu0 0.0
        %292 = vmatmul.mubr.f32.gmra.mxu0 %v223
        %v293 = vpop.f32.mrf.mxu0
        %v294 = vadd.f32 %v215, %v293
        %v295 = vpop.f32.mrf.mxu0
        %v296 = vadd.f32 %v215, %v295
        %297 = vmatprep.mubr.f32.mxu0 0.0
        %298 = vmatmul.mubr.f32.gmra.mxu0 %v225
        %v299 = vpop.f32.mrf.mxu0
        %v300 = vadd.f32 %v220, %v299
        %v301 = vpop.f32.mrf.mxu0
        %v302 = vadd.f32 %v220, %v301
        %303 = vdwg.mxu0
        %v304 = vsub.f32 0.0, %v294
        %v305 = vsub.f32 0.0, %v296
        %v306 = vsub.f32 0.0, %v300
        %v307 = vsub.f32 0.0, %v302
        %v308 = vmul.f32 %v304, 1.442695
        %v309 = vpow.pop %v308
        %v310 = vmul.f32 %v305, 1.442695
        %v311 = vpow.pop %v310
        %v312 = vmul.f32 %v306, 1.442695
        %v313 = vpow.pop %v312
        %v314 = vmul.f32 %v307, 1.442695
        %v315 = vpow.pop %v314
        %v316 = vadd.f32 %v309, 1.0
        %v317 = vadd.f32 %v311, 1.0
        %v318 = vadd.f32 %v313, 1.0
        %v319 = vadd.f32 %v315, 1.0
        %v320 = vrcp.pop %v316
        %v321 = vmul.f32 1.0, %v320
        %v322 = vrcp.pop %v317
        %v323 = vmul.f32 1.0, %v322
        %v324 = vrcp.pop %v318
        %v325 = vmul.f32 1.0, %v324
        %v326 = vrcp.pop %v319
        %v327 = vmul.f32 1.0, %v326
        %v328 = vmul.f32 %v294, %v321
        %v329 = vmul.f32 %v296, %v323
        %v330 = vmul.f32 %v300, %v325
        %v331 = vmul.f32 %v302, %v327
        %v332 = vld [vmem:[#allocation7 + $0x20] sm:$0xf]
        %334 = vset.pattern.permute.xlu0 8
        %335 = vperm.xlu0 %334, %v332
        %v336 = vpop.permute.xlu0 %335
        %v338 = vsel %vm222, %v332, 0
        %340 = vmatprep.subr.mxu0 0.0
        %341 = vmatpush1.msra.mxu0 0.0
        %342 = vmatprep.subr.mxu0 0.0
        %343 = vmatpush1.msra.mxu0 0.0
        %344 = vmatprep.subr.mxu0 0.0
        %345 = vmatpush1.msra.mxu0 0.0
        %346 = vmatprep.subr.mxu0 0.0
        %347 = vmatpush1.msra.mxu0 0.0
        %348 = vmatprep.subr.mxu0 0.0
        %349 = vmatpush1.msra.mxu0 0.0
        %350 = vmatprep.subr.mxu0 0.0
        %351 = vmatpush1.msra.mxu0 0.0
        %352 = vmatprep.subr.mxu0 0.0
        %353 = vmatpush1.msra.mxu0 0.0
        %354 = vmatprep.subr.mxu0 0.0
        %355 = vmatpush1.msra.mxu0 0.0
        %356 = vmatprep.subr.mxu0 0.0
        %357 = vmatpush1.msra.mxu0 0.0
        %358 = vmatprep.subr.mxu0 0.0
        %359 = vmatpush1.msra.mxu0 0.0
        %360 = vmatprep.subr.mxu0 0.0
        %361 = vmatpush1.msra.mxu0 0.0
        %362 = vmatprep.subr.mxu0 0.0
        %363 = vmatpush1.msra.mxu0 0.0
        %364 = vmatprep.subr.mxu0 0.0
        %365 = vmatpush1.msra.mxu0 0.0
        %366 = vmatprep.subr.mxu0 0.0
        %367 = vmatpush1.msra.mxu0 0.0
        %368 = vmatprep.subr.mxu0 0.0
        %369 = vmatpush1.msra.mxu0 0.0
        %370 = vmatprep.subr.mxu0 %v331
        %371 = vmatpush1.msra.mxu0 %v330
        %372 = vmatprep.subr.mxu0 0.0
        %373 = vmatpush2.msra.mxu0 0.0
        %374 = vmatprep.subr.mxu0 0.0
        %375 = vmatpush2.msra.mxu0 0.0
        %376 = vmatprep.subr.mxu0 0.0
        %377 = vmatpush2.msra.mxu0 0.0
        %378 = vmatprep.subr.mxu0 0.0
        %379 = vmatpush2.msra.mxu0 0.0
        %380 = vmatprep.subr.mxu0 0.0
        %381 = vmatpush2.msra.mxu0 0.0
        %382 = vmatprep.subr.mxu0 0.0
        %383 = vmatpush2.msra.mxu0 0.0
        %384 = vmatprep.subr.mxu0 0.0
        %385 = vmatpush2.msra.mxu0 0.0
        %386 = vmatprep.subr.mxu0 0.0
        %387 = vmatpush2.msra.mxu0 0.0
        %388 = vmatprep.subr.mxu0 0.0
        %389 = vmatpush2.msra.mxu0 0.0
        %390 = vmatprep.subr.mxu0 0.0
        %391 = vmatpush2.msra.mxu0 0.0
        %392 = vmatprep.subr.mxu0 0.0
        %393 = vmatpush2.msra.mxu0 0.0
        %394 = vmatprep.subr.mxu0 0.0
        %395 = vmatpush2.msra.mxu0 0.0
        %396 = vmatprep.subr.mxu0 0.0
        %397 = vmatpush2.msra.mxu0 0.0
        %398 = vmatprep.subr.mxu0 0.0
        %399 = vmatpush2.msra.mxu0 0.0
        %400 = vmatprep.subr.mxu0 0.0
        %401 = vmatpush2.msra.mxu0 0.0
        %402 = vmatprep.subr.mxu0 0.0
        %403 = vmatpush2.msra.mxu0 0.0
        %404 = vmatprep.mubr.f32.mxu0 0.0
        %405 = vmatmul.mubr.f32.gmra.mxu0 %v338
        %v406 = vpop.f32.mrf.mxu0
        %v407 = vadd.f32 %v336, %v406
        %v408 = vpop.f32.mrf.mxu0
        %v409 = vadd.f32 %v336, %v408
        %410 = vdwg.mxu0
        %v411 = vsub.f32 0.0, %v407
        %v412 = vsub.f32 0.0, %v409
        %v413 = vmul.f32 %v411, 1.442695
        %v414 = vpow.pop %v413
        %v415 = vmul.f32 %v412, 1.442695
        %v416 = vpow.pop %v415
        %v417 = vadd.f32 %v414, 1.0
        %v418 = vadd.f32 %v416, 1.0
        %v419 = vrcp.pop %v417
        %v420 = vmul.f32 1.0, %v419
        %v421 = vrcp.pop %v418
        %v422 = vmul.f32 1.0, %v421
        %v423 = vmul.f32 %v407, %v420
        %v424 = vmul.f32 %v409, %v422
        %v425 = vld [vmem:[#allocation7 + $0x28] sm:$0xf]
        %427 = vset.pattern.permute.xlu0 8
        %428 = vperm.xlu0 %427, %v425
        %v429 = vpop.permute.xlu0 %428
        %v431 = vsel %vm222, %v425, 0
        %433 = vmatprep.subr.mxu0 0.0
        %434 = vmatpush1.msra.mxu0 0.0
        %435 = vmatprep.subr.mxu0 0.0
        %436 = vmatpush1.msra.mxu0 0.0
        %437 = vmatprep.subr.mxu0 0.0
        %438 = vmatpush1.msra.mxu0 0.0
        %439 = vmatprep.subr.mxu0 0.0
        %440 = vmatpush1.msra.mxu0 0.0
        %441 = vmatprep.subr.mxu0 0.0
        %442 = vmatpush1.msra.mxu0 0.0
        %443 = vmatprep.subr.mxu0 0.0
        %444 = vmatpush1.msra.mxu0 0.0
        %445 = vmatprep.subr.mxu0 0.0
        %446 = vmatpush1.msra.mxu0 0.0
        %447 = vmatprep.subr.mxu0 0.0
        %448 = vmatpush1.msra.mxu0 0.0
        %449 = vmatprep.subr.mxu0 0.0
        %450 = vmatpush1.msra.mxu0 0.0
        %451 = vmatprep.subr.mxu0 0.0
        %452 = vmatpush1.msra.mxu0 0.0
        %453 = vmatprep.subr.mxu0 0.0
        %454 = vmatpush1.msra.mxu0 0.0
        %455 = vmatprep.subr.mxu0 0.0
        %456 = vmatpush1.msra.mxu0 0.0
        %457 = vmatprep.subr.mxu0 0.0
        %458 = vmatpush1.msra.mxu0 0.0
        %459 = vmatprep.subr.mxu0 0.0
        %460 = vmatpush1.msra.mxu0 0.0
        %461 = vmatprep.subr.mxu0 0.0
        %462 = vmatpush1.msra.mxu0 0.0
        %463 = vmatprep.subr.mxu0 %v331
        %464 = vmatpush1.msra.mxu0 %v330
        %465 = vmatprep.subr.mxu0 0.0
        %466 = vmatpush2.msra.mxu0 0.0
        %467 = vmatprep.subr.mxu0 0.0
        %468 = vmatpush2.msra.mxu0 0.0
        %469 = vmatprep.subr.mxu0 0.0
        %470 = vmatpush2.msra.mxu0 0.0
        %471 = vmatprep.subr.mxu0 0.0
        %472 = vmatpush2.msra.mxu0 0.0
        %473 = vmatprep.subr.mxu0 0.0
        %474 = vmatpush2.msra.mxu0 0.0
        %475 = vmatprep.subr.mxu0 0.0
        %476 = vmatpush2.msra.mxu0 0.0
        %477 = vmatprep.subr.mxu0 0.0
        %478 = vmatpush2.msra.mxu0 0.0
        %479 = vmatprep.subr.mxu0 0.0
        %480 = vmatpush2.msra.mxu0 0.0
        %481 = vmatprep.subr.mxu0 0.0
        %482 = vmatpush2.msra.mxu0 0.0
        %483 = vmatprep.subr.mxu0 0.0
        %484 = vmatpush2.msra.mxu0 0.0
        %485 = vmatprep.subr.mxu0 0.0
        %486 = vmatpush2.msra.mxu0 0.0
        %487 = vmatprep.subr.mxu0 0.0
        %488 = vmatpush2.msra.mxu0 0.0
        %489 = vmatprep.subr.mxu0 0.0
        %490 = vmatpush2.msra.mxu0 0.0
        %491 = vmatprep.subr.mxu0 0.0
        %492 = vmatpush2.msra.mxu0 0.0
        %493 = vmatprep.subr.mxu0 0.0
        %494 = vmatpush2.msra.mxu0 0.0
        %495 = vmatprep.subr.mxu0 0.0
        %496 = vmatpush2.msra.mxu0 0.0
        %497 = vmatprep.mubr.f32.mxu0 0.0
        %498 = vmatmul.mubr.f32.gmra.mxu0 %v431
        %v499 = vpop.f32.mrf.mxu0
        %v500 = vadd.f32 %v429, %v499
        %v501 = vpop.f32.mrf.mxu0
        %v502 = vadd.f32 %v429, %v501
        %503 = vdwg.mxu0
        %v504 = vsub.f32 0.0, %v500
        %v505 = vsub.f32 0.0, %v502
        %v506 = vmul.f32 %v504, 1.442695
        %v507 = vpow.pop %v506
        %v508 = vmul.f32 %v505, 1.442695
        %v509 = vpow.pop %v508
        %v510 = vadd.f32 %v507, 1.0
        %v511 = vadd.f32 %v509, 1.0
        %v512 = vrcp.pop %v510
        %v513 = vmul.f32 1.0, %v512
        %v514 = vrcp.pop %v511
        %v515 = vmul.f32 1.0, %v514
        %v516 = vmul.f32 %v500, %v513
        %v517 = vmul.f32 %v502, %v515
        %518 = vst [vmem:[#allocation2 + $0x8] sm:$0xf] %v423
        %519 = vst [vmem:[#allocation2 + $0x10] sm:$0xf] %v424
        %v520 = vld [vmem:[#allocation2] sm:$0xf]
        %v521 = vld [vmem:[#allocation2 + $0x8] sm:$0xf]
        %v522 = vld [vmem:[#allocation2 + $0x10] sm:$0xf]
        %v523 = vsel %vm204, 1, 0
        %v524 = vsel %vm205, 1, 0
        %vm525 = vcmp.eq.s32.totalorder %v523, 1
        %vm526 = vcmp.eq.s32.totalorder %v524, 1
        %530 = vrot.lane.b32.xlu0 %v520, 17
        %v531 = vpop.permute.xlu0 %530
        %532 = vrot.lane.b32.xlu0 %v521, 17
        %v533 = vpop.permute.xlu0 %532
        %534 = vrot.lane.b32.xlu0 %v522, 17
        %v535 = vpop.permute.xlu0 %534
        %vm536 = vcmask 138240
        %v537 = vsel %vm536, %v531, %v533
        %v538 = vsel %vm536, %v533, %v535
        %v541 = vsel %vm525, %v537, 0.0
        %v542 = vsel %vm526, %v538, 0.0
        %v543 = vsel %vm206, 1, 0
        %v544 = vsel %vm207, 1, 0
        %vm545 = vcmp.eq.s32.totalorder %v543, 1
        %vm546 = vcmp.eq.s32.totalorder %v544, 1
        %547 = vrot.lane.b32.xlu0 %v520, 15
        %v548 = vpop.permute.xlu0 %547
        %549 = vrot.lane.b32.xlu0 %v521, 15
        %v550 = vpop.permute.xlu0 %549
        %551 = vrot.lane.b32.xlu0 %v522, 15
        %v552 = vpop.permute.xlu0 %551
        %vm553 = vcmask 121856
        %v554 = vsel %vm553, %v548, %v550
        %v555 = vsel %vm553, %v550, %v552
        %v558 = vsel %vm545, %v554, 0.0
        %v559 = vsel %vm546, %v555, 0.0
        %560 = vrot.lane.b32.xlu0 %v520, 1
        %v561 = vpop.permute.xlu0 %560
        %562 = vrot.lane.b32.xlu0 %v521, 1
        %v563 = vpop.permute.xlu0 %562
        %564 = vrot.lane.b32.xlu0 %v522, 1
        %v565 = vpop.permute.xlu0 %564
        %vm566 = vcmask 7168
        %v567 = vsel %vm566, %v561, %v563
        %v568 = vsel %vm566, %v563, %v565
        %v571 = vsel %vm525, %v567, 0.0
        %v572 = vsel %vm526, %v568, 0.0
        %v573 = vld [vmem:[#allocation2 + $0x8] sm:$0xf]
        %v574 = vld [vmem:[#allocation2 + $0x10] sm:$0xf]
        %v575 = vld [vmem:[#allocation2 + $0x18] sm:$0xf]
        %579 = vrot.lane.b32.xlu0 %v573, 127
        %v580 = vpop.permute.xlu0 %579
        %581 = vrot.lane.b32.xlu0 %v574, 127
        %v582 = vpop.permute.xlu0 %581
        %583 = vrot.lane.b32.xlu0 %v575, 127
        %v584 = vpop.permute.xlu0 %583
        %vm585 = vcmask 1039360
        %v586 = vsel %vm585, %v580, %v582
        %v587 = vsel %vm585, %v582, %v584
        %v590 = vsel %vm545, %v586, 0.0
        %v591 = vsel %vm546, %v587, 0.0
        %592 = vrot.lane.b32.xlu0 %v573, 113
        %v593 = vpop.permute.xlu0 %592
        %594 = vrot.lane.b32.xlu0 %v574, 113
        %v595 = vpop.permute.xlu0 %594
        %596 = vrot.lane.b32.xlu0 %v575, 113
        %v597 = vpop.permute.xlu0 %596
        %vm598 = vcmask 924672
        %v599 = vsel %vm598, %v593, %v595
        %v600 = vsel %vm598, %v595, %v597
        %v603 = vsel %vm525, %v599, 0.0
        %v604 = vsel %vm526, %v600, 0.0
        %605 = vrot.lane.b32.xlu0 %v573, 111
        %v606 = vpop.permute.xlu0 %605
        %607 = vrot.lane.b32.xlu0 %v574, 111
        %v608 = vpop.permute.xlu0 %607
        %609 = vrot.lane.b32.xlu0 %v575, 111
        %v610 = vpop.permute.xlu0 %609
        %vm611 = vcmask 908288
        %v612 = vsel %vm611, %v606, %v608
        %v613 = vsel %vm611, %v608, %v610
        %v616 = vsel %vm545, %v612, 0.0
        %v617 = vsel %vm546, %v613, 0.0
        %v618 = vld [vmem:[#allocation7 + $0x30] sm:$0xf]
        %619 = vst [vmem:[#allocation3] sm:$0xf] %v541
        %620 = vst [vmem:[#allocation3 + $0x8] sm:$0xf] %v542
        %v621 = vrot.slane %v520, 4
        %v622 = vrot.slane %v521, 4
        %v623 = vrot.slane %v522, 4
        %624 = vrot.lane.b32.xlu0 %v621, 16
        %v625 = vpop.permute.xlu0 %624
        %626 = vrot.lane.b32.xlu0 %v622, 16
        %v627 = vpop.permute.xlu0 %626
        %628 = vrot.lane.b32.xlu0 %v623, 16
        %v629 = vpop.permute.xlu0 %628
        %vm630 = vcmask 130048
        %v631 = vsel %vm630, %v625, %v627
        %v632 = vsel %vm630, %v627, %v629
        %635 = vst [vmem:[#allocation3] sm:$0xf0] %v631
        %636 = vst [vmem:[#allocation3 + $0x8] sm:$0xf0] %v632
        %637 = vst [vmem:[#allocation3 + $0x10] sm:$0xf] %v558
        %638 = vst [vmem:[#allocation3 + $0x18] sm:$0xf] %v559
        %v641 = vrot.slane %v571, 4
        %v642 = vrot.slane %v572, 4
        %645 = vst [vmem:[#allocation3 + $0x10] sm:$0xf0] %v641
        %646 = vst [vmem:[#allocation3 + $0x18] sm:$0xf0] %v642
        %647 = vst [vmem:[#allocation3 + $0x20] sm:$0xf] %v521
        %648 = vst [vmem:[#allocation3 + $0x28] sm:$0xf] %v522
        %v651 = vrot.slane %v590, 4
        %v652 = vrot.slane %v591, 4
        %655 = vst [vmem:[#allocation3 + $0x20] sm:$0xf0] %v651
        %656 = vst [vmem:[#allocation3 + $0x28] sm:$0xf0] %v652
        %657 = vst [vmem:[#allocation3 + $0x30] sm:$0xf] %v603
        %658 = vst [vmem:[#allocation3 + $0x38] sm:$0xf] %v604
        %v659 = vrot.slane %v573, 4
        %v660 = vrot.slane %v574, 4
        %v661 = vrot.slane %v575, 4
        %662 = vrot.lane.b32.xlu0 %v659, 112
        %v663 = vpop.permute.xlu0 %662
        %664 = vrot.lane.b32.xlu0 %v660, 112
        %v665 = vpop.permute.xlu0 %664
        %666 = vrot.lane.b32.xlu0 %v661, 112
        %v667 = vpop.permute.xlu0 %666
        %vm668 = vcmask 916480
        %v669 = vsel %vm668, %v663, %v665
        %v670 = vsel %vm668, %v665, %v667
        %673 = vst [vmem:[#allocation3 + $0x30] sm:$0xf0] %v669
        %674 = vst [vmem:[#allocation3 + $0x38] sm:$0xf0] %v670
        %675 = vst [vmem:[#allocation3 + $0x40] sm:$0xf] %v616
        %676 = vst [vmem:[#allocation3 + $0x48] sm:$0xf] %v617
        %v677 = vld [vmem:[#allocation3] sm:$0xff]
        %v678 = vld [vmem:[#allocation3 + $0x8] sm:$0xff]
        %v679 = vld [vmem:[#allocation3 + $0x10] sm:$0xff]
        %v680 = vld [vmem:[#allocation3 + $0x18] sm:$0xff]
        %v681 = vld [vmem:[#allocation3 + $0x20] sm:$0xff]
        %v682 = vld [vmem:[#allocation3 + $0x28] sm:$0xff]
        %v683 = vld [vmem:[#allocation3 + $0x30] sm:$0xff]
        %v684 = vld [vmem:[#allocation3 + $0x38] sm:$0xff]
        %v685 = vld [vmem:[#allocation3 + $0x40] sm:$0xf]
        %v686 = vld [vmem:[#allocation3 + $0x48] sm:$0xf]
        %688 = vset.pattern.permute.xlu0 36
        %689 = vperm.xlu0 %688, %v618
        %v690 = vpop.permute.xlu0 %689
        %vm692 = vcmask 293888
        %v693 = vsel %vm692, %v618, 0
        %vm695 = vcmask 1043456
        %v697 = vsel %vm695, %v685, 0
        %v700 = vsel %vm695, %v686, 0
        %702 = vmatprep.subr.mxu0 0.0
        %703 = vmatpush1.msra.mxu0 0.0
        %704 = vmatprep.subr.mxu0 0.0
        %705 = vmatpush1.msra.mxu0 0.0
        %706 = vmatprep.subr.mxu0 0.0
        %707 = vmatpush1.msra.mxu0 0.0
        %708 = vmatprep.subr.mxu0 0.0
        %709 = vmatpush1.msra.mxu0 0.0
        %710 = vmatprep.subr.mxu0 0.0
        %711 = vmatpush1.msra.mxu0 0.0
        %712 = vmatprep.subr.mxu0 0.0
        %713 = vmatpush1.msra.mxu0 0.0
        %714 = vmatprep.subr.mxu0 0.0
        %715 = vmatpush1.msra.mxu0 0.0
        %716 = vmatprep.subr.mxu0 0.0
        %717 = vmatpush1.msra.mxu0 0.0
        %718 = vmatprep.subr.mxu0 0.0
        %719 = vmatpush1.msra.mxu0 0.0
        %720 = vmatprep.subr.mxu0 0.0
        %721 = vmatpush1.msra.mxu0 0.0
        %722 = vmatprep.subr.mxu0 0.0
        %723 = vmatpush1.msra.mxu0 0.0
        %724 = vmatprep.subr.mxu0 %v700
        %725 = vmatpush1.msra.mxu0 %v697
        %726 = vmatprep.subr.mxu0 %v684
        %727 = vmatpush1.msra.mxu0 %v683
        %728 = vmatprep.subr.mxu0 %v682
        %729 = vmatpush1.msra.mxu0 %v681
        %730 = vmatprep.subr.mxu0 %v680
        %731 = vmatpush1.msra.mxu0 %v679
        %732 = vmatprep.subr.mxu0 %v678
        %733 = vmatpush1.msra.mxu0 %v677
        %734 = vmatprep.subr.mxu0 0.0
        %735 = vmatpush2.msra.mxu0 0.0
        %736 = vmatprep.subr.mxu0 0.0
        %737 = vmatpush2.msra.mxu0 0.0
        %738 = vmatprep.subr.mxu0 0.0
        %739 = vmatpush2.msra.mxu0 0.0
        %740 = vmatprep.subr.mxu0 0.0
        %741 = vmatpush2.msra.mxu0 0.0
        %742 = vmatprep.subr.mxu0 0.0
        %743 = vmatpush2.msra.mxu0 0.0
        %744 = vmatprep.subr.mxu0 0.0
        %745 = vmatpush2.msra.mxu0 0.0
        %746 = vmatprep.subr.mxu0 0.0
        %747 = vmatpush2.msra.mxu0 0.0
        %748 = vmatprep.subr.mxu0 0.0
        %749 = vmatpush2.msra.mxu0 0.0
        %750 = vmatprep.subr.mxu0 0.0
        %751 = vmatpush2.msra.mxu0 0.0
        %752 = vmatprep.subr.mxu0 0.0
        %753 = vmatpush2.msra.mxu0 0.0
        %754 = vmatprep.subr.mxu0 0.0
        %755 = vmatpush2.msra.mxu0 0.0
        %756 = vmatprep.subr.mxu0 0.0
        %757 = vmatpush2.msra.mxu0 0.0
        %758 = vmatprep.subr.mxu0 0.0
        %759 = vmatpush2.msra.mxu0 0.0
        %760 = vmatprep.subr.mxu0 0.0
        %761 = vmatpush2.msra.mxu0 0.0
        %762 = vmatprep.subr.mxu0 0.0
        %763 = vmatpush2.msra.mxu0 0.0
        %764 = vmatprep.subr.mxu0 0.0
        %765 = vmatpush2.msra.mxu0 0.0
        %766 = vmatprep.mubr.f32.mxu0 0.0
        %767 = vmatmul.mubr.f32.gmra.mxu0 %v693
        %v768 = vpop.f32.mrf.mxu0
        %v769 = vadd.f32 %v690, %v768
        %v770 = vpop.f32.mrf.mxu0
        %v771 = vadd.f32 %v690, %v770
        %772 = vdwg.mxu0
        %v773 = vsub.f32 0.0, %v769
        %v774 = vsub.f32 0.0, %v771
        %v775 = vmul.f32 %v773, 1.442695
        %v776 = vpow.pop %v775
        %v777 = vmul.f32 %v774, 1.442695
        %v778 = vpow.pop %v777
        %v779 = vadd.f32 %v776, 1.0
        %v780 = vadd.f32 %v778, 1.0
        %v781 = vrcp.pop %v779
        %v782 = vmul.f32 1.0, %v781
        %v783 = vrcp.pop %v780
        %v784 = vmul.f32 1.0, %v783
        %v785 = vmul.f32 %v769, %v782
        %v786 = vmul.f32 %v771, %v784
        %787 = vst [vmem:[#allocation2 + $0x8] sm:$0xf] %v785
        %788 = vst [vmem:[#allocation2 + $0x10] sm:$0xf] %v786
        %v789 = vld [vmem:[#allocation2] sm:$0xf]
        %v790 = vld [vmem:[#allocation2 + $0x8] sm:$0xf]
        %v791 = vld [vmem:[#allocation2 + $0x10] sm:$0xf]
        %795 = vrot.lane.b32.xlu0 %v789, 17
        %v796 = vpop.permute.xlu0 %795
        %797 = vrot.lane.b32.xlu0 %v790, 17
        %v798 = vpop.permute.xlu0 %797
        %799 = vrot.lane.b32.xlu0 %v791, 17
        %v800 = vpop.permute.xlu0 %799
        %v801 = vsel %vm536, %v796, %v798
        %v802 = vsel %vm536, %v798, %v800
        %v805 = vsel %vm525, %v801, 0.0
        %v806 = vsel %vm526, %v802, 0.0
        %807 = vrot.lane.b32.xlu0 %v789, 15
        %v808 = vpop.permute.xlu0 %807
        %809 = vrot.lane.b32.xlu0 %v790, 15
        %v810 = vpop.permute.xlu0 %809
        %811 = vrot.lane.b32.xlu0 %v791, 15
        %v812 = vpop.permute.xlu0 %811
        %v813 = vsel %vm553, %v808, %v810
        %v814 = vsel %vm553, %v810, %v812
        %v817 = vsel %vm545, %v813, 0.0
        %v818 = vsel %vm546, %v814, 0.0
        %819 = vrot.lane.b32.xlu0 %v789, 1
        %v820 = vpop.permute.xlu0 %819
        %821 = vrot.lane.b32.xlu0 %v790, 1
        %v822 = vpop.permute.xlu0 %821
        %823 = vrot.lane.b32.xlu0 %v791, 1
        %v824 = vpop.permute.xlu0 %823
        %v825 = vsel %vm566, %v820, %v822
        %v826 = vsel %vm566, %v822, %v824
        %v829 = vsel %vm525, %v825, 0.0
        %v830 = vsel %vm526, %v826, 0.0
        %v831 = vld [vmem:[#allocation2 + $0x8] sm:$0xf]
        %v832 = vld [vmem:[#allocation2 + $0x10] sm:$0xf]
        %v833 = vld [vmem:[#allocation2 + $0x18] sm:$0xf]
        %837 = vrot.lane.b32.xlu0 %v831, 127
        %v838 = vpop.permute.xlu0 %837
        %839 = vrot.lane.b32.xlu0 %v832, 127
        %v840 = vpop.permute.xlu0 %839
        %841 = vrot.lane.b32.xlu0 %v833, 127
        %v842 = vpop.permute.xlu0 %841
        %v843 = vsel %vm585, %v838, %v840
        %v844 = vsel %vm585, %v840, %v842
        %v847 = vsel %vm545, %v843, 0.0
        %v848 = vsel %vm546, %v844, 0.0
        %849 = vrot.lane.b32.xlu0 %v831, 113
        %v850 = vpop.permute.xlu0 %849
        %851 = vrot.lane.b32.xlu0 %v832, 113
        %v852 = vpop.permute.xlu0 %851
        %853 = vrot.lane.b32.xlu0 %v833, 113
        %v854 = vpop.permute.xlu0 %853
        %v855 = vsel %vm598, %v850, %v852
        %v856 = vsel %vm598, %v852, %v854
        %v859 = vsel %vm525, %v855, 0.0
        %v860 = vsel %vm526, %v856, 0.0
        %861 = vrot.lane.b32.xlu0 %v831, 111
        %v862 = vpop.permute.xlu0 %861
        %863 = vrot.lane.b32.xlu0 %v832, 111
        %v864 = vpop.permute.xlu0 %863
        %865 = vrot.lane.b32.xlu0 %v833, 111
        %v866 = vpop.permute.xlu0 %865
        %v867 = vsel %vm611, %v862, %v864
        %v868 = vsel %vm611, %v864, %v866
        %v871 = vsel %vm545, %v867, 0.0
        %v872 = vsel %vm546, %v868, 0.0
        %v873 = vld [vmem:[#allocation7 + $0x38] sm:$0xf]
        %874 = vst [vmem:[#allocation3] sm:$0xf] %v805
        %875 = vst [vmem:[#allocation3 + $0x8] sm:$0xf] %v806
        %v876 = vrot.slane %v789, 4
        %v877 = vrot.slane %v790, 4
        %v878 = vrot.slane %v791, 4
        %879 = vrot.lane.b32.xlu0 %v876, 16
        %v880 = vpop.permute.xlu0 %879
        %881 = vrot.lane.b32.xlu0 %v877, 16
        %v882 = vpop.permute.xlu0 %881
        %883 = vrot.lane.b32.xlu0 %v878, 16
        %v884 = vpop.permute.xlu0 %883
        %v885 = vsel %vm630, %v880, %v882
        %v886 = vsel %vm630, %v882, %v884
        %889 = vst [vmem:[#allocation3] sm:$0xf0] %v885
        %890 = vst [vmem:[#allocation3 + $0x8] sm:$0xf0] %v886
        %891 = vst [vmem:[#allocation3 + $0x10] sm:$0xf] %v817
        %892 = vst [vmem:[#allocation3 + $0x18] sm:$0xf] %v818
        %v895 = vrot.slane %v829, 4
        %v896 = vrot.slane %v830, 4
        %899 = vst [vmem:[#allocation3 + $0x10] sm:$0xf0] %v895
        %900 = vst [vmem:[#allocation3 + $0x18] sm:$0xf0] %v896
        %901 = vst [vmem:[#allocation3 + $0x20] sm:$0xf] %v790
        %902 = vst [vmem:[#allocation3 + $0x28] sm:$0xf] %v791
        %v905 = vrot.slane %v847, 4
        %v906 = vrot.slane %v848, 4
        %909 = vst [vmem:[#allocation3 + $0x20] sm:$0xf0] %v905
        %910 = vst [vmem:[#allocation3 + $0x28] sm:$0xf0] %v906
        %911 = vst [vmem:[#allocation3 + $0x30] sm:$0xf] %v859
        %912 = vst [vmem:[#allocation3 + $0x38] sm:$0xf] %v860
        %v913 = vrot.slane %v831, 4
        %v914 = vrot.slane %v832, 4
        %v915 = vrot.slane %v833, 4
        %916 = vrot.lane.b32.xlu0 %v913, 112
        %v917 = vpop.permute.xlu0 %916
        %918 = vrot.lane.b32.xlu0 %v914, 112
        %v919 = vpop.permute.xlu0 %918
        %920 = vrot.lane.b32.xlu0 %v915, 112
        %v921 = vpop.permute.xlu0 %920
        %v922 = vsel %vm668, %v917, %v919
        %v923 = vsel %vm668, %v919, %v921
        %926 = vst [vmem:[#allocation3 + $0x30] sm:$0xf0] %v922
        %927 = vst [vmem:[#allocation3 + $0x38] sm:$0xf0] %v923
        %928 = vst [vmem:[#allocation3 + $0x40] sm:$0xf] %v871
        %929 = vst [vmem:[#allocation3 + $0x48] sm:$0xf] %v872
        %v930 = vld [vmem:[#allocation3] sm:$0xff]
        %v931 = vld [vmem:[#allocation3 + $0x8] sm:$0xff]
        %v932 = vld [vmem:[#allocation3 + $0x10] sm:$0xff]
        %v933 = vld [vmem:[#allocation3 + $0x18] sm:$0xff]
        %v934 = vld [vmem:[#allocation3 + $0x20] sm:$0xff]
        %v935 = vld [vmem:[#allocation3 + $0x28] sm:$0xff]
        %v936 = vld [vmem:[#allocation3 + $0x30] sm:$0xff]
        %v937 = vld [vmem:[#allocation3 + $0x38] sm:$0xff]
        %v938 = vld [vmem:[#allocation3 + $0x40] sm:$0xf]
        %v939 = vld [vmem:[#allocation3 + $0x48] sm:$0xf]
        %941 = vset.pattern.permute.xlu0 36
        %942 = vperm.xlu0 %941, %v873
        %v943 = vpop.permute.xlu0 %942
        %v945 = vsel %vm692, %v873, 0
        %v948 = vsel %vm695, %v938, 0
        %v951 = vsel %vm695, %v939, 0
        %953 = vmatprep.subr.mxu0 0.0
        %954 = vmatpush1.msra.mxu0 0.0
        %955 = vmatprep.subr.mxu0 0.0
        %956 = vmatpush1.msra.mxu0 0.0
        %957 = vmatprep.subr.mxu0 0.0
        %958 = vmatpush1.msra.mxu0 0.0
        %959 = vmatprep.subr.mxu0 0.0
        %960 = vmatpush1.msra.mxu0 0.0
        %961 = vmatprep.subr.mxu0 0.0
        %962 = vmatpush1.msra.mxu0 0.0
        %963 = vmatprep.subr.mxu0 0.0
        %964 = vmatpush1.msra.mxu0 0.0
        %965 = vmatprep.subr.mxu0 0.0
        %966 = vmatpush1.msra.mxu0 0.0
        %967 = vmatprep.subr.mxu0 0.0
        %968 = vmatpush1.msra.mxu0 0.0
        %969 = vmatprep.subr.mxu0 0.0
        %970 = vmatpush1.msra.mxu0 0.0
        %971 = vmatprep.subr.mxu0 0.0
        %972 = vmatpush1.msra.mxu0 0.0
        %973 = vmatprep.subr.mxu0 0.0
        %974 = vmatpush1.msra.mxu0 0.0
        %975 = vmatprep.subr.mxu0 %v951
        %976 = vmatpush1.msra.mxu0 %v948
        %977 = vmatprep.subr.mxu0 %v937
        %978 = vmatpush1.msra.mxu0 %v936
        %979 = vmatprep.subr.mxu0 %v935
        %980 = vmatpush1.msra.mxu0 %v934
        %981 = vmatprep.subr.mxu0 %v933
        %982 = vmatpush1.msra.mxu0 %v932
        %983 = vmatprep.subr.mxu0 %v931
        %984 = vmatpush1.msra.mxu0 %v930
        %985 = vmatprep.subr.mxu0 0.0
        %986 = vmatpush2.msra.mxu0 0.0
        %987 = vmatprep.subr.mxu0 0.0
        %988 = vmatpush2.msra.mxu0 0.0
        %989 = vmatprep.subr.mxu0 0.0
        %990 = vmatpush2.msra.mxu0 0.0
        %991 = vmatprep.subr.mxu0 0.0
        %992 = vmatpush2.msra.mxu0 0.0
        %993 = vmatprep.subr.mxu0 0.0
        %994 = vmatpush2.msra.mxu0 0.0
        %995 = vmatprep.subr.mxu0 0.0
        %996 = vmatpush2.msra.mxu0 0.0
        %997 = vmatprep.subr.mxu0 0.0
        %998 = vmatpush2.msra.mxu0 0.0
        %999 = vmatprep.subr.mxu0 0.0
        %1000 = vmatpush2.msra.mxu0 0.0
        %1001 = vmatprep.subr.mxu0 0.0
        %1002 = vmatpush2.msra.mxu0 0.0
        %1003 = vmatprep.subr.mxu0 0.0
        %1004 = vmatpush2.msra.mxu0 0.0
        %1005 = vmatprep.subr.mxu0 0.0
        %1006 = vmatpush2.msra.mxu0 0.0
        %1007 = vmatprep.subr.mxu0 0.0
        %1008 = vmatpush2.msra.mxu0 0.0
        %1009 = vmatprep.subr.mxu0 0.0
        %1010 = vmatpush2.msra.mxu0 0.0
        %1011 = vmatprep.subr.mxu0 0.0
        %1012 = vmatpush2.msra.mxu0 0.0
        %1013 = vmatprep.subr.mxu0 0.0
        %1014 = vmatpush2.msra.mxu0 0.0
        %1015 = vmatprep.subr.mxu0 0.0
        %1016 = vmatpush2.msra.mxu0 0.0
        %1017 = vmatprep.mubr.f32.mxu0 0.0
        %1018 = vmatmul.mubr.f32.gmra.mxu0 %v945
        %v1019 = vpop.f32.mrf.mxu0
        %v1020 = vadd.f32 %v943, %v1019
        %v1021 = vpop.f32.mrf.mxu0
        %v1022 = vadd.f32 %v943, %v1021
        %1023 = vdwg.mxu0
        %v1024 = vsub.f32 0.0, %v1020
        %v1025 = vsub.f32 0.0, %v1022
        %v1026 = vmul.f32 %v1024, 1.442695
        %v1027 = vpow.pop %v1026
        %v1028 = vmul.f32 %v1025, 1.442695
        %v1029 = vpow.pop %v1028
        %v1030 = vadd.f32 %v1027, 1.0
        %v1031 = vadd.f32 %v1029, 1.0
        %v1032 = vrcp.pop %v1030
        %v1033 = vmul.f32 1.0, %v1032
        %v1034 = vrcp.pop %v1031
        %v1035 = vmul.f32 1.0, %v1034
        %v1036 = vmul.f32 %v1020, %v1033
        %v1037 = vmul.f32 %v1022, %v1035
        %v1038 = vadd.f32 %v423, %v1036
        %v1039 = vadd.f32 %v424, %v1037
        %v1040 = vld [vmem:[#allocation7 + $0x40] sm:$0xff]
        %1041 = vst [vmem:[#allocation3] sm:$0xf] %v1038
        %1042 = vst [vmem:[#allocation3 + $0x8] sm:$0xf] %v1039
        %v1045 = vrot.slane %v516, 4
        %v1046 = vrot.slane %v517, 4
        %1049 = vst [vmem:[#allocation3] sm:$0xf0] %v1045
        %1050 = vst [vmem:[#allocation3 + $0x8] sm:$0xf0] %v1046
        %v1051 = vld [vmem:[#allocation3] sm:$0xff]
        %v1052 = vld [vmem:[#allocation3 + $0x8] sm:$0xff]
        %1054 = vset.pattern.permute.xlu0 8
        %1055 = vperm.xlu0 %1054, %v1040
        %v1056 = vpop.permute.xlu0 %1055
        %v1058 = vsel %vm222, %v1040, 0
        %1060 = vmatprep.subr.mxu0 0.0
        %1061 = vmatpush1.msra.mxu0 0.0
        %1062 = vmatprep.subr.mxu0 0.0
        %1063 = vmatpush1.msra.mxu0 0.0
        %1064 = vmatprep.subr.mxu0 0.0
        %1065 = vmatpush1.msra.mxu0 0.0
        %1066 = vmatprep.subr.mxu0 0.0
        %1067 = vmatpush1.msra.mxu0 0.0
        %1068 = vmatprep.subr.mxu0 0.0
        %1069 = vmatpush1.msra.mxu0 0.0
        %1070 = vmatprep.subr.mxu0 0.0
        %1071 = vmatpush1.msra.mxu0 0.0
        %1072 = vmatprep.subr.mxu0 0.0
        %1073 = vmatpush1.msra.mxu0 0.0
        %1074 = vmatprep.subr.mxu0 0.0
        %1075 = vmatpush1.msra.mxu0 0.0
        %1076 = vmatprep.subr.mxu0 0.0
        %1077 = vmatpush1.msra.mxu0 0.0
        %1078 = vmatprep.subr.mxu0 0.0
        %1079 = vmatpush1.msra.mxu0 0.0
        %1080 = vmatprep.subr.mxu0 0.0
        %1081 = vmatpush1.msra.mxu0 0.0
        %1082 = vmatprep.subr.mxu0 0.0
        %1083 = vmatpush1.msra.mxu0 0.0
        %1084 = vmatprep.subr.mxu0 0.0
        %1085 = vmatpush1.msra.mxu0 0.0
        %1086 = vmatprep.subr.mxu0 0.0
        %1087 = vmatpush1.msra.mxu0 0.0
        %1088 = vmatprep.subr.mxu0 0.0
        %1089 = vmatpush1.msra.mxu0 0.0
        %1090 = vmatprep.subr.mxu0 %v1052
        %1091 = vmatpush1.msra.mxu0 %v1051
        %1092 = vmatprep.subr.mxu0 0.0
        %1093 = vmatpush2.msra.mxu0 0.0
        %1094 = vmatprep.subr.mxu0 0.0
        %1095 = vmatpush2.msra.mxu0 0.0
        %1096 = vmatprep.subr.mxu0 0.0
        %1097 = vmatpush2.msra.mxu0 0.0
        %1098 = vmatprep.subr.mxu0 0.0
        %1099 = vmatpush2.msra.mxu0 0.0
        %1100 = vmatprep.subr.mxu0 0.0
        %1101 = vmatpush2.msra.mxu0 0.0
        %1102 = vmatprep.subr.mxu0 0.0
        %1103 = vmatpush2.msra.mxu0 0.0
        %1104 = vmatprep.subr.mxu0 0.0
        %1105 = vmatpush2.msra.mxu0 0.0
        %1106 = vmatprep.subr.mxu0 0.0
        %1107 = vmatpush2.msra.mxu0 0.0
        %1108 = vmatprep.subr.mxu0 0.0
        %1109 = vmatpush2.msra.mxu0 0.0
        %1110 = vmatprep.subr.mxu0 0.0
        %1111 = vmatpush2.msra.mxu0 0.0
        %1112 = vmatprep.subr.mxu0 0.0
        %1113 = vmatpush2.msra.mxu0 0.0
        %1114 = vmatprep.subr.mxu0 0.0
        %1115 = vmatpush2.msra.mxu0 0.0
        %1116 = vmatprep.subr.mxu0 0.0
        %1117 = vmatpush2.msra.mxu0 0.0
        %1118 = vmatprep.subr.mxu0 0.0
        %1119 = vmatpush2.msra.mxu0 0.0
        %1120 = vmatprep.subr.mxu0 0.0
        %1121 = vmatpush2.msra.mxu0 0.0
        %1122 = vmatprep.subr.mxu0 0.0
        %1123 = vmatpush2.msra.mxu0 0.0
        %1124 = vmatprep.mubr.f32.mxu0 0.0
        %1125 = vmatmul.mubr.f32.gmra.mxu0 %v1058
        %v1126 = vpop.f32.mrf.mxu0
        %v1127 = vadd.f32 %v1056, %v1126
        %v1128 = vpop.f32.mrf.mxu0
        %v1129 = vadd.f32 %v1056, %v1128
        %1130 = vdwg.mxu0
        %v1131 = vsub.f32 0.0, %v1127
        %v1132 = vsub.f32 0.0, %v1129
        %v1133 = vmul.f32 %v1131, 1.442695
        %v1134 = vpow.pop %v1133
        %v1135 = vmul.f32 %v1132, 1.442695
        %v1136 = vpow.pop %v1135
        %v1137 = vadd.f32 %v1134, 1.0
        %v1138 = vadd.f32 %v1136, 1.0
        %v1139 = vrcp.pop %v1137
        %v1140 = vmul.f32 1.0, %v1139
        %v1141 = vrcp.pop %v1138
        %v1142 = vmul.f32 1.0, %v1141
        %v1143 = vmul.f32 %v1127, %v1140
        %v1144 = vmul.f32 %v1129, %v1142
        %1145 = vst [vmem:[#allocation2 + $0x8] sm:$0xff] %v1143
        %1146 = vst [vmem:[#allocation2 + $0x10] sm:$0xff] %v1144
        %v1147 = vld [vmem:[#allocation2] sm:$0xff]
        %v1148 = vld [vmem:[#allocation2 + $0x8] sm:$0xff]
        %v1149 = vld [vmem:[#allocation2 + $0x10] sm:$0xff]
        %1153 = vrot.lane.b32.xlu0 %v1147, 17
        %v1154 = vpop.permute.xlu0 %1153
        %1155 = vrot.lane.b32.xlu0 %v1148, 17
        %v1156 = vpop.permute.xlu0 %1155
        %1157 = vrot.lane.b32.xlu0 %v1149, 17
        %v1158 = vpop.permute.xlu0 %1157
        %v1159 = vsel %vm536, %v1154, %v1156
        %v1160 = vsel %vm536, %v1156, %v1158
        %v1163 = vsel %vm525, %v1159, 0.0
        %v1164 = vsel %vm526, %v1160, 0.0
        %1165 = vrot.lane.b32.xlu0 %v1147, 15
        %v1166 = vpop.permute.xlu0 %1165
        %1167 = vrot.lane.b32.xlu0 %v1148, 15
        %v1168 = vpop.permute.xlu0 %1167
        %1169 = vrot.lane.b32.xlu0 %v1149, 15
        %v1170 = vpop.permute.xlu0 %1169
        %v1171 = vsel %vm553, %v1166, %v1168
        %v1172 = vsel %vm553, %v1168, %v1170
        %v1175 = vsel %vm545, %v1171, 0.0
        %v1176 = vsel %vm546, %v1172, 0.0
        %1177 = vrot.lane.b32.xlu0 %v1147, 1
        %v1178 = vpop.permute.xlu0 %1177
        %1179 = vrot.lane.b32.xlu0 %v1148, 1
        %v1180 = vpop.permute.xlu0 %1179
        %1181 = vrot.lane.b32.xlu0 %v1149, 1
        %v1182 = vpop.permute.xlu0 %1181
        %v1183 = vsel %vm566, %v1178, %v1180
        %v1184 = vsel %vm566, %v1180, %v1182
        %v1187 = vsel %vm525, %v1183, 0.0
        %v1188 = vsel %vm526, %v1184, 0.0
        %v1189 = vld [vmem:[#allocation2 + $0x8] sm:$0xff]
        %v1190 = vld [vmem:[#allocation2 + $0x10] sm:$0xff]
        %v1191 = vld [vmem:[#allocation2 + $0x18] sm:$0xff]
        %1195 = vrot.lane.b32.xlu0 %v1189, 127
        %v1196 = vpop.permute.xlu0 %1195
        %1197 = vrot.lane.b32.xlu0 %v1190, 127
        %v1198 = vpop.permute.xlu0 %1197
        %1199 = vrot.lane.b32.xlu0 %v1191, 127
        %v1200 = vpop.permute.xlu0 %1199
        %v1201 = vsel %vm585, %v1196, %v1198
        %v1202 = vsel %vm585, %v1198, %v1200
        %v1205 = vsel %vm545, %v1201, 0.0
        %v1206 = vsel %vm546, %v1202, 0.0
        %1207 = vrot.lane.b32.xlu0 %v1189, 113
        %v1208 = vpop.permute.xlu0 %1207
        %1209 = vrot.lane.b32.xlu0 %v1190, 113
        %v1210 = vpop.permute.xlu0 %1209
        %1211 = vrot.lane.b32.xlu0 %v1191, 113
        %v1212 = vpop.permute.xlu0 %1211
        %v1213 = vsel %vm598, %v1208, %v1210
        %v1214 = vsel %vm598, %v1210, %v1212
        %v1217 = vsel %vm525, %v1213, 0.0
        %v1218 = vsel %vm526, %v1214, 0.0
        %1219 = vrot.lane.b32.xlu0 %v1189, 111
        %v1220 = vpop.permute.xlu0 %1219
        %1221 = vrot.lane.b32.xlu0 %v1190, 111
        %v1222 = vpop.permute.xlu0 %1221
        %1223 = vrot.lane.b32.xlu0 %v1191, 111
        %v1224 = vpop.permute.xlu0 %1223
        %v1225 = vsel %vm611, %v1220, %v1222
        %v1226 = vsel %vm611, %v1222, %v1224
        %v1229 = vsel %vm545, %v1225, 0.0
        %v1230 = vsel %vm546, %v1226, 0.0
        %v1231 = vld [vmem:[#allocation7 + $0x48] sm:$0xff]
        %1232 = vst [vmem:[#allocation3] sm:$0xff] %v1163
        %1233 = vst [vmem:[#allocation3 + $0x8] sm:$0xff] %v1164
        %1234 = vrot.lane.b32.xlu0 %v1147, 16
        %v1235 = vpop.permute.xlu0 %1234
        %1236 = vrot.lane.b32.xlu0 %v1148, 16
        %v1237 = vpop.permute.xlu0 %1236
        %1238 = vrot.lane.b32.xlu0 %v1149, 16
        %v1239 = vpop.permute.xlu0 %1238
        %v1240 = vsel %vm630, %v1235, %v1237
        %v1241 = vsel %vm630, %v1237, %v1239
        %1244 = vst [vmem:[#allocation3 + $0x10] sm:$0xff] %v1240
        %1245 = vst [vmem:[#allocation3 + $0x18] sm:$0xff] %v1241
        %1246 = vst [vmem:[#allocation3 + $0x20] sm:$0xff] %v1175
        %1247 = vst [vmem:[#allocation3 + $0x28] sm:$0xff] %v1176
        %1248 = vst [vmem:[#allocation3 + $0x30] sm:$0xff] %v1187
        %1249 = vst [vmem:[#allocation3 + $0x38] sm:$0xff] %v1188
        %1250 = vst [vmem:[#allocation3 + $0x40] sm:$0xff] %v1148
        %1251 = vst [vmem:[#allocation3 + $0x48] sm:$0xff] %v1149
        %1252 = vst [vmem:[#allocation3 + $0x50] sm:$0xff] %v1205
        %1253 = vst [vmem:[#allocation3 + $0x58] sm:$0xff] %v1206
        %1254 = vst [vmem:[#allocation3 + $0x60] sm:$0xff] %v1217
        %1255 = vst [vmem:[#allocation3 + $0x68] sm:$0xff] %v1218
        %1256 = vrot.lane.b32.xlu0 %v1189, 112
        %v1257 = vpop.permute.xlu0 %1256
        %1258 = vrot.lane.b32.xlu0 %v1190, 112
        %v1259 = vpop.permute.xlu0 %1258
        %1260 = vrot.lane.b32.xlu0 %v1191, 112
        %v1261 = vpop.permute.xlu0 %1260
        %v1262 = vsel %vm668, %v1257, %v1259
        %v1263 = vsel %vm668, %v1259, %v1261
        %1266 = vst [vmem:[#allocation3 + $0x70] sm:$0xff] %v1262
        %1267 = vst [vmem:[#allocation3 + $0x78] sm:$0xff] %v1263
        %1268 = vst [vmem:[#allocation3 + $0x80] sm:$0xff] %v1229
        %1269 = vst [vmem:[#allocation3 + $0x88] sm:$0xff] %v1230
        %v1270 = vld [vmem:[#allocation3] sm:$0xff]
        %v1271 = vld [vmem:[#allocation3 + $0x8] sm:$0xff]
        %v1272 = vld [vmem:[#allocation3 + $0x10] sm:$0xff]
        %v1273 = vld [vmem:[#allocation3 + $0x18] sm:$0xff]
        %v1274 = vld [vmem:[#allocation3 + $0x20] sm:$0xff]
        %v1275 = vld [vmem:[#allocation3 + $0x28] sm:$0xff]
        %v1276 = vld [vmem:[#allocation3 + $0x30] sm:$0xff]
        %v1277 = vld [vmem:[#allocation3 + $0x38] sm:$0xff]
        %v1278 = vld [vmem:[#allocation3 + $0x40] sm:$0xff]
        %v1279 = vld [vmem:[#allocation3 + $0x48] sm:$0xff]
        %v1280 = vld [vmem:[#allocation3 + $0x50] sm:$0xff]
        %v1281 = vld [vmem:[#allocation3 + $0x58] sm:$0xff]
        %v1282 = vld [vmem:[#allocation3 + $0x60] sm:$0xff]
        %v1283 = vld [vmem:[#allocation3 + $0x68] sm:$0xff]
        %v1284 = vld [vmem:[#allocation3 + $0x70] sm:$0xff]
        %v1285 = vld [vmem:[#allocation3 + $0x78] sm:$0xff]
        %v1286 = vld [vmem:[#allocation3 + $0x80] sm:$0xff]
        %v1287 = vld [vmem:[#allocation3 + $0x88] sm:$0xff]
        %1289 = vset.pattern.permute.xlu0 72
        %1290 = vperm.xlu0 %1289, %v1231
        %v1291 = vpop.permute.xlu0 %1290
        %vm1293 = vcmask 588800
        %v1294 = vsel %vm1293, %v1231, 0
        %1296 = vmatprep.subr.mxu0 0.0
        %1297 = vmatpush1.msra.mxu0 0.0
        %1298 = vmatprep.subr.mxu0 0.0
        %1299 = vmatpush1.msra.mxu0 0.0
        %1300 = vmatprep.subr.mxu0 0.0
        %1301 = vmatpush1.msra.mxu0 0.0
        %1302 = vmatprep.subr.mxu0 0.0
        %1303 = vmatpush1.msra.mxu0 0.0
        %1304 = vmatprep.subr.mxu0 0.0
        %1305 = vmatpush1.msra.mxu0 0.0
        %1306 = vmatprep.subr.mxu0 0.0
        %1307 = vmatpush1.msra.mxu0 0.0
        %1308 = vmatprep.subr.mxu0 0.0
        %1309 = vmatpush1.msra.mxu0 0.0
        %1310 = vmatprep.subr.mxu0 %v1287
        %1311 = vmatpush1.msra.mxu0 %v1286
        %1312 = vmatprep.subr.mxu0 %v1285
        %1313 = vmatpush1.msra.mxu0 %v1284
        %1314 = vmatprep.subr.mxu0 %v1283
        %1315 = vmatpush1.msra.mxu0 %v1282
        %1316 = vmatprep.subr.mxu0 %v1281
        %1317 = vmatpush1.msra.mxu0 %v1280
        %1318 = vmatprep.subr.mxu0 %v1279
        %1319 = vmatpush1.msra.mxu0 %v1278
        %1320 = vmatprep.subr.mxu0 %v1277
        %1321 = vmatpush1.msra.mxu0 %v1276
        %1322 = vmatprep.subr.mxu0 %v1275
        %1323 = vmatpush1.msra.mxu0 %v1274
        %1324 = vmatprep.subr.mxu0 %v1273
        %1325 = vmatpush1.msra.mxu0 %v1272
        %1326 = vmatprep.subr.mxu0 %v1271
        %1327 = vmatpush1.msra.mxu0 %v1270
        %1328 = vmatprep.subr.mxu0 0.0
        %1329 = vmatpush2.msra.mxu0 0.0
        %1330 = vmatprep.subr.mxu0 0.0
        %1331 = vmatpush2.msra.mxu0 0.0
        %1332 = vmatprep.subr.mxu0 0.0
        %1333 = vmatpush2.msra.mxu0 0.0
        %1334 = vmatprep.subr.mxu0 0.0
        %1335 = vmatpush2.msra.mxu0 0.0
        %1336 = vmatprep.subr.mxu0 0.0
        %1337 = vmatpush2.msra.mxu0 0.0
        %1338 = vmatprep.subr.mxu0 0.0
        %1339 = vmatpush2.msra.mxu0 0.0
        %1340 = vmatprep.subr.mxu0 0.0
        %1341 = vmatpush2.msra.mxu0 0.0
        %1342 = vmatprep.subr.mxu0 0.0
        %1343 = vmatpush2.msra.mxu0 0.0
        %1344 = vmatprep.subr.mxu0 0.0
        %1345 = vmatpush2.msra.mxu0 0.0
        %1346 = vmatprep.subr.mxu0 0.0
        %1347 = vmatpush2.msra.mxu0 0.0
        %1348 = vmatprep.subr.mxu0 0.0
        %1349 = vmatpush2.msra.mxu0 0.0
        %1350 = vmatprep.subr.mxu0 0.0
        %1351 = vmatpush2.msra.mxu0 0.0
        %1352 = vmatprep.subr.mxu0 0.0
        %1353 = vmatpush2.msra.mxu0 0.0
        %1354 = vmatprep.subr.mxu0 0.0
        %1355 = vmatpush2.msra.mxu0 0.0
        %1356 = vmatprep.subr.mxu0 0.0
        %1357 = vmatpush2.msra.mxu0 0.0
        %1358 = vmatprep.subr.mxu0 0.0
        %1359 = vmatpush2.msra.mxu0 0.0
        %1360 = vmatprep.mubr.f32.mxu0 0.0
        %1361 = vmatmul.mubr.f32.gmra.mxu0 %v1294
        %v1362 = vpop.f32.mrf.mxu0
        %v1363 = vadd.f32 %v1291, %v1362
        %v1364 = vpop.f32.mrf.mxu0
        %v1365 = vadd.f32 %v1291, %v1364
        %1366 = vdwg.mxu0
        %v1367 = vsub.f32 0.0, %v1363
        %v1368 = vsub.f32 0.0, %v1365
        %v1369 = vmul.f32 %v1367, 1.442695
        %v1370 = vpow.pop %v1369
        %v1371 = vmul.f32 %v1368, 1.442695
        %v1372 = vpow.pop %v1371
        %v1373 = vadd.f32 %v1370, 1.0
        %v1374 = vadd.f32 %v1372, 1.0
        %v1375 = vrcp.pop %v1373
        %v1376 = vmul.f32 1.0, %v1375
        %v1377 = vrcp.pop %v1374
        %v1378 = vmul.f32 1.0, %v1377
        %v1379 = vmul.f32 %v1363, %v1376
        %v1380 = vmul.f32 %v1365, %v1378
        %v1381 = vld [vmem:[#allocation7 + $0x50] sm:$0xf]
        %1383 = vset.pattern.permute.xlu0 8
        %1384 = vperm.xlu0 %1383, %v1381
        %v1385 = vpop.permute.xlu0 %1384
        %v1387 = vsel %vm222, %v1381, 0
        %1389 = vmatprep.subr.mxu0 0.0
        %1390 = vmatpush1.msra.mxu0 0.0
        %1391 = vmatprep.subr.mxu0 0.0
        %1392 = vmatpush1.msra.mxu0 0.0
        %1393 = vmatprep.subr.mxu0 0.0
        %1394 = vmatpush1.msra.mxu0 0.0
        %1395 = vmatprep.subr.mxu0 0.0
        %1396 = vmatpush1.msra.mxu0 0.0
        %1397 = vmatprep.subr.mxu0 0.0
        %1398 = vmatpush1.msra.mxu0 0.0
        %1399 = vmatprep.subr.mxu0 0.0
        %1400 = vmatpush1.msra.mxu0 0.0
        %1401 = vmatprep.subr.mxu0 0.0
        %1402 = vmatpush1.msra.mxu0 0.0
        %1403 = vmatprep.subr.mxu0 0.0
        %1404 = vmatpush1.msra.mxu0 0.0
        %1405 = vmatprep.subr.mxu0 0.0
        %1406 = vmatpush1.msra.mxu0 0.0
        %1407 = vmatprep.subr.mxu0 0.0
        %1408 = vmatpush1.msra.mxu0 0.0
        %1409 = vmatprep.subr.mxu0 0.0
        %1410 = vmatpush1.msra.mxu0 0.0
        %1411 = vmatprep.subr.mxu0 0.0
        %1412 = vmatpush1.msra.mxu0 0.0
        %1413 = vmatprep.subr.mxu0 0.0
        %1414 = vmatpush1.msra.mxu0 0.0
        %1415 = vmatprep.subr.mxu0 0.0
        %1416 = vmatpush1.msra.mxu0 0.0
        %1417 = vmatprep.subr.mxu0 0.0
        %1418 = vmatpush1.msra.mxu0 0.0
        %1419 = vmatprep.subr.mxu0 %v1380
        %1420 = vmatpush1.msra.mxu0 %v1379
        %1421 = vmatprep.subr.mxu0 0.0
        %1422 = vmatpush2.msra.mxu0 0.0
        %1423 = vmatprep.subr.mxu0 0.0
        %1424 = vmatpush2.msra.mxu0 0.0
        %1425 = vmatprep.subr.mxu0 0.0
        %1426 = vmatpush2.msra.mxu0 0.0
        %1427 = vmatprep.subr.mxu0 0.0
        %1428 = vmatpush2.msra.mxu0 0.0
        %1429 = vmatprep.subr.mxu0 0.0
        %1430 = vmatpush2.msra.mxu0 0.0
        %1431 = vmatprep.subr.mxu0 0.0
        %1432 = vmatpush2.msra.mxu0 0.0
        %1433 = vmatprep.subr.mxu0 0.0
        %1434 = vmatpush2.msra.mxu0 0.0
        %1435 = vmatprep.subr.mxu0 0.0
        %1436 = vmatpush2.msra.mxu0 0.0
        %1437 = vmatprep.subr.mxu0 0.0
        %1438 = vmatpush2.msra.mxu0 0.0
        %1439 = vmatprep.subr.mxu0 0.0
        %1440 = vmatpush2.msra.mxu0 0.0
        %1441 = vmatprep.subr.mxu0 0.0
        %1442 = vmatpush2.msra.mxu0 0.0
        %1443 = vmatprep.subr.mxu0 0.0
        %1444 = vmatpush2.msra.mxu0 0.0
        %1445 = vmatprep.subr.mxu0 0.0
        %1446 = vmatpush2.msra.mxu0 0.0
        %1447 = vmatprep.subr.mxu0 0.0
        %1448 = vmatpush2.msra.mxu0 0.0
        %1449 = vmatprep.subr.mxu0 0.0
        %1450 = vmatpush2.msra.mxu0 0.0
        %1451 = vmatprep.subr.mxu0 0.0
        %1452 = vmatpush2.msra.mxu0 0.0
        %1453 = vmatprep.mubr.f32.mxu0 0.0
        %1454 = vmatmul.mubr.f32.gmra.mxu0 %v1387
        %v1455 = vpop.f32.mrf.mxu0
        %v1456 = vadd.f32 %v1385, %v1455
        %v1457 = vpop.f32.mrf.mxu0
        %v1458 = vadd.f32 %v1385, %v1457
        %1459 = vdwg.mxu0
        %v1460 = vsub.f32 0.0, %v1456
        %v1461 = vsub.f32 0.0, %v1458
        %v1462 = vmul.f32 %v1460, 1.442695
        %v1463 = vpow.pop %v1462
        %v1464 = vmul.f32 %v1461, 1.442695
        %v1465 = vpow.pop %v1464
        %v1466 = vadd.f32 %v1463, 1.0
        %v1467 = vadd.f32 %v1465, 1.0
        %v1468 = vrcp.pop %v1466
        %v1469 = vmul.f32 1.0, %v1468
        %v1470 = vrcp.pop %v1467
        %v1471 = vmul.f32 1.0, %v1470
        %v1472 = vmul.f32 %v1456, %v1469
        %v1473 = vmul.f32 %v1458, %v1471
        %v1474 = vld [vmem:[#allocation7 + $0x58] sm:$0xf]
        %1476 = vset.pattern.permute.xlu0 8
        %1477 = vperm.xlu0 %1476, %v1474
        %v1478 = vpop.permute.xlu0 %1477
        %v1480 = vsel %vm222, %v1474, 0
        %1482 = vmatprep.subr.mxu0 0.0
        %1483 = vmatpush1.msra.mxu0 0.0
        %1484 = vmatprep.subr.mxu0 0.0
        %1485 = vmatpush1.msra.mxu0 0.0
        %1486 = vmatprep.subr.mxu0 0.0
        %1487 = vmatpush1.msra.mxu0 0.0
        %1488 = vmatprep.subr.mxu0 0.0
        %1489 = vmatpush1.msra.mxu0 0.0
        %1490 = vmatprep.subr.mxu0 0.0
        %1491 = vmatpush1.msra.mxu0 0.0
        %1492 = vmatprep.subr.mxu0 0.0
        %1493 = vmatpush1.msra.mxu0 0.0
        %1494 = vmatprep.subr.mxu0 0.0
        %1495 = vmatpush1.msra.mxu0 0.0
        %1496 = vmatprep.subr.mxu0 0.0
        %1497 = vmatpush1.msra.mxu0 0.0
        %1498 = vmatprep.subr.mxu0 0.0
        %1499 = vmatpush1.msra.mxu0 0.0
        %1500 = vmatprep.subr.mxu0 0.0
        %1501 = vmatpush1.msra.mxu0 0.0
        %1502 = vmatprep.subr.mxu0 0.0
        %1503 = vmatpush1.msra.mxu0 0.0
        %1504 = vmatprep.subr.mxu0 0.0
        %1505 = vmatpush1.msra.mxu0 0.0
        %1506 = vmatprep.subr.mxu0 0.0
        %1507 = vmatpush1.msra.mxu0 0.0
        %1508 = vmatprep.subr.mxu0 0.0
        %1509 = vmatpush1.msra.mxu0 0.0
        %1510 = vmatprep.subr.mxu0 0.0
        %1511 = vmatpush1.msra.mxu0 0.0
        %1512 = vmatprep.subr.mxu0 %v1380
        %1513 = vmatpush1.msra.mxu0 %v1379
        %1514 = vmatprep.subr.mxu0 0.0
        %1515 = vmatpush2.msra.mxu0 0.0
        %1516 = vmatprep.subr.mxu0 0.0
        %1517 = vmatpush2.msra.mxu0 0.0
        %1518 = vmatprep.subr.mxu0 0.0
        %1519 = vmatpush2.msra.mxu0 0.0
        %1520 = vmatprep.subr.mxu0 0.0
        %1521 = vmatpush2.msra.mxu0 0.0
        %1522 = vmatprep.subr.mxu0 0.0
        %1523 = vmatpush2.msra.mxu0 0.0
        %1524 = vmatprep.subr.mxu0 0.0
        %1525 = vmatpush2.msra.mxu0 0.0
        %1526 = vmatprep.subr.mxu0 0.0
        %1527 = vmatpush2.msra.mxu0 0.0
        %1528 = vmatprep.subr.mxu0 0.0
        %1529 = vmatpush2.msra.mxu0 0.0
        %1530 = vmatprep.subr.mxu0 0.0
        %1531 = vmatpush2.msra.mxu0 0.0
        %1532 = vmatprep.subr.mxu0 0.0
        %1533 = vmatpush2.msra.mxu0 0.0
        %1534 = vmatprep.subr.mxu0 0.0
        %1535 = vmatpush2.msra.mxu0 0.0
        %1536 = vmatprep.subr.mxu0 0.0
        %1537 = vmatpush2.msra.mxu0 0.0
        %1538 = vmatprep.subr.mxu0 0.0
        %1539 = vmatpush2.msra.mxu0 0.0
        %1540 = vmatprep.subr.mxu0 0.0
        %1541 = vmatpush2.msra.mxu0 0.0
        %1542 = vmatprep.subr.mxu0 0.0
        %1543 = vmatpush2.msra.mxu0 0.0
        %1544 = vmatprep.subr.mxu0 0.0
        %1545 = vmatpush2.msra.mxu0 0.0
        %1546 = vmatprep.mubr.f32.mxu0 0.0
        %1547 = vmatmul.mubr.f32.gmra.mxu0 %v1480
        %v1548 = vpop.f32.mrf.mxu0
        %v1549 = vadd.f32 %v1478, %v1548
        %v1550 = vpop.f32.mrf.mxu0
        %v1551 = vadd.f32 %v1478, %v1550
        %1552 = vdwg.mxu0
        %v1553 = vsub.f32 0.0, %v1549
        %v1554 = vsub.f32 0.0, %v1551
        %v1555 = vmul.f32 %v1553, 1.442695
        %v1556 = vpow.pop %v1555
        %v1557 = vmul.f32 %v1554, 1.442695
        %v1558 = vpow.pop %v1557
        %v1559 = vadd.f32 %v1556, 1.0
        %v1560 = vadd.f32 %v1558, 1.0
        %v1561 = vrcp.pop %v1559
        %v1562 = vmul.f32 1.0, %v1561
        %v1563 = vrcp.pop %v1560
        %v1564 = vmul.f32 1.0, %v1563
        %v1565 = vmul.f32 %v1549, %v1562
        %v1566 = vmul.f32 %v1551, %v1564
        %1567 = vst [vmem:[#allocation2 + $0x8] sm:$0xf] %v1472
        %1568 = vst [vmem:[#allocation2 + $0x10] sm:$0xf] %v1473
        %v1569 = vld [vmem:[#allocation2] sm:$0xf]
        %v1570 = vld [vmem:[#allocation2 + $0x8] sm:$0xf]
        %v1571 = vld [vmem:[#allocation2 + $0x10] sm:$0xf]
        %1575 = vrot.lane.b32.xlu0 %v1569, 17
        %v1576 = vpop.permute.xlu0 %1575
        %1577 = vrot.lane.b32.xlu0 %v1570, 17
        %v1578 = vpop.permute.xlu0 %1577
        %1579 = vrot.lane.b32.xlu0 %v1571, 17
        %v1580 = vpop.permute.xlu0 %1579
        %v1581 = vsel %vm536, %v1576, %v1578
        %v1582 = vsel %vm536, %v1578, %v1580
        %v1585 = vsel %vm525, %v1581, 0.0
        %v1586 = vsel %vm526, %v1582, 0.0
        %1587 = vrot.lane.b32.xlu0 %v1569, 15
        %v1588 = vpop.permute.xlu0 %1587
        %1589 = vrot.lane.b32.xlu0 %v1570, 15
        %v1590 = vpop.permute.xlu0 %1589
        %1591 = vrot.lane.b32.xlu0 %v1571, 15
        %v1592 = vpop.permute.xlu0 %1591
        %v1593 = vsel %vm553, %v1588, %v1590
        %v1594 = vsel %vm553, %v1590, %v1592
        %v1597 = vsel %vm545, %v1593, 0.0
        %v1598 = vsel %vm546, %v1594, 0.0
        %1599 = vrot.lane.b32.xlu0 %v1569, 1
        %v1600 = vpop.permute.xlu0 %1599
        %1601 = vrot.lane.b32.xlu0 %v1570, 1
        %v1602 = vpop.permute.xlu0 %1601
        %1603 = vrot.lane.b32.xlu0 %v1571, 1
        %v1604 = vpop.permute.xlu0 %1603
        %v1605 = vsel %vm566, %v1600, %v1602
        %v1606 = vsel %vm566, %v1602, %v1604
        %v1609 = vsel %vm525, %v1605, 0.0
        %v1610 = vsel %vm526, %v1606, 0.0
        %v1611 = vld [vmem:[#allocation2 + $0x8] sm:$0xf]
        %v1612 = vld [vmem:[#allocation2 + $0x10] sm:$0xf]
        %v1613 = vld [vmem:[#allocation2 + $0x18] sm:$0xf]
        %1617 = vrot.lane.b32.xlu0 %v1611, 127
        %v1618 = vpop.permute.xlu0 %1617
        %1619 = vrot.lane.b32.xlu0 %v1612, 127
        %v1620 = vpop.permute.xlu0 %1619
        %1621 = vrot.lane.b32.xlu0 %v1613, 127
        %v1622 = vpop.permute.xlu0 %1621
        %v1623 = vsel %vm585, %v1618, %v1620
        %v1624 = vsel %vm585, %v1620, %v1622
        %v1627 = vsel %vm545, %v1623, 0.0
        %v1628 = vsel %vm546, %v1624, 0.0
        %1629 = vrot.lane.b32.xlu0 %v1611, 113
        %v1630 = vpop.permute.xlu0 %1629
        %1631 = vrot.lane.b32.xlu0 %v1612, 113
        %v1632 = vpop.permute.xlu0 %1631
        %1633 = vrot.lane.b32.xlu0 %v1613, 113
        %v1634 = vpop.permute.xlu0 %1633
        %v1635 = vsel %vm598, %v1630, %v1632
        %v1636 = vsel %vm598, %v1632, %v1634
        %v1639 = vsel %vm525, %v1635, 0.0
        %v1640 = vsel %vm526, %v1636, 0.0
        %1641 = vrot.lane.b32.xlu0 %v1611, 111
        %v1642 = vpop.permute.xlu0 %1641
        %1643 = vrot.lane.b32.xlu0 %v1612, 111
        %v1644 = vpop.permute.xlu0 %1643
        %1645 = vrot.lane.b32.xlu0 %v1613, 111
        %v1646 = vpop.permute.xlu0 %1645
        %v1647 = vsel %vm611, %v1642, %v1644
        %v1648 = vsel %vm611, %v1644, %v1646
        %v1651 = vsel %vm545, %v1647, 0.0
        %v1652 = vsel %vm546, %v1648, 0.0
        %v1653 = vld [vmem:[#allocation7 + $0x60] sm:$0xf]
        %1654 = vst [vmem:[#allocation3] sm:$0xf] %v1585
        %1655 = vst [vmem:[#allocation3 + $0x8] sm:$0xf] %v1586
        %v1656 = vrot.slane %v1569, 4
        %v1657 = vrot.slane %v1570, 4
        %v1658 = vrot.slane %v1571, 4
        %1659 = vrot.lane.b32.xlu0 %v1656, 16
        %v1660 = vpop.permute.xlu0 %1659
        %1661 = vrot.lane.b32.xlu0 %v1657, 16
        %v1662 = vpop.permute.xlu0 %1661
        %1663 = vrot.lane.b32.xlu0 %v1658, 16
        %v1664 = vpop.permute.xlu0 %1663
        %v1665 = vsel %vm630, %v1660, %v1662
        %v1666 = vsel %vm630, %v1662, %v1664
        %1669 = vst [vmem:[#allocation3] sm:$0xf0] %v1665
        %1670 = vst [vmem:[#allocation3 + $0x8] sm:$0xf0] %v1666
        %1671 = vst [vmem:[#allocation3 + $0x10] sm:$0xf] %v1597
        %1672 = vst [vmem:[#allocation3 + $0x18] sm:$0xf] %v1598
        %v1675 = vrot.slane %v1609, 4
        %v1676 = vrot.slane %v1610, 4
        %1679 = vst [vmem:[#allocation3 + $0x10] sm:$0xf0] %v1675
        %1680 = vst [vmem:[#allocation3 + $0x18] sm:$0xf0] %v1676
        %1681 = vst [vmem:[#allocation3 + $0x20] sm:$0xf] %v1570
        %1682 = vst [vmem:[#allocation3 + $0x28] sm:$0xf] %v1571
        %v1685 = vrot.slane %v1627, 4
        %v1686 = vrot.slane %v1628, 4
        %1689 = vst [vmem:[#allocation3 + $0x20] sm:$0xf0] %v1685
        %1690 = vst [vmem:[#allocation3 + $0x28] sm:$0xf0] %v1686
        %1691 = vst [vmem:[#allocation3 + $0x30] sm:$0xf] %v1639
        %1692 = vst [vmem:[#allocation3 + $0x38] sm:$0xf] %v1640
        %v1693 = vrot.slane %v1611, 4
        %v1694 = vrot.slane %v1612, 4
        %v1695 = vrot.slane %v1613, 4
        %1696 = vrot.lane.b32.xlu0 %v1693, 112
        %v1697 = vpop.permute.xlu0 %1696
        %1698 = vrot.lane.b32.xlu0 %v1694, 112
        %v1699 = vpop.permute.xlu0 %1698
        %1700 = vrot.lane.b32.xlu0 %v1695, 112
        %v1701 = vpop.permute.xlu0 %1700
        %v1702 = vsel %vm668, %v1697, %v1699
        %v1703 = vsel %vm668, %v1699, %v1701
        %1706 = vst [vmem:[#allocation3 + $0x30] sm:$0xf0] %v1702
        %1707 = vst [vmem:[#allocation3 + $0x38] sm:$0xf0] %v1703
        %1708 = vst [vmem:[#allocation3 + $0x40] sm:$0xf] %v1651
        %1709 = vst [vmem:[#allocation3 + $0x48] sm:$0xf] %v1652
        %v1710 = vld [vmem:[#allocation3] sm:$0xff]
        %v1711 = vld [vmem:[#allocation3 + $0x8] sm:$0xff]
        %v1712 = vld [vmem:[#allocation3 + $0x10] sm:$0xff]
        %v1713 = vld [vmem:[#allocation3 + $0x18] sm:$0xff]
        %v1714 = vld [vmem:[#allocation3 + $0x20] sm:$0xff]
        %v1715 = vld [vmem:[#allocation3 + $0x28] sm:$0xff]
        %v1716 = vld [vmem:[#allocation3 + $0x30] sm:$0xff]
        %v1717 = vld [vmem:[#allocation3 + $0x38] sm:$0xff]
        %v1718 = vld [vmem:[#allocation3 + $0x40] sm:$0xf]
        %v1719 = vld [vmem:[#allocation3 + $0x48] sm:$0xf]
        %1721 = vset.pattern.permute.xlu0 36
        %1722 = vperm.xlu0 %1721, %v1653
        %v1723 = vpop.permute.xlu0 %1722
        %v1725 = vsel %vm692, %v1653, 0
        %v1728 = vsel %vm695, %v1718, 0
        %v1731 = vsel %vm695, %v1719, 0
        %1733 = vmatprep.subr.mxu0 0.0
        %1734 = vmatpush1.msra.mxu0 0.0
        %1735 = vmatprep.subr.mxu0 0.0
        %1736 = vmatpush1.msra.mxu0 0.0
        %1737 = vmatprep.subr.mxu0 0.0
        %1738 = vmatpush1.msra.mxu0 0.0
        %1739 = vmatprep.subr.mxu0 0.0
        %1740 = vmatpush1.msra.mxu0 0.0
        %1741 = vmatprep.subr.mxu0 0.0
        %1742 = vmatpush1.msra.mxu0 0.0
        %1743 = vmatprep.subr.mxu0 0.0
        %1744 = vmatpush1.msra.mxu0 0.0
        %1745 = vmatprep.subr.mxu0 0.0
        %1746 = vmatpush1.msra.mxu0 0.0
        %1747 = vmatprep.subr.mxu0 0.0
        %1748 = vmatpush1.msra.mxu0 0.0
        %1749 = vmatprep.subr.mxu0 0.0
        %1750 = vmatpush1.msra.mxu0 0.0
        %1751 = vmatprep.subr.mxu0 0.0
        %1752 = vmatpush1.msra.mxu0 0.0
        %1753 = vmatprep.subr.mxu0 0.0
        %1754 = vmatpush1.msra.mxu0 0.0
        %1755 = vmatprep.subr.mxu0 %v1731
        %1756 = vmatpush1.msra.mxu0 %v1728
        %1757 = vmatprep.subr.mxu0 %v1717
        %1758 = vmatpush1.msra.mxu0 %v1716
        %1759 = vmatprep.subr.mxu0 %v1715
        %1760 = vmatpush1.msra.mxu0 %v1714
        %1761 = vmatprep.subr.mxu0 %v1713
        %1762 = vmatpush1.msra.mxu0 %v1712
        %1763 = vmatprep.subr.mxu0 %v1711
        %1764 = vmatpush1.msra.mxu0 %v1710
        %1765 = vmatprep.subr.mxu0 0.0
        %1766 = vmatpush2.msra.mxu0 0.0
        %1767 = vmatprep.subr.mxu0 0.0
        %1768 = vmatpush2.msra.mxu0 0.0
        %1769 = vmatprep.subr.mxu0 0.0
        %1770 = vmatpush2.msra.mxu0 0.0
        %1771 = vmatprep.subr.mxu0 0.0
        %1772 = vmatpush2.msra.mxu0 0.0
        %1773 = vmatprep.subr.mxu0 0.0
        %1774 = vmatpush2.msra.mxu0 0.0
        %1775 = vmatprep.subr.mxu0 0.0
        %1776 = vmatpush2.msra.mxu0 0.0
        %1777 = vmatprep.subr.mxu0 0.0
        %1778 = vmatpush2.msra.mxu0 0.0
        %1779 = vmatprep.subr.mxu0 0.0
        %1780 = vmatpush2.msra.mxu0 0.0
        %1781 = vmatprep.subr.mxu0 0.0
        %1782 = vmatpush2.msra.mxu0 0.0
        %1783 = vmatprep.subr.mxu0 0.0
        %1784 = vmatpush2.msra.mxu0 0.0
        %1785 = vmatprep.subr.mxu0 0.0
        %1786 = vmatpush2.msra.mxu0 0.0
        %1787 = vmatprep.subr.mxu0 0.0
        %1788 = vmatpush2.msra.mxu0 0.0
        %1789 = vmatprep.subr.mxu0 0.0
        %1790 = vmatpush2.msra.mxu0 0.0
        %1791 = vmatprep.subr.mxu0 0.0
        %1792 = vmatpush2.msra.mxu0 0.0
        %1793 = vmatprep.subr.mxu0 0.0
        %1794 = vmatpush2.msra.mxu0 0.0
        %1795 = vmatprep.subr.mxu0 0.0
        %1796 = vmatpush2.msra.mxu0 0.0
        %1797 = vmatprep.mubr.f32.mxu0 0.0
        %1798 = vmatmul.mubr.f32.gmra.mxu0 %v1725
        %v1799 = vpop.f32.mrf.mxu0
        %v1800 = vadd.f32 %v1723, %v1799
        %v1801 = vpop.f32.mrf.mxu0
        %v1802 = vadd.f32 %v1723, %v1801
        %1803 = vdwg.mxu0
        %v1804 = vsub.f32 0.0, %v1800
        %v1805 = vsub.f32 0.0, %v1802
        %v1806 = vmul.f32 %v1804, 1.442695
        %v1807 = vpow.pop %v1806
        %v1808 = vmul.f32 %v1805, 1.442695
        %v1809 = vpow.pop %v1808
        %v1810 = vadd.f32 %v1807, 1.0
        %v1811 = vadd.f32 %v1809, 1.0
        %v1812 = vrcp.pop %v1810
        %v1813 = vmul.f32 1.0, %v1812
        %v1814 = vrcp.pop %v1811
        %v1815 = vmul.f32 1.0, %v1814
        %v1816 = vmul.f32 %v1800, %v1813
        %v1817 = vmul.f32 %v1802, %v1815
        %1818 = vst [vmem:[#allocation2 + $0x8] sm:$0xf] %v1816
        %1819 = vst [vmem:[#allocation2 + $0x10] sm:$0xf] %v1817
        %v1820 = vld [vmem:[#allocation2] sm:$0xf]
        %v1821 = vld [vmem:[#allocation2 + $0x8] sm:$0xf]
        %v1822 = vld [vmem:[#allocation2 + $0x10] sm:$0xf]
        %1826 = vrot.lane.b32.xlu0 %v1820, 17
        %v1827 = vpop.permute.xlu0 %1826
        %1828 = vrot.lane.b32.xlu0 %v1821, 17
        %v1829 = vpop.permute.xlu0 %1828
        %1830 = vrot.lane.b32.xlu0 %v1822, 17
        %v1831 = vpop.permute.xlu0 %1830
        %v1832 = vsel %vm536, %v1827, %v1829
        %v1833 = vsel %vm536, %v1829, %v1831
        %v1836 = vsel %vm525, %v1832, 0.0
        %v1837 = vsel %vm526, %v1833, 0.0
        %1838 = vrot.lane.b32.xlu0 %v1820, 15
        %v1839 = vpop.permute.xlu0 %1838
        %1840 = vrot.lane.b32.xlu0 %v1821, 15
        %v1841 = vpop.permute.xlu0 %1840
        %1842 = vrot.lane.b32.xlu0 %v1822, 15
        %v1843 = vpop.permute.xlu0 %1842
        %v1844 = vsel %vm553, %v1839, %v1841
        %v1845 = vsel %vm553, %v1841, %v1843
        %v1848 = vsel %vm545, %v1844, 0.0
        %v1849 = vsel %vm546, %v1845, 0.0
        %1850 = vrot.lane.b32.xlu0 %v1820, 1
        %v1851 = vpop.permute.xlu0 %1850
        %1852 = vrot.lane.b32.xlu0 %v1821, 1
        %v1853 = vpop.permute.xlu0 %1852
        %1854 = vrot.lane.b32.xlu0 %v1822, 1
        %v1855 = vpop.permute.xlu0 %1854
        %v1856 = vsel %vm566, %v1851, %v1853
        %v1857 = vsel %vm566, %v1853, %v1855
        %v1860 = vsel %vm525, %v1856, 0.0
        %v1861 = vsel %vm526, %v1857, 0.0
        %v1862 = vld [vmem:[#allocation2 + $0x8] sm:$0xf]
        %v1863 = vld [vmem:[#allocation2 + $0x10] sm:$0xf]
        %v1864 = vld [vmem:[#allocation2 + $0x18] sm:$0xf]
        %1868 = vrot.lane.b32.xlu0 %v1862, 127
        %v1869 = vpop.permute.xlu0 %1868
        %1870 = vrot.lane.b32.xlu0 %v1863, 127
        %v1871 = vpop.permute.xlu0 %1870
        %1872 = vrot.lane.b32.xlu0 %v1864, 127
        %v1873 = vpop.permute.xlu0 %1872
        %v1874 = vsel %vm585, %v1869, %v1871
        %v1875 = vsel %vm585, %v1871, %v1873
        %v1878 = vsel %vm545, %v1874, 0.0
        %v1879 = vsel %vm546, %v1875, 0.0
        %1880 = vrot.lane.b32.xlu0 %v1862, 113
        %v1881 = vpop.permute.xlu0 %1880
        %1882 = vrot.lane.b32.xlu0 %v1863, 113
        %v1883 = vpop.permute.xlu0 %1882
        %1884 = vrot.lane.b32.xlu0 %v1864, 113
        %v1885 = vpop.permute.xlu0 %1884
        %v1886 = vsel %vm598, %v1881, %v1883
        %v1887 = vsel %vm598, %v1883, %v1885
        %v1890 = vsel %vm525, %v1886, 0.0
        %v1891 = vsel %vm526, %v1887, 0.0
        %1892 = vrot.lane.b32.xlu0 %v1862, 111
        %v1893 = vpop.permute.xlu0 %1892
        %1894 = vrot.lane.b32.xlu0 %v1863, 111
        %v1895 = vpop.permute.xlu0 %1894
        %1896 = vrot.lane.b32.xlu0 %v1864, 111
        %v1897 = vpop.permute.xlu0 %1896
        %v1898 = vsel %vm611, %v1893, %v1895
        %v1899 = vsel %vm611, %v1895, %v1897
        %v1902 = vsel %vm545, %v1898, 0.0
        %v1903 = vsel %vm546, %v1899, 0.0
        %v1904 = vld [vmem:[#allocation7 + $0x68] sm:$0xf]
        %1905 = vst [vmem:[#allocation3] sm:$0xf] %v1836
        %1906 = vst [vmem:[#allocation3 + $0x8] sm:$0xf] %v1837
        %v1907 = vrot.slane %v1820, 4
        %v1908 = vrot.slane %v1821, 4
        %v1909 = vrot.slane %v1822, 4
        %1910 = vrot.lane.b32.xlu0 %v1907, 16
        %v1911 = vpop.permute.xlu0 %1910
        %1912 = vrot.lane.b32.xlu0 %v1908, 16
        %v1913 = vpop.permute.xlu0 %1912
        %1914 = vrot.lane.b32.xlu0 %v1909, 16
        %v1915 = vpop.permute.xlu0 %1914
        %v1916 = vsel %vm630, %v1911, %v1913
        %v1917 = vsel %vm630, %v1913, %v1915
        %1920 = vst [vmem:[#allocation3] sm:$0xf0] %v1916
        %1921 = vst [vmem:[#allocation3 + $0x8] sm:$0xf0] %v1917
        %1922 = vst [vmem:[#allocation3 + $0x10] sm:$0xf] %v1848
        %1923 = vst [vmem:[#allocation3 + $0x18] sm:$0xf] %v1849
        %v1926 = vrot.slane %v1860, 4
        %v1927 = vrot.slane %v1861, 4
        %1930 = vst [vmem:[#allocation3 + $0x10] sm:$0xf0] %v1926
        %1931 = vst [vmem:[#allocation3 + $0x18] sm:$0xf0] %v1927
        %1932 = vst [vmem:[#allocation3 + $0x20] sm:$0xf] %v1821
        %1933 = vst [vmem:[#allocation3 + $0x28] sm:$0xf] %v1822
        %v1936 = vrot.slane %v1878, 4
        %v1937 = vrot.slane %v1879, 4
        %1940 = vst [vmem:[#allocation3 + $0x20] sm:$0xf0] %v1936
        %1941 = vst [vmem:[#allocation3 + $0x28] sm:$0xf0] %v1937
        %1942 = vst [vmem:[#allocation3 + $0x30] sm:$0xf] %v1890
        %1943 = vst [vmem:[#allocation3 + $0x38] sm:$0xf] %v1891
        %v1944 = vrot.slane %v1862, 4
        %v1945 = vrot.slane %v1863, 4
        %v1946 = vrot.slane %v1864, 4
        %1947 = vrot.lane.b32.xlu0 %v1944, 112
        %v1948 = vpop.permute.xlu0 %1947
        %1949 = vrot.lane.b32.xlu0 %v1945, 112
        %v1950 = vpop.permute.xlu0 %1949
        %1951 = vrot.lane.b32.xlu0 %v1946, 112
        %v1952 = vpop.permute.xlu0 %1951
        %v1953 = vsel %vm668, %v1948, %v1950
        %v1954 = vsel %vm668, %v1950, %v1952
        %1957 = vst [vmem:[#allocation3 + $0x30] sm:$0xf0] %v1953
        %1958 = vst [vmem:[#allocation3 + $0x38] sm:$0xf0] %v1954
        %1959 = vst [vmem:[#allocation3 + $0x40] sm:$0xf] %v1902
        %1960 = vst [vmem:[#allocation3 + $0x48] sm:$0xf] %v1903
        %v1961 = vld [vmem:[#allocation3] sm:$0xff]
        %v1962 = vld [vmem:[#allocation3 + $0x8] sm:$0xff]
        %v1963 = vld [vmem:[#allocation3 + $0x10] sm:$0xff]
        %v1964 = vld [vmem:[#allocation3 + $0x18] sm:$0xff]
        %v1965 = vld [vmem:[#allocation3 + $0x20] sm:$0xff]
        %v1966 = vld [vmem:[#allocation3 + $0x28] sm:$0xff]
        %v1967 = vld [vmem:[#allocation3 + $0x30] sm:$0xff]
        %v1968 = vld [vmem:[#allocation3 + $0x38] sm:$0xff]
        %v1969 = vld [vmem:[#allocation3 + $0x40] sm:$0xf]
        %v1970 = vld [vmem:[#allocation3 + $0x48] sm:$0xf]
        %1972 = vset.pattern.permute.xlu0 36
        %1973 = vperm.xlu0 %1972, %v1904
        %v1974 = vpop.permute.xlu0 %1973
        %v1976 = vsel %vm692, %v1904, 0
        %v1979 = vsel %vm695, %v1969, 0
        %v1982 = vsel %vm695, %v1970, 0
        %1984 = vmatprep.subr.mxu0 0.0
        %1985 = vmatpush1.msra.mxu0 0.0
        %1986 = vmatprep.subr.mxu0 0.0
        %1987 = vmatpush1.msra.mxu0 0.0
        %1988 = vmatprep.subr.mxu0 0.0
        %1989 = vmatpush1.msra.mxu0 0.0
        %1990 = vmatprep.subr.mxu0 0.0
        %1991 = vmatpush1.msra.mxu0 0.0
        %1992 = vmatprep.subr.mxu0 0.0
        %1993 = vmatpush1.msra.mxu0 0.0
        %1994 = vmatprep.subr.mxu0 0.0
        %1995 = vmatpush1.msra.mxu0 0.0
        %1996 = vmatprep.subr.mxu0 0.0
        %1997 = vmatpush1.msra.mxu0 0.0
        %1998 = vmatprep.subr.mxu0 0.0
        %1999 = vmatpush1.msra.mxu0 0.0
        %2000 = vmatprep.subr.mxu0 0.0
        %2001 = vmatpush1.msra.mxu0 0.0
        %2002 = vmatprep.subr.mxu0 0.0
        %2003 = vmatpush1.msra.mxu0 0.0
        %2004 = vmatprep.subr.mxu0 0.0
        %2005 = vmatpush1.msra.mxu0 0.0
        %2006 = vmatprep.subr.mxu0 %v1982
        %2007 = vmatpush1.msra.mxu0 %v1979
        %2008 = vmatprep.subr.mxu0 %v1968
        %2009 = vmatpush1.msra.mxu0 %v1967
        %2010 = vmatprep.subr.mxu0 %v1966
        %2011 = vmatpush1.msra.mxu0 %v1965
        %2012 = vmatprep.subr.mxu0 %v1964
        %2013 = vmatpush1.msra.mxu0 %v1963
        %2014 = vmatprep.subr.mxu0 %v1962
        %2015 = vmatpush1.msra.mxu0 %v1961
        %2016 = vmatprep.subr.mxu0 0.0
        %2017 = vmatpush2.msra.mxu0 0.0
        %2018 = vmatprep.subr.mxu0 0.0
        %2019 = vmatpush2.msra.mxu0 0.0
        %2020 = vmatprep.subr.mxu0 0.0
        %2021 = vmatpush2.msra.mxu0 0.0
        %2022 = vmatprep.subr.mxu0 0.0
        %2023 = vmatpush2.msra.mxu0 0.0
        %2024 = vmatprep.subr.mxu0 0.0
        %2025 = vmatpush2.msra.mxu0 0.0
        %2026 = vmatprep.subr.mxu0 0.0
        %2027 = vmatpush2.msra.mxu0 0.0
        %2028 = vmatprep.subr.mxu0 0.0
        %2029 = vmatpush2.msra.mxu0 0.0
        %2030 = vmatprep.subr.mxu0 0.0
        %2031 = vmatpush2.msra.mxu0 0.0
        %2032 = vmatprep.subr.mxu0 0.0
        %2033 = vmatpush2.msra.mxu0 0.0
        %2034 = vmatprep.subr.mxu0 0.0
        %2035 = vmatpush2.msra.mxu0 0.0
        %2036 = vmatprep.subr.mxu0 0.0
        %2037 = vmatpush2.msra.mxu0 0.0
        %2038 = vmatprep.subr.mxu0 0.0
        %2039 = vmatpush2.msra.mxu0 0.0
        %2040 = vmatprep.subr.mxu0 0.0
        %2041 = vmatpush2.msra.mxu0 0.0
        %2042 = vmatprep.subr.mxu0 0.0
        %2043 = vmatpush2.msra.mxu0 0.0
        %2044 = vmatprep.subr.mxu0 0.0
        %2045 = vmatpush2.msra.mxu0 0.0
        %2046 = vmatprep.subr.mxu0 0.0
        %2047 = vmatpush2.msra.mxu0 0.0
        %2048 = vmatprep.mubr.f32.mxu0 0.0
        %2049 = vmatmul.mubr.f32.gmra.mxu0 %v1976
        %v2050 = vpop.f32.mrf.mxu0
        %v2051 = vadd.f32 %v1974, %v2050
        %v2052 = vpop.f32.mrf.mxu0
        %v2053 = vadd.f32 %v1974, %v2052
        %2054 = vdwg.mxu0
        %v2055 = vsub.f32 0.0, %v2051
        %v2056 = vsub.f32 0.0, %v2053
        %v2057 = vmul.f32 %v2055, 1.442695
        %v2058 = vpow.pop %v2057
        %v2059 = vmul.f32 %v2056, 1.442695
        %v2060 = vpow.pop %v2059
        %v2061 = vadd.f32 %v2058, 1.0
        %v2062 = vadd.f32 %v2060, 1.0
        %v2063 = vrcp.pop %v2061
        %v2064 = vmul.f32 1.0, %v2063
        %v2065 = vrcp.pop %v2062
        %v2066 = vmul.f32 1.0, %v2065
        %v2067 = vmul.f32 %v2051, %v2064
        %v2068 = vmul.f32 %v2053, %v2066
        %v2069 = vadd.f32 %v1472, %v2067
        %v2070 = vadd.f32 %v1473, %v2068
        %v2071 = vld [vmem:[#allocation7 + $0x70] sm:$0xff]
        %2072 = vst [vmem:[#allocation3] sm:$0xf] %v2069
        %2073 = vst [vmem:[#allocation3 + $0x8] sm:$0xf] %v2070
        %v2076 = vrot.slane %v1565, 4
        %v2077 = vrot.slane %v1566, 4
        %2080 = vst [vmem:[#allocation3] sm:$0xf0] %v2076
        %2081 = vst [vmem:[#allocation3 + $0x8] sm:$0xf0] %v2077
        %v2082 = vld [vmem:[#allocation3] sm:$0xff]
        %v2083 = vld [vmem:[#allocation3 + $0x8] sm:$0xff]
        %2085 = vset.pattern.permute.xlu0 8
        %2086 = vperm.xlu0 %2085, %v2071
        %v2087 = vpop.permute.xlu0 %2086
        %v2089 = vsel %vm222, %v2071, 0
        %2091 = vmatprep.subr.mxu0 0.0
        %2092 = vmatpush1.msra.mxu0 0.0
        %2093 = vmatprep.subr.mxu0 0.0
        %2094 = vmatpush1.msra.mxu0 0.0
        %2095 = vmatprep.subr.mxu0 0.0
        %2096 = vmatpush1.msra.mxu0 0.0
        %2097 = vmatprep.subr.mxu0 0.0
        %2098 = vmatpush1.msra.mxu0 0.0
        %2099 = vmatprep.subr.mxu0 0.0
        %2100 = vmatpush1.msra.mxu0 0.0
        %2101 = vmatprep.subr.mxu0 0.0
        %2102 = vmatpush1.msra.mxu0 0.0
        %2103 = vmatprep.subr.mxu0 0.0
        %2104 = vmatpush1.msra.mxu0 0.0
        %2105 = vmatprep.subr.mxu0 0.0
        %2106 = vmatpush1.msra.mxu0 0.0
        %2107 = vmatprep.subr.mxu0 0.0
        %2108 = vmatpush1.msra.mxu0 0.0
        %2109 = vmatprep.subr.mxu0 0.0
        %2110 = vmatpush1.msra.mxu0 0.0
        %2111 = vmatprep.subr.mxu0 0.0
        %2112 = vmatpush1.msra.mxu0 0.0
        %2113 = vmatprep.subr.mxu0 0.0
        %2114 = vmatpush1.msra.mxu0 0.0
        %2115 = vmatprep.subr.mxu0 0.0
        %2116 = vmatpush1.msra.mxu0 0.0
        %2117 = vmatprep.subr.mxu0 0.0
        %2118 = vmatpush1.msra.mxu0 0.0
        %2119 = vmatprep.subr.mxu0 0.0
        %2120 = vmatpush1.msra.mxu0 0.0
        %2121 = vmatprep.subr.mxu0 %v2083
        %2122 = vmatpush1.msra.mxu0 %v2082
        %2123 = vmatprep.subr.mxu0 0.0
        %2124 = vmatpush2.msra.mxu0 0.0
        %2125 = vmatprep.subr.mxu0 0.0
        %2126 = vmatpush2.msra.mxu0 0.0
        %2127 = vmatprep.subr.mxu0 0.0
        %2128 = vmatpush2.msra.mxu0 0.0
        %2129 = vmatprep.subr.mxu0 0.0
        %2130 = vmatpush2.msra.mxu0 0.0
        %2131 = vmatprep.subr.mxu0 0.0
        %2132 = vmatpush2.msra.mxu0 0.0
        %2133 = vmatprep.subr.mxu0 0.0
        %2134 = vmatpush2.msra.mxu0 0.0
        %2135 = vmatprep.subr.mxu0 0.0
        %2136 = vmatpush2.msra.mxu0 0.0
        %2137 = vmatprep.subr.mxu0 0.0
        %2138 = vmatpush2.msra.mxu0 0.0
        %2139 = vmatprep.subr.mxu0 0.0
        %2140 = vmatpush2.msra.mxu0 0.0
        %2141 = vmatprep.subr.mxu0 0.0
        %2142 = vmatpush2.msra.mxu0 0.0
        %2143 = vmatprep.subr.mxu0 0.0
        %2144 = vmatpush2.msra.mxu0 0.0
        %2145 = vmatprep.subr.mxu0 0.0
        %2146 = vmatpush2.msra.mxu0 0.0
        %2147 = vmatprep.subr.mxu0 0.0
        %2148 = vmatpush2.msra.mxu0 0.0
        %2149 = vmatprep.subr.mxu0 0.0
        %2150 = vmatpush2.msra.mxu0 0.0
        %2151 = vmatprep.subr.mxu0 0.0
        %2152 = vmatpush2.msra.mxu0 0.0
        %2153 = vmatprep.subr.mxu0 0.0
        %2154 = vmatpush2.msra.mxu0 0.0
        %2155 = vmatprep.mubr.f32.mxu0 0.0
        %2156 = vmatmul.mubr.f32.gmra.mxu0 %v2089
        %v2157 = vpop.f32.mrf.mxu0
        %v2158 = vadd.f32 %v2087, %v2157
        %v2159 = vpop.f32.mrf.mxu0
        %v2160 = vadd.f32 %v2087, %v2159
        %2161 = vdwg.mxu0
        %v2162 = vsub.f32 0.0, %v2158
        %v2163 = vsub.f32 0.0, %v2160
        %v2164 = vmul.f32 %v2162, 1.442695
        %v2165 = vpow.pop %v2164
        %v2166 = vmul.f32 %v2163, 1.442695
        %v2167 = vpow.pop %v2166
        %v2168 = vadd.f32 %v2165, 1.0
        %v2169 = vadd.f32 %v2167, 1.0
        %v2170 = vrcp.pop %v2168
        %v2171 = vmul.f32 1.0, %v2170
        %v2172 = vrcp.pop %v2169
        %v2173 = vmul.f32 1.0, %v2172
        %v2174 = vmul.f32 %v2158, %v2171
        %v2175 = vmul.f32 %v2160, %v2173
        %2176 = vst [vmem:[#allocation2 + $0x8] sm:$0xff] %v2174
        %2177 = vst [vmem:[#allocation2 + $0x10] sm:$0xff] %v2175
        %v2178 = vld [vmem:[#allocation2] sm:$0xff]
        %v2179 = vld [vmem:[#allocation2 + $0x8] sm:$0xff]
        %v2180 = vld [vmem:[#allocation2 + $0x10] sm:$0xff]
        %2184 = vrot.lane.b32.xlu0 %v2178, 17
        %v2185 = vpop.permute.xlu0 %2184
        %2186 = vrot.lane.b32.xlu0 %v2179, 17
        %v2187 = vpop.permute.xlu0 %2186
        %2188 = vrot.lane.b32.xlu0 %v2180, 17
        %v2189 = vpop.permute.xlu0 %2188
        %v2190 = vsel %vm536, %v2185, %v2187
        %v2191 = vsel %vm536, %v2187, %v2189
        %v2194 = vsel %vm525, %v2190, 0.0
        %v2195 = vsel %vm526, %v2191, 0.0
        %2196 = vrot.lane.b32.xlu0 %v2178, 15
        %v2197 = vpop.permute.xlu0 %2196
        %2198 = vrot.lane.b32.xlu0 %v2179, 15
        %v2199 = vpop.permute.xlu0 %2198
        %2200 = vrot.lane.b32.xlu0 %v2180, 15
        %v2201 = vpop.permute.xlu0 %2200
        %v2202 = vsel %vm553, %v2197, %v2199
        %v2203 = vsel %vm553, %v2199, %v2201
        %v2206 = vsel %vm545, %v2202, 0.0
        %v2207 = vsel %vm546, %v2203, 0.0
        %2208 = vrot.lane.b32.xlu0 %v2178, 1
        %v2209 = vpop.permute.xlu0 %2208
        %2210 = vrot.lane.b32.xlu0 %v2179, 1
        %v2211 = vpop.permute.xlu0 %2210
        %2212 = vrot.lane.b32.xlu0 %v2180, 1
        %v2213 = vpop.permute.xlu0 %2212
        %v2214 = vsel %vm566, %v2209, %v2211
        %v2215 = vsel %vm566, %v2211, %v2213
        %v2218 = vsel %vm525, %v2214, 0.0
        %v2219 = vsel %vm526, %v2215, 0.0
        %v2220 = vld [vmem:[#allocation2 + $0x8] sm:$0xff]
        %v2221 = vld [vmem:[#allocation2 + $0x10] sm:$0xff]
        %v2222 = vld [vmem:[#allocation2 + $0x18] sm:$0xff]
        %2226 = vrot.lane.b32.xlu0 %v2220, 127
        %v2227 = vpop.permute.xlu0 %2226
        %2228 = vrot.lane.b32.xlu0 %v2221, 127
        %v2229 = vpop.permute.xlu0 %2228
        %2230 = vrot.lane.b32.xlu0 %v2222, 127
        %v2231 = vpop.permute.xlu0 %2230
        %v2232 = vsel %vm585, %v2227, %v2229
        %v2233 = vsel %vm585, %v2229, %v2231
        %v2236 = vsel %vm545, %v2232, 0.0
        %v2237 = vsel %vm546, %v2233, 0.0
        %2238 = vrot.lane.b32.xlu0 %v2220, 113
        %v2239 = vpop.permute.xlu0 %2238
        %2240 = vrot.lane.b32.xlu0 %v2221, 113
        %v2241 = vpop.permute.xlu0 %2240
        %2242 = vrot.lane.b32.xlu0 %v2222, 113
        %v2243 = vpop.permute.xlu0 %2242
        %v2244 = vsel %vm598, %v2239, %v2241
        %v2245 = vsel %vm598, %v2241, %v2243
        %v2248 = vsel %vm525, %v2244, 0.0
        %v2249 = vsel %vm526, %v2245, 0.0
        %2250 = vrot.lane.b32.xlu0 %v2220, 111
        %v2251 = vpop.permute.xlu0 %2250
        %2252 = vrot.lane.b32.xlu0 %v2221, 111
        %v2253 = vpop.permute.xlu0 %2252
        %2254 = vrot.lane.b32.xlu0 %v2222, 111
        %v2255 = vpop.permute.xlu0 %2254
        %v2256 = vsel %vm611, %v2251, %v2253
        %v2257 = vsel %vm611, %v2253, %v2255
        %v2260 = vsel %vm545, %v2256, 0.0
        %v2261 = vsel %vm546, %v2257, 0.0
        %v2262 = vld [vmem:[#allocation7 + $0x78] sm:$0xff]
        %2263 = vst [vmem:[#allocation3] sm:$0xff] %v2194
        %2264 = vst [vmem:[#allocation3 + $0x8] sm:$0xff] %v2195
        %2265 = vrot.lane.b32.xlu0 %v2178, 16
        %v2266 = vpop.permute.xlu0 %2265
        %2267 = vrot.lane.b32.xlu0 %v2179, 16
        %v2268 = vpop.permute.xlu0 %2267
        %2269 = vrot.lane.b32.xlu0 %v2180, 16
        %v2270 = vpop.permute.xlu0 %2269
        %v2271 = vsel %vm630, %v2266, %v2268
        %v2272 = vsel %vm630, %v2268, %v2270
        %2275 = vst [vmem:[#allocation3 + $0x10] sm:$0xff] %v2271
        %2276 = vst [vmem:[#allocation3 + $0x18] sm:$0xff] %v2272
        %2277 = vst [vmem:[#allocation3 + $0x20] sm:$0xff] %v2206
        %2278 = vst [vmem:[#allocation3 + $0x28] sm:$0xff] %v2207
        %2279 = vst [vmem:[#allocation3 + $0x30] sm:$0xff] %v2218
        %2280 = vst [vmem:[#allocation3 + $0x38] sm:$0xff] %v2219
        %2281 = vst [vmem:[#allocation3 + $0x40] sm:$0xff] %v2179
        %2282 = vst [vmem:[#allocation3 + $0x48] sm:$0xff] %v2180
        %2283 = vst [vmem:[#allocation3 + $0x50] sm:$0xff] %v2236
        %2284 = vst [vmem:[#allocation3 + $0x58] sm:$0xff] %v2237
        %2285 = vst [vmem:[#allocation3 + $0x60] sm:$0xff] %v2248
        %2286 = vst [vmem:[#allocation3 + $0x68] sm:$0xff] %v2249
        %2287 = vrot.lane.b32.xlu0 %v2220, 112
        %v2288 = vpop.permute.xlu0 %2287
        %2289 = vrot.lane.b32.xlu0 %v2221, 112
        %v2290 = vpop.permute.xlu0 %2289
        %2291 = vrot.lane.b32.xlu0 %v2222, 112
        %v2292 = vpop.permute.xlu0 %2291
        %v2293 = vsel %vm668, %v2288, %v2290
        %v2294 = vsel %vm668, %v2290, %v2292
        %2297 = vst [vmem:[#allocation3 + $0x70] sm:$0xff] %v2293
        %2298 = vst [vmem:[#allocation3 + $0x78] sm:$0xff] %v2294
        %2299 = vst [vmem:[#allocation3 + $0x80] sm:$0xff] %v2260
        %2300 = vst [vmem:[#allocation3 + $0x88] sm:$0xff] %v2261
        %v2301 = vld [vmem:[#allocation3] sm:$0xff]
        %v2302 = vld [vmem:[#allocation3 + $0x8] sm:$0xff]
        %v2303 = vld [vmem:[#allocation3 + $0x10] sm:$0xff]
        %v2304 = vld [vmem:[#allocation3 + $0x18] sm:$0xff]
        %v2305 = vld [vmem:[#allocation3 + $0x20] sm:$0xff]
        %v2306 = vld [vmem:[#allocation3 + $0x28] sm:$0xff]
        %v2307 = vld [vmem:[#allocation3 + $0x30] sm:$0xff]
        %v2308 = vld [vmem:[#allocation3 + $0x38] sm:$0xff]
        %v2309 = vld [vmem:[#allocation3 + $0x40] sm:$0xff]
        %v2310 = vld [vmem:[#allocation3 + $0x48] sm:$0xff]
        %v2311 = vld [vmem:[#allocation3 + $0x50] sm:$0xff]
        %v2312 = vld [vmem:[#allocation3 + $0x58] sm:$0xff]
        %v2313 = vld [vmem:[#allocation3 + $0x60] sm:$0xff]
        %v2314 = vld [vmem:[#allocation3 + $0x68] sm:$0xff]
        %v2315 = vld [vmem:[#allocation3 + $0x70] sm:$0xff]
        %v2316 = vld [vmem:[#allocation3 + $0x78] sm:$0xff]
        %v2317 = vld [vmem:[#allocation3 + $0x80] sm:$0xff]
        %v2318 = vld [vmem:[#allocation3 + $0x88] sm:$0xff]
        %2320 = vset.pattern.permute.xlu0 72
        %2321 = vperm.xlu0 %2320, %v2262
        %v2322 = vpop.permute.xlu0 %2321
        %v2324 = vsel %vm1293, %v2262, 0
        %2326 = vmatprep.subr.mxu0 0.0
        %2327 = vmatpush1.msra.mxu0 0.0
        %2328 = vmatprep.subr.mxu0 0.0
        %2329 = vmatpush1.msra.mxu0 0.0
        %2330 = vmatprep.subr.mxu0 0.0
        %2331 = vmatpush1.msra.mxu0 0.0
        %2332 = vmatprep.subr.mxu0 0.0
        %2333 = vmatpush1.msra.mxu0 0.0
        %2334 = vmatprep.subr.mxu0 0.0
        %2335 = vmatpush1.msra.mxu0 0.0
        %2336 = vmatprep.subr.mxu0 0.0
        %2337 = vmatpush1.msra.mxu0 0.0
        %2338 = vmatprep.subr.mxu0 0.0
        %2339 = vmatpush1.msra.mxu0 0.0
        %2340 = vmatprep.subr.mxu0 %v2318
        %2341 = vmatpush1.msra.mxu0 %v2317
        %2342 = vmatprep.subr.mxu0 %v2316
        %2343 = vmatpush1.msra.mxu0 %v2315
        %2344 = vmatprep.subr.mxu0 %v2314
        %2345 = vmatpush1.msra.mxu0 %v2313
        %2346 = vmatprep.subr.mxu0 %v2312
        %2347 = vmatpush1.msra.mxu0 %v2311
        %2348 = vmatprep.subr.mxu0 %v2310
        %2349 = vmatpush1.msra.mxu0 %v2309
        %2350 = vmatprep.subr.mxu0 %v2308
        %2351 = vmatpush1.msra.mxu0 %v2307
        %2352 = vmatprep.subr.mxu0 %v2306
        %2353 = vmatpush1.msra.mxu0 %v2305
        %2354 = vmatprep.subr.mxu0 %v2304
        %2355 = vmatpush1.msra.mxu0 %v2303
        %2356 = vmatprep.subr.mxu0 %v2302
        %2357 = vmatpush1.msra.mxu0 %v2301
        %2358 = vmatprep.subr.mxu0 0.0
        %2359 = vmatpush2.msra.mxu0 0.0
        %2360 = vmatprep.subr.mxu0 0.0
        %2361 = vmatpush2.msra.mxu0 0.0
        %2362 = vmatprep.subr.mxu0 0.0
        %2363 = vmatpush2.msra.mxu0 0.0
        %2364 = vmatprep.subr.mxu0 0.0
        %2365 = vmatpush2.msra.mxu0 0.0
        %2366 = vmatprep.subr.mxu0 0.0
        %2367 = vmatpush2.msra.mxu0 0.0
        %2368 = vmatprep.subr.mxu0 0.0
        %2369 = vmatpush2.msra.mxu0 0.0
        %2370 = vmatprep.subr.mxu0 0.0
        %2371 = vmatpush2.msra.mxu0 0.0
        %2372 = vmatprep.subr.mxu0 0.0
        %2373 = vmatpush2.msra.mxu0 0.0
        %2374 = vmatprep.subr.mxu0 0.0
        %2375 = vmatpush2.msra.mxu0 0.0
        %2376 = vmatprep.subr.mxu0 0.0
        %2377 = vmatpush2.msra.mxu0 0.0
        %2378 = vmatprep.subr.mxu0 0.0
        %2379 = vmatpush2.msra.mxu0 0.0
        %2380 = vmatprep.subr.mxu0 0.0
        %2381 = vmatpush2.msra.mxu0 0.0
        %2382 = vmatprep.subr.mxu0 0.0
        %2383 = vmatpush2.msra.mxu0 0.0
        %2384 = vmatprep.subr.mxu0 0.0
        %2385 = vmatpush2.msra.mxu0 0.0
        %2386 = vmatprep.subr.mxu0 0.0
        %2387 = vmatpush2.msra.mxu0 0.0
        %2388 = vmatprep.subr.mxu0 0.0
        %2389 = vmatpush2.msra.mxu0 0.0
        %2390 = vmatprep.mubr.f32.mxu0 0.0
        %2391 = vmatmul.mubr.f32.gmra.mxu0 %v2324
        %v2392 = vpop.f32.mrf.mxu0
        %v2393 = vadd.f32 %v2322, %v2392
        %v2394 = vpop.f32.mrf.mxu0
        %v2395 = vadd.f32 %v2322, %v2394
        %2396 = vdwg.mxu0
        %v2397 = vsub.f32 0.0, %v2393
        %v2398 = vsub.f32 0.0, %v2395
        %v2399 = vmul.f32 %v2397, 1.442695
        %v2400 = vpow.pop %v2399
        %v2401 = vmul.f32 %v2398, 1.442695
        %v2402 = vpow.pop %v2401
        %v2403 = vadd.f32 %v2400, 1.0
        %v2404 = vadd.f32 %v2402, 1.0
        %v2405 = vrcp.pop %v2403
        %v2406 = vmul.f32 1.0, %v2405
        %v2407 = vrcp.pop %v2404
        %v2408 = vmul.f32 1.0, %v2407
        %v2409 = vmul.f32 %v2393, %v2406
        %v2410 = vmul.f32 %v2395, %v2408
        %v2411 = vld [vmem:[#allocation7 + $0x10] sm:$0xff]
        %v2412 = vld [vmem:[#allocation7 + $0x18] sm:$0xff]
        %2413 = vst [vmem:[#allocation3] sm:$0xff] %v328
        %2414 = vst [vmem:[#allocation3 + $0x8] sm:$0xff] %v329
        %2415 = vst [vmem:[#allocation3 + $0x10] sm:$0xff] %v330
        %2416 = vst [vmem:[#allocation3 + $0x18] sm:$0xff] %v331
        %2417 = vst [vmem:[#allocation3 + $0x20] sm:$0xff] %v1379
        %2418 = vst [vmem:[#allocation3 + $0x28] sm:$0xff] %v1380
        %2419 = vst [vmem:[#allocation3 + $0x30] sm:$0xff] %v2409
        %2420 = vst [vmem:[#allocation3 + $0x38] sm:$0xff] %v2410
        %v2421 = vld [vmem:[#allocation3] sm:$0xff]
        %v2422 = vld [vmem:[#allocation3 + $0x8] sm:$0xff]
        %v2423 = vld [vmem:[#allocation3 + $0x10] sm:$0xff]
        %v2424 = vld [vmem:[#allocation3 + $0x18] sm:$0xff]
        %v2425 = vld [vmem:[#allocation3 + $0x20] sm:$0xff]
        %v2426 = vld [vmem:[#allocation3 + $0x28] sm:$0xff]
        %v2427 = vld [vmem:[#allocation3 + $0x30] sm:$0xff]
        %v2428 = vld [vmem:[#allocation3 + $0x38] sm:$0xff]
        %2430 = vset.pattern.permute.xlu0 32
        %2431 = vperm.xlu0 %2430, %v2411
        %v2432 = vpop.permute.xlu0 %2431
        %2435 = vset.pattern.permute.xlu0 32
        %2436 = vperm.xlu0 %2435, %v2412
        %v2437 = vpop.permute.xlu0 %2436
        %vm2439 = vcmask 261120
        %v2440 = vsel %vm2439, %v2411, 0
        %v2442 = vsel %vm2439, %v2412, 0
        %2444 = vmatprep.subr.mxu0 0.0
        %2445 = vmatpush1.msra.mxu0 0.0
        %2446 = vmatprep.subr.mxu0 0.0
        %2447 = vmatpush1.msra.mxu0 0.0
        %2448 = vmatprep.subr.mxu0 0.0
        %2449 = vmatpush1.msra.mxu0 0.0
        %2450 = vmatprep.subr.mxu0 0.0
        %2451 = vmatpush1.msra.mxu0 0.0
        %2452 = vmatprep.subr.mxu0 0.0
        %2453 = vmatpush1.msra.mxu0 0.0
        %2454 = vmatprep.subr.mxu0 0.0
        %2455 = vmatpush1.msra.mxu0 0.0
        %2456 = vmatprep.subr.mxu0 0.0
        %2457 = vmatpush1.msra.mxu0 0.0
        %2458 = vmatprep.subr.mxu0 0.0
        %2459 = vmatpush1.msra.mxu0 0.0
        %2460 = vmatprep.subr.mxu0 0.0
        %2461 = vmatpush1.msra.mxu0 0.0
        %2462 = vmatprep.subr.mxu0 0.0
        %2463 = vmatpush1.msra.mxu0 0.0
        %2464 = vmatprep.subr.mxu0 0.0
        %2465 = vmatpush1.msra.mxu0 0.0
        %2466 = vmatprep.subr.mxu0 0.0
        %2467 = vmatpush1.msra.mxu0 0.0
        %2468 = vmatprep.subr.mxu0 %v2428
        %2469 = vmatpush1.msra.mxu0 %v2427
        %2470 = vmatprep.subr.mxu0 %v2426
        %2471 = vmatpush1.msra.mxu0 %v2425
        %2472 = vmatprep.subr.mxu0 %v2424
        %2473 = vmatpush1.msra.mxu0 %v2423
        %2474 = vmatprep.subr.mxu0 %v2422
        %2475 = vmatpush1.msra.mxu0 %v2421
        %2476 = vmatprep.subr.mxu0 0.0
        %2477 = vmatpush2.msra.mxu0 0.0
        %2478 = vmatprep.subr.mxu0 0.0
        %2479 = vmatpush2.msra.mxu0 0.0
        %2480 = vmatprep.subr.mxu0 0.0
        %2481 = vmatpush2.msra.mxu0 0.0
        %2482 = vmatprep.subr.mxu0 0.0
        %2483 = vmatpush2.msra.mxu0 0.0
        %2484 = vmatprep.subr.mxu0 0.0
        %2485 = vmatpush2.msra.mxu0 0.0
        %2486 = vmatprep.subr.mxu0 0.0
        %2487 = vmatpush2.msra.mxu0 0.0
        %2488 = vmatprep.subr.mxu0 0.0
        %2489 = vmatpush2.msra.mxu0 0.0
        %2490 = vmatprep.subr.mxu0 0.0
        %2491 = vmatpush2.msra.mxu0 0.0
        %2492 = vmatprep.subr.mxu0 0.0
        %2493 = vmatpush2.msra.mxu0 0.0
        %2494 = vmatprep.subr.mxu0 0.0
        %2495 = vmatpush2.msra.mxu0 0.0
        %2496 = vmatprep.subr.mxu0 0.0
        %2497 = vmatpush2.msra.mxu0 0.0
        %2498 = vmatprep.subr.mxu0 0.0
        %2499 = vmatpush2.msra.mxu0 0.0
        %2500 = vmatprep.subr.mxu0 0.0
        %2501 = vmatpush2.msra.mxu0 0.0
        %2502 = vmatprep.subr.mxu0 0.0
        %2503 = vmatpush2.msra.mxu0 0.0
        %2504 = vmatprep.subr.mxu0 0.0
        %2505 = vmatpush2.msra.mxu0 0.0
        %2506 = vmatprep.subr.mxu0 0.0
        %2507 = vmatpush2.msra.mxu0 0.0
        %2508 = vmatprep.mubr.f32.mxu0 0.0
        %2509 = vmatmul.mubr.f32.gmra.mxu0 %v2440
        %v2510 = vpop.f32.mrf.mxu0
        %v2511 = vadd.f32 %v2432, %v2510
        %v2512 = vpop.f32.mrf.mxu0
        %v2513 = vadd.f32 %v2432, %v2512
        %2514 = vmatprep.mubr.f32.mxu0 0.0
        %2515 = vmatmul.mubr.f32.gmra.mxu0 %v2442
        %v2516 = vpop.f32.mrf.mxu0
        %v2517 = vadd.f32 %v2437, %v2516
        %v2518 = vpop.f32.mrf.mxu0
        %v2519 = vadd.f32 %v2437, %v2518
        %2520 = vdwg.mxu0
        %v2521 = vsub.f32 0.0, %v2511
        %v2522 = vsub.f32 0.0, %v2513
        %v2523 = vsub.f32 0.0, %v2517
        %v2524 = vsub.f32 0.0, %v2519
        %v2525 = vmul.f32 %v2521, 1.442695
        %v2526 = vpow.pop %v2525
        %v2527 = vmul.f32 %v2522, 1.442695
        %v2528 = vpow.pop %v2527
        %v2529 = vmul.f32 %v2523, 1.442695
        %v2530 = vpow.pop %v2529
        %v2531 = vmul.f32 %v2524, 1.442695
        %v2532 = vpow.pop %v2531
        %v2533 = vadd.f32 %v2526, 1.0
        %v2534 = vadd.f32 %v2528, 1.0
        %v2535 = vadd.f32 %v2530, 1.0
        %v2536 = vadd.f32 %v2532, 1.0
        %v2537 = vrcp.pop %v2533
        %v2538 = vmul.f32 1.0, %v2537
        %v2539 = vrcp.pop %v2534
        %v2540 = vmul.f32 1.0, %v2539
        %v2541 = vrcp.pop %v2535
        %v2542 = vmul.f32 1.0, %v2541
        %v2543 = vrcp.pop %v2536
        %v2544 = vmul.f32 1.0, %v2543
        %v2545 = vmul.f32 %v2511, %v2538
        %v2546 = vmul.f32 %v2513, %v2540
        %v2547 = vmul.f32 %v2517, %v2542
        %v2548 = vmul.f32 %v2519, %v2544
        %2549 = vst [vmem:[%s174] sm:$0xff] %v2545
        %2550 = vst [vmem:[%s174 + $0x8] sm:$0xff] %v2546
        %2551 = vst [vmem:[%s174 + $0x10] sm:$0xff] %v2547
        %2552 = vst [vmem:[%s174 + $0x18] sm:$0xff] %v2548
        %s2553 = sand.u32 %s75, 1
        %s2554 = scalar_lea.sflag [#allocation6], %s2553
        %s2555 = sand.u32 %s75, 1
        %s2556 = smul.addr %s2555, 32
        %s2557 = scalar_lea.vmem [#allocation9], %s2556
        // Predicated region
        $region37: #{tpu_custom_call.1} parent=27 // pred_check
          %p2558 = pneg %p85
        $region38: #{tpu_custom_call.1} parent=27 // pred_check_branch
          %2560 = sbr.rel (%p2558) target = $region40
        $region39: #{tpu_custom_call.1} parent=27 // pred_region
          %s2562 = ssub.s32 512, 512
          %2563 = vsyncadd %s2554, %s2562
          %s2564 = smul.addr %s20, 4
          %s2565 = smul.addr %s2564, 128
          %s2566 = scalar_lea.hbm %s2, %s2565
          %s2567 = sshll.u32 %s2557, 4
          %s2568 = int_to_ptr.vmem [resolvable:$true] %s2567
          %2573 = dma.vmem_to_hbm [thread:$0]  %s2568, 512, %s2566, %s2554, 256, 256, 16
        $region40: #{tpu_custom_call.1} parent=27 // pred_fallthru
          _
      $region28: #{tpu_custom_call.1} parent=5 // pred_fallthru
        _
      %p2574 = scmp.le.s32.totalorder 2, %s15
      // Predicated region
      $region41: #{tpu_custom_call.1} parent=5 // pred_check
        %p2575 = pneg %p2574
      $region42: #{tpu_custom_call.1} parent=5 // pred_check_branch
        %2577 = sbr.rel (%p2575) target = $region44
      $region43: #{tpu_custom_call.1} parent=5 // pred_region
        %s2578 = ssub.s32 %s15, 2
        // Predicated region
        $region45: #{tpu_custom_call.1} parent=43 // pred_check
          %p2579 = pneg %p91
        $region46: #{tpu_custom_call.1} parent=43 // pred_check_branch
          %2581 = sbr.rel (%p2579) target = $region48
        $region47: #{tpu_custom_call.1} parent=43 // pred_region
          %s2582 = sand.u32 %s76, 1
          %s2583 = scalar_lea.sflag [#allocation6], %s2582
          %s2584 = sand.u32 %s76, 1
          %s2585 = smul.addr %s2584, 32
          %s2586 = scalar_lea.vmem [#allocation9], %s2585
          %2587 = dma.done %s2583, 512
        $region48: #{tpu_custom_call.1} parent=43 // pred_fallthru
          _
      $region44: #{tpu_custom_call.1} parent=5 // pred_fallthru
        _
    $region6: #{tpu_custom_call.1} parent=1 // loop_footer
      %s19 = sadd.s32 1, %s15
    $region7: #{tpu_custom_call.1} parent=1 // loop_footer_branch
      %14 = sbr.rel target = $region3
    $region8: #{tpu_custom_call.1} parent=1 // loop_exit
      _
    %2588 = vsyncpa [#allocation5], 1
    %s2589 = scalar_lea.sflag [#allocation5], 1
    %2590 = vsyncpa %s2589, 1
    %2591 = vsyncpa [#allocation8], 1
    %2592 = vsyncpa [#allocation6], 1
    %s2593 = scalar_lea.sflag [#allocation6], 1
    %2594 = vsyncpa %s2593, 1

</llo_original>
